<compile_context>
chip_gen: v7x
topology: tpu7x:2x2x1
jax: 0.10.0
libtpu: 0.0.40
codegen_flags: <defaults>
</compile_context>

<pallas_src>
import functools

import jax
import jax.numpy as jnp
import numpy as np
from jax.experimental import pallas as pl
from jax.experimental.pallas import tpu as pltpu


RPAD = 128            # lane-dense padded readout width
PATHS_PER_STEP = 2    # candidate paths evaluated per grid step


def pathnet_kernel(paths_ref,                     # SMEM (P_pad*3*N,) int32
                   x_ref,                         # (B, D_in)        bf16
                   w1_ref, b1_ref,                # (M, D_in, H) bf16, (M, 1, H) f32
                   w2_ref, b2_ref,                # (M, H,   H) bf16, (M, 1, H) f32
                   w3_ref, b3_ref,                # (M, H,   H) bf16, (M, 1, H) f32
                   wf_ref, bf_ref,                # (H, RPAD) bf16, (1, RPAD) f32
                   out_ref,                       # (G, B, RPAD) f32
                   *, M, N, H, paths_per_step):
    step = pl.program_id(0)
    x = x_ref[...]                                 # (B, D_in) bf16
    wf = wf_ref[...]
    bf = bf_ref[...]

    def module_index(p, layer_id, n):
        idx = paths_ref[(p * 3 + layer_id) * N + n]
        # clamp -> never an out-of-bounds VMEM read from a bad path index
        return jnp.minimum(jnp.maximum(idx, 0), M - 1)

    def layer(x_in, w_ref, b_ref, p, layer_id):
        y = None
        for n in range(N):                         # static; N is small
            i = module_index(p, layer_id, n)
            h = jnp.dot(x_in, w_ref[i], preferred_element_type=jnp.float32)
            h = jnp.maximum(h + b_ref[i], 0.0)     # relu BEFORE the module sum
            y = h if y is None else y + h
        return y                                   # (B, H) f32

    for g in range(paths_per_step):                # static unroll over paths in this step
        p = step * paths_per_step + g
        y = layer(x, w1_ref, b1_ref, p, 0)
        y = layer(y.astype(jnp.bfloat16), w2_ref, b2_ref, p, 1)
        y = layer(y.astype(jnp.bfloat16), w3_ref, b3_ref, p, 2)
        out_ref[g] = (jnp.dot(y.astype(jnp.bfloat16), wf,
                              preferred_element_type=jnp.float32) + bf)


def prepare_params(params):
    """One-time prep (call OUTSIDE the per-eval forward): bf16 weight tables,
    f32 biases, lane-dense zero-padded readout weights."""
    w1, b1, w2, b2, w3, b3, wf, bf = params
    H, R = wf.shape
    wf_pad = jnp.zeros((H, RPAD), jnp.float32).at[:, :R].set(wf).astype(jnp.bfloat16)
    bf_pad = jnp.zeros((1, RPAD), jnp.float32).at[:, :R].set(bf)
    return (w1.astype(jnp.bfloat16), b1.astype(jnp.float32),
            w2.astype(jnp.bfloat16), b2.astype(jnp.float32),
            w3.astype(jnp.bfloat16), b3.astype(jnp.float32),
            wf_pad, bf_pad)


def pathnet_forward(x_bf16, paths, prepped, *, N, readout_num,
                    paths_per_step=PATHS_PER_STEP):
    """Evaluate P candidate paths in one pallas_call.

    x_bf16: (B, D_in) bf16, paths: (P, 3, N) int32 -> (P, B, readout_num) f32.
    """
    w1, b1, w2, b2, w3, b3, wf_pad, bf_pad = prepped
    if paths.ndim == 2:                            # single-path convenience
        paths = paths[None]
    P = paths.shape[0]
    B, D_in = x_bf16.shape
    M, _, H = w1.shape
    RP = wf_pad.shape[1]

    G = max(1, min(paths_per_step, P))
    steps = -(-P // G)
    P_pad = steps * G
    if P_pad != P:                                 # pad to whole steps; sliced off below
        paths = jnp.concatenate(
            [paths, jnp.zeros((P_pad - P,) + paths.shape[1:], paths.dtype)], axis=0)
    paths_flat = paths.reshape(-1).astype(jnp.int32)

    grid_spec = pltpu.PrefetchScalarGridSpec(
        num_scalar_prefetch=1,                     # paths -> SMEM
        grid=(steps,),
        in_specs=[
            # Constant index_maps: every operand is DMA'd once and stays
            # resident in VMEM across all grid steps (no per-step re-fetch).
            pl.BlockSpec((B, D_in), lambda s, pth: (0, 0)),
            pl.BlockSpec((M, D_in, H), lambda s, pth: (0, 0, 0)),
            pl.BlockSpec((M, 1, H), lambda s, pth: (0, 0, 0)),
            pl.BlockSpec((M, H, H), lambda s, pth: (0, 0, 0)),
            pl.BlockSpec((M, 1, H), lambda s, pth: (0, 0, 0)),
            pl.BlockSpec((M, H, H), lambda s, pth: (0, 0, 0)),
            pl.BlockSpec((M, 1, H), lambda s, pth: (0, 0, 0)),
            pl.BlockSpec((H, RP), lambda s, pth: (0, 0)),
            pl.BlockSpec((1, RP), lambda s, pth: (0, 0)),
        ],
        out_specs=pl.BlockSpec((G, B, RP), lambda s, pth: (s, 0, 0)),
    )

    kernel = functools.partial(pathnet_kernel, M=M, N=N, H=H, paths_per_step=G)
    out = pl.pallas_call(
        kernel,
        out_shape=jax.ShapeDtypeStruct((P_pad, B, RP), jnp.float32),
        grid_spec=grid_spec,
        compiler_params=pltpu.CompilerParams(
            dimension_semantics=("parallel",)),    # path-pairs shard across TCs on v7x
    )(paths_flat, x_bf16, w1, b1, w2, b2, w3, b3, wf_pad, bf_pad)

    return out[:P, :, :readout_num]


def pathnet_reference(x_flat, path, params, *, N):
    """Pure-JAX f32 reference mirroring the PyTorch forward (single path)."""
    w1, b1, w2, b2, w3, b3, wf, bf = params

    def layer(x_in, w, b, idxs):
        y = None
        for j in range(N):
            i = int(idxs[j])
            h = jnp.maximum(x_in @ w[i] + b[i], 0.0)
            y = h if y is None else y + h
        return y

    x = layer(x_flat, w1, b1, path[0])
    x = layer(x, w2, b2, path[1])
    x = layer(x, w3, b3, path[2])
    return x @ wf + bf


if __name__ == "__main__":
    # args analogue: L=3 layers, M=4 modules/layer, N=2 active modules,
    # neuron_num=32, readout_num=10, cifar_svhn=False -> input dim 28*28=784.
    # B=128 images and P=4 candidate paths (population eval) per call.
    B, M, N, H, R = 128, 4, 2, 32, 10
    D_in = 28 * 28
    P = 4

    key = jax.random.PRNGKey(0)
    ks = jax.random.split(key, 10)
    scale = 0.05
    x_img = jax.random.normal(ks[0], (B, 1, 28, 28), jnp.float32)
    w1 = scale * jax.random.normal(ks[1], (M, D_in, H), jnp.float32)
    b1 = scale * jax.random.normal(ks[2], (M, 1, H), jnp.float32)
    w2 = scale * jax.random.normal(ks[3], (M, H, H), jnp.float32)
    b2 = scale * jax.random.normal(ks[4], (M, 1, H), jnp.float32)
    w3 = scale * jax.random.normal(ks[5], (M, H, H), jnp.float32)
    b3 = scale * jax.random.normal(ks[6], (M, 1, H), jnp.float32)
    wf = scale * jax.random.normal(ks[7], (H, R), jnp.float32)
    bf = scale * jax.random.normal(ks[8], (1, R), jnp.float32)
    params = (w1, b1, w2, b2, w3, b3, wf, bf)

    # P candidate paths; each row lists the N module indices used in a layer.
    paths = jax.random.randint(ks[9], (P, 3, N), 0, M, dtype=jnp.int32)
    paths_np = np.asarray(paths)
    assert np.all((paths_np >= 0) & (paths_np < M)), "path index out of range"

    # Flattening (the x.view(-1, 28*28)) is glue -> plain JAX; one-time casts
    # done OUTSIDE the jitted forward (persistent bf16 copies, per perf review).
    x_flat = x_img.reshape(-1, D_in)
    x_bf16 = x_flat.astype(jnp.bfloat16)
    prepped = prepare_params(params)

    fwd = jax.jit(functools.partial(pathnet_forward, N=N, readout_num=R))
    out = fwd(x_bf16, paths, prepped)
    out = jax.block_until_ready(out)

    # bf16 weights/activations vs f32 reference -> loosened tolerance.
    for p in range(P):
        ref = pathnet_reference(x_flat, paths_np[p], params, N=N)
        np.testing.assert_allclose(np.asarray(out[p]), np.asarray(ref),
                                   rtol=5e-2, atol=1.5e-2)

    print("KERNEL_OK")
</pallas_src>

<mosaic_0001>
module attributes {stable_mosaic.version = 11 : i64} {
  func.func @pathnet_kernel(%arg0: i32, %arg1: memref<24xi32, #tpu.memory_space<smem>>, %arg2: memref<128x784xbf16, #tpu.memory_space<vmem>>, %arg3: memref<4x784x32xbf16, #tpu.memory_space<vmem>>, %arg4: memref<4x1x32xf32, #tpu.memory_space<vmem>>, %arg5: memref<4x32x32xbf16, #tpu.memory_space<vmem>>, %arg6: memref<4x1x32xf32, #tpu.memory_space<vmem>>, %arg7: memref<4x32x32xbf16, #tpu.memory_space<vmem>>, %arg8: memref<4x1x32xf32, #tpu.memory_space<vmem>>, %arg9: memref<32x128xbf16, #tpu.memory_space<vmem>>, %arg10: memref<1x128xf32, #tpu.memory_space<vmem>>, %arg11: memref<2x128x128xf32, #tpu.memory_space<vmem>>) attributes {dimension_semantics = [#tpu.dimension_semantics<parallel>], iteration_bounds = array<i64: 2>, scalar_prefetch = 1 : i64, scratch_operands = 0 : i64, tpu.core_type = #tpu.core_type<tc>, window_params = [{pipeline_mode = #tpu.pipeline_mode<synchronous>, transform_indices = @transform_0, window_bounds = array<i64: 128, 784>}, {pipeline_mode = #tpu.pipeline_mode<synchronous>, transform_indices = @transform_1, window_bounds = array<i64: 4, 784, 32>}, {pipeline_mode = #tpu.pipeline_mode<synchronous>, transform_indices = @transform_2, window_bounds = array<i64: 4, 1, 32>}, {pipeline_mode = #tpu.pipeline_mode<synchronous>, transform_indices = @transform_3, window_bounds = array<i64: 4, 32, 32>}, {pipeline_mode = #tpu.pipeline_mode<synchronous>, transform_indices = @transform_4, window_bounds = array<i64: 4, 1, 32>}, {pipeline_mode = #tpu.pipeline_mode<synchronous>, transform_indices = @transform_5, window_bounds = array<i64: 4, 32, 32>}, {pipeline_mode = #tpu.pipeline_mode<synchronous>, transform_indices = @transform_6, window_bounds = array<i64: 4, 1, 32>}, {pipeline_mode = #tpu.pipeline_mode<synchronous>, transform_indices = @transform_7, window_bounds = array<i64: 32, 128>}, {pipeline_mode = #tpu.pipeline_mode<synchronous>, transform_indices = @transform_8, window_bounds = array<i64: 1, 128>}, {transform_indices = @transform_9, window_bounds = array<i64: 2, 128, 128>}]} {
    %c0 = arith.constant 0 : index
    %c0_0 = arith.constant 0 : index
    %0 = vector.load %arg2[%c0, %c0_0] : memref<128x784xbf16, #tpu.memory_space<vmem>>, vector<128x784xbf16>
    %c0_1 = arith.constant 0 : index
    %c0_2 = arith.constant 0 : index
    %1 = vector.load %arg9[%c0_1, %c0_2] : memref<32x128xbf16, #tpu.memory_space<vmem>>, vector<32x128xbf16>
    %c0_3 = arith.constant 0 : index
    %c0_4 = arith.constant 0 : index
    %2 = vector.load %arg10[%c0_3, %c0_4] : memref<1x128xf32, #tpu.memory_space<vmem>>, vector<1x128xf32>
    %c2_i32 = arith.constant 2 : i32
    %3 = arith.muli %arg0, %c2_i32 : i32
    %c0_i32 = arith.constant 0 : i32
    %4 = arith.addi %3, %c0_i32 : i32
    %c3_i32 = arith.constant 3 : i32
    %5 = arith.muli %4, %c3_i32 : i32
    %c0_i32_5 = arith.constant 0 : i32
    %6 = arith.addi %5, %c0_i32_5 : i32
    %c2_i32_6 = arith.constant 2 : i32
    %7 = arith.muli %6, %c2_i32_6 : i32
    %c0_i32_7 = arith.constant 0 : i32
    %8 = arith.addi %7, %c0_i32_7 : i32
    %9 = arith.index_cast %8 : i32 to index
    %10 = memref.load %arg1[%9] : memref<24xi32, #tpu.memory_space<smem>>
    %c0_i32_8 = arith.constant 0 : i32
    %11 = arith.maxsi %10, %c0_i32_8 : i32
    %c3_i32_9 = arith.constant 3 : i32
    %12 = arith.minsi %11, %c3_i32_9 : i32
    %13 = arith.index_cast %12 : i32 to index
    %c0_10 = arith.constant 0 : index
    %c0_11 = arith.constant 0 : index
    %14 = vector.load %arg3[%13, %c0_10, %c0_11] : memref<4x784x32xbf16, #tpu.memory_space<vmem>>, vector<1x784x32xbf16>
    %15 = vector.shape_cast %14 : vector<1x784x32xbf16> to vector<784x32xbf16>
    %cst = arith.constant dense<0.000000e+00> : vector<128x32xf32>
    %16 = tpu.matmul %0, %15, %cst {dimension_numbers = #tpu.dot_dimension_numbers<[1], [0], [0], [1], [0, 0, 1, 1], [], []>} : vector<128x784xbf16>, vector<784x32xbf16>, vector<128x32xf32> -> vector<128x32xf32>
    %17 = arith.index_cast %12 : i32 to index
    %c0_12 = arith.constant 0 : index
    %c0_13 = arith.constant 0 : index
    %18 = vector.load %arg4[%17, %c0_12, %c0_13] : memref<4x1x32xf32, #tpu.memory_space<vmem>>, vector<1x1x32xf32>
    %19 = vector.shape_cast %18 : vector<1x1x32xf32> to vector<1x32xf32>
    %20 = vector.broadcast %19 : vector<1x32xf32> to vector<128x32xf32>
    %21 = arith.addf %16, %20 : vector<128x32xf32>
    %cst_14 = arith.constant 0.000000e+00 : f32
    %22 = vector.broadcast %cst_14 : f32 to vector<128x32xf32>
    %23 = arith.maximumf %21, %22 : vector<128x32xf32>
    %c3_i32_15 = arith.constant 3 : i32
    %24 = arith.muli %4, %c3_i32_15 : i32
    %c0_i32_16 = arith.constant 0 : i32
    %25 = arith.addi %24, %c0_i32_16 : i32
    %c2_i32_17 = arith.constant 2 : i32
    %26 = arith.muli %25, %c2_i32_17 : i32
    %c1_i32 = arith.constant 1 : i32
    %27 = arith.addi %26, %c1_i32 : i32
    %28 = arith.index_cast %27 : i32 to index
    %29 = memref.load %arg1[%28] : memref<24xi32, #tpu.memory_space<smem>>
    %c0_i32_18 = arith.constant 0 : i32
    %30 = arith.maxsi %29, %c0_i32_18 : i32
    %c3_i32_19 = arith.constant 3 : i32
    %31 = arith.minsi %30, %c3_i32_19 : i32
    %32 = arith.index_cast %31 : i32 to index
    %c0_20 = arith.constant 0 : index
    %c0_21 = arith.constant 0 : index
    %33 = vector.load %arg3[%32, %c0_20, %c0_21] : memref<4x784x32xbf16, #tpu.memory_space<vmem>>, vector<1x784x32xbf16>
    %34 = vector.shape_cast %33 : vector<1x784x32xbf16> to vector<784x32xbf16>
    %cst_22 = arith.constant dense<0.000000e+00> : vector<128x32xf32>
    %35 = tpu.matmul %0, %34, %cst_22 {dimension_numbers = #tpu.dot_dimension_numbers<[1], [0], [0], [1], [0, 0, 1, 1], [], []>} : vector<128x784xbf16>, vector<784x32xbf16>, vector<128x32xf32> -> vector<128x32xf32>
    %36 = arith.index_cast %31 : i32 to index
    %c0_23 = arith.constant 0 : index
    %c0_24 = arith.constant 0 : index
    %37 = vector.load %arg4[%36, %c0_23, %c0_24] : memref<4x1x32xf32, #tpu.memory_space<vmem>>, vector<1x1x32xf32>
    %38 = vector.shape_cast %37 : vector<1x1x32xf32> to vector<1x32xf32>
    %39 = vector.broadcast %38 : vector<1x32xf32> to vector<128x32xf32>
    %40 = arith.addf %35, %39 : vector<128x32xf32>
    %cst_25 = arith.constant 0.000000e+00 : f32
    %41 = vector.broadcast %cst_25 : f32 to vector<128x32xf32>
    %42 = arith.maximumf %40, %41 : vector<128x32xf32>
    %43 = arith.addf %23, %42 : vector<128x32xf32>
    %44 = arith.truncf %43 : vector<128x32xf32> to vector<128x32xbf16>
    %c3_i32_26 = arith.constant 3 : i32
    %45 = arith.muli %4, %c3_i32_26 : i32
    %c1_i32_27 = arith.constant 1 : i32
    %46 = arith.addi %45, %c1_i32_27 : i32
    %c2_i32_28 = arith.constant 2 : i32
    %47 = arith.muli %46, %c2_i32_28 : i32
    %c0_i32_29 = arith.constant 0 : i32
    %48 = arith.addi %47, %c0_i32_29 : i32
    %49 = arith.index_cast %48 : i32 to index
    %50 = memref.load %arg1[%49] : memref<24xi32, #tpu.memory_space<smem>>
    %c0_i32_30 = arith.constant 0 : i32
    %51 = arith.maxsi %50, %c0_i32_30 : i32
    %c3_i32_31 = arith.constant 3 : i32
    %52 = arith.minsi %51, %c3_i32_31 : i32
    %53 = arith.index_cast %52 : i32 to index
    %c0_32 = arith.constant 0 : index
    %c0_33 = arith.constant 0 : index
    %54 = vector.load %arg5[%53, %c0_32, %c0_33] : memref<4x32x32xbf16, #tpu.memory_space<vmem>>, vector<1x32x32xbf16>
    %55 = vector.shape_cast %54 : vector<1x32x32xbf16> to vector<32x32xbf16>
    %cst_34 = arith.constant dense<0.000000e+00> : vector<128x32xf32>
    %56 = tpu.matmul %44, %55, %cst_34 {dimension_numbers = #tpu.dot_dimension_numbers<[1], [0], [0], [1], [0, 0, 1, 1], [], []>} : vector<128x32xbf16>, vector<32x32xbf16>, vector<128x32xf32> -> vector<128x32xf32>
    %57 = arith.index_cast %52 : i32 to index
    %c0_35 = arith.constant 0 : index
    %c0_36 = arith.constant 0 : index
    %58 = vector.load %arg6[%57, %c0_35, %c0_36] : memref<4x1x32xf32, #tpu.memory_space<vmem>>, vector<1x1x32xf32>
    %59 = vector.shape_cast %58 : vector<1x1x32xf32> to vector<1x32xf32>
    %60 = vector.broadcast %59 : vector<1x32xf32> to vector<128x32xf32>
    %61 = arith.addf %56, %60 : vector<128x32xf32>
    %cst_37 = arith.constant 0.000000e+00 : f32
    %62 = vector.broadcast %cst_37 : f32 to vector<128x32xf32>
    %63 = arith.maximumf %61, %62 : vector<128x32xf32>
    %c3_i32_38 = arith.constant 3 : i32
    %64 = arith.muli %4, %c3_i32_38 : i32
    %c1_i32_39 = arith.constant 1 : i32
    %65 = arith.addi %64, %c1_i32_39 : i32
    %c2_i32_40 = arith.constant 2 : i32
    %66 = arith.muli %65, %c2_i32_40 : i32
    %c1_i32_41 = arith.constant 1 : i32
    %67 = arith.addi %66, %c1_i32_41 : i32
    %68 = arith.index_cast %67 : i32 to index
    %69 = memref.load %arg1[%68] : memref<24xi32, #tpu.memory_space<smem>>
    %c0_i32_42 = arith.constant 0 : i32
    %70 = arith.maxsi %69, %c0_i32_42 : i32
    %c3_i32_43 = arith.constant 3 : i32
    %71 = arith.minsi %70, %c3_i32_43 : i32
    %72 = arith.index_cast %71 : i32 to index
    %c0_44 = arith.constant 0 : index
    %c0_45 = arith.constant 0 : index
    %73 = vector.load %arg5[%72, %c0_44, %c0_45] : memref<4x32x32xbf16, #tpu.memory_space<vmem>>, vector<1x32x32xbf16>
    %74 = vector.shape_cast %73 : vector<1x32x32xbf16> to vector<32x32xbf16>
    %cst_46 = arith.constant dense<0.000000e+00> : vector<128x32xf32>
    %75 = tpu.matmul %44, %74, %cst_46 {dimension_numbers = #tpu.dot_dimension_numbers<[1], [0], [0], [1], [0, 0, 1, 1], [], []>} : vector<128x32xbf16>, vector<32x32xbf16>, vector<128x32xf32> -> vector<128x32xf32>
    %76 = arith.index_cast %71 : i32 to index
    %c0_47 = arith.constant 0 : index
    %c0_48 = arith.constant 0 : index
    %77 = vector.load %arg6[%76, %c0_47, %c0_48] : memref<4x1x32xf32, #tpu.memory_space<vmem>>, vector<1x1x32xf32>
    %78 = vector.shape_cast %77 : vector<1x1x32xf32> to vector<1x32xf32>
    %79 = vector.broadcast %78 : vector<1x32xf32> to vector<128x32xf32>
    %80 = arith.addf %75, %79 : vector<128x32xf32>
    %cst_49 = arith.constant 0.000000e+00 : f32
    %81 = vector.broadcast %cst_49 : f32 to vector<128x32xf32>
    %82 = arith.maximumf %80, %81 : vector<128x32xf32>
    %83 = arith.addf %63, %82 : vector<128x32xf32>
    %84 = arith.truncf %83 : vector<128x32xf32> to vector<128x32xbf16>
    %c3_i32_50 = arith.constant 3 : i32
    %85 = arith.muli %4, %c3_i32_50 : i32
    %c2_i32_51 = arith.constant 2 : i32
    %86 = arith.addi %85, %c2_i32_51 : i32
    %c2_i32_52 = arith.constant 2 : i32
    %87 = arith.muli %86, %c2_i32_52 : i32
    %c0_i32_53 = arith.constant 0 : i32
    %88 = arith.addi %87, %c0_i32_53 : i32
    %89 = arith.index_cast %88 : i32 to index
    %90 = memref.load %arg1[%89] : memref<24xi32, #tpu.memory_space<smem>>
    %c0_i32_54 = arith.constant 0 : i32
    %91 = arith.maxsi %90, %c0_i32_54 : i32
    %c3_i32_55 = arith.constant 3 : i32
    %92 = arith.minsi %91, %c3_i32_55 : i32
    %93 = arith.index_cast %92 : i32 to index
    %c0_56 = arith.constant 0 : index
    %c0_57 = arith.constant 0 : index
    %94 = vector.load %arg7[%93, %c0_56, %c0_57] : memref<4x32x32xbf16, #tpu.memory_space<vmem>>, vector<1x32x32xbf16>
    %95 = vector.shape_cast %94 : vector<1x32x32xbf16> to vector<32x32xbf16>
    %cst_58 = arith.constant dense<0.000000e+00> : vector<128x32xf32>
    %96 = tpu.matmul %84, %95, %cst_58 {dimension_numbers = #tpu.dot_dimension_numbers<[1], [0], [0], [1], [0, 0, 1, 1], [], []>} : vector<128x32xbf16>, vector<32x32xbf16>, vector<128x32xf32> -> vector<128x32xf32>
    %97 = arith.index_cast %92 : i32 to index
    %c0_59 = arith.constant 0 : index
    %c0_60 = arith.constant 0 : index
    %98 = vector.load %arg8[%97, %c0_59, %c0_60] : memref<4x1x32xf32, #tpu.memory_space<vmem>>, vector<1x1x32xf32>
    %99 = vector.shape_cast %98 : vector<1x1x32xf32> to vector<1x32xf32>
    %100 = vector.broadcast %99 : vector<1x32xf32> to vector<128x32xf32>
    %101 = arith.addf %96, %100 : vector<128x32xf32>
    %cst_61 = arith.constant 0.000000e+00 : f32
    %102 = vector.broadcast %cst_61 : f32 to vector<128x32xf32>
    %103 = arith.maximumf %101, %102 : vector<128x32xf32>
    %c3_i32_62 = arith.constant 3 : i32
    %104 = arith.muli %4, %c3_i32_62 : i32
    %c2_i32_63 = arith.constant 2 : i32
    %105 = arith.addi %104, %c2_i32_63 : i32
    %c2_i32_64 = arith.constant 2 : i32
    %106 = arith.muli %105, %c2_i32_64 : i32
    %c1_i32_65 = arith.constant 1 : i32
    %107 = arith.addi %106, %c1_i32_65 : i32
    %108 = arith.index_cast %107 : i32 to index
    %109 = memref.load %arg1[%108] : memref<24xi32, #tpu.memory_space<smem>>
    %c0_i32_66 = arith.constant 0 : i32
    %110 = arith.maxsi %109, %c0_i32_66 : i32
    %c3_i32_67 = arith.constant 3 : i32
    %111 = arith.minsi %110, %c3_i32_67 : i32
    %112 = arith.index_cast %111 : i32 to index
    %c0_68 = arith.constant 0 : index
    %c0_69 = arith.constant 0 : index
    %113 = vector.load %arg7[%112, %c0_68, %c0_69] : memref<4x32x32xbf16, #tpu.memory_space<vmem>>, vector<1x32x32xbf16>
    %114 = vector.shape_cast %113 : vector<1x32x32xbf16> to vector<32x32xbf16>
    %cst_70 = arith.constant dense<0.000000e+00> : vector<128x32xf32>
    %115 = tpu.matmul %84, %114, %cst_70 {dimension_numbers = #tpu.dot_dimension_numbers<[1], [0], [0], [1], [0, 0, 1, 1], [], []>} : vector<128x32xbf16>, vector<32x32xbf16>, vector<128x32xf32> -> vector<128x32xf32>
    %116 = arith.index_cast %111 : i32 to index
    %c0_71 = arith.constant 0 : index
    %c0_72 = arith.constant 0 : index
    %117 = vector.load %arg8[%116, %c0_71, %c0_72] : memref<4x1x32xf32, #tpu.memory_space<vmem>>, vector<1x1x32xf32>
    %118 = vector.shape_cast %117 : vector<1x1x32xf32> to vector<1x32xf32>
    %119 = vector.broadcast %118 : vector<1x32xf32> to vector<128x32xf32>
    %120 = arith.addf %115, %119 : vector<128x32xf32>
    %cst_73 = arith.constant 0.000000e+00 : f32
    %121 = vector.broadcast %cst_73 : f32 to vector<128x32xf32>
    %122 = arith.maximumf %120, %121 : vector<128x32xf32>
    %123 = arith.addf %103, %122 : vector<128x32xf32>
    %124 = arith.truncf %123 : vector<128x32xf32> to vector<128x32xbf16>
    %cst_74 = arith.constant dense<0.000000e+00> : vector<128x128xf32>
    %125 = tpu.matmul %124, %1, %cst_74 {dimension_numbers = #tpu.dot_dimension_numbers<[1], [0], [0], [1], [0, 0, 1, 1], [], []>} : vector<128x32xbf16>, vector<32x128xbf16>, vector<128x128xf32> -> vector<128x128xf32>
    %126 = vector.broadcast %2 : vector<1x128xf32> to vector<128x128xf32>
    %127 = arith.addf %125, %126 : vector<128x128xf32>
    %c0_75 = arith.constant 0 : index
    %c0_76 = arith.constant 0 : index
    %c0_77 = arith.constant 0 : index
    %128 = vector.load %arg11[%c0_75, %c0_76, %c0_77] : memref<2x128x128xf32, #tpu.memory_space<vmem>>, vector<1x128x128xf32>
    %129 = vector.shape_cast %128 : vector<1x128x128xf32> to vector<128x128xf32>
    %130 = vector.shape_cast %127 : vector<128x128xf32> to vector<1x128x128xf32>
    tpu.vector_store %arg11[%c0_75, %c0_76, %c0_77], %130 {strides = array<i32>} : memref<2x128x128xf32, #tpu.memory_space<vmem>>, vector<1x128x128xf32>,
    %c2_i32_78 = arith.constant 2 : i32
    %131 = arith.muli %arg0, %c2_i32_78 : i32
    %c1_i32_79 = arith.constant 1 : i32
    %132 = arith.addi %131, %c1_i32_79 : i32
    %c3_i32_80 = arith.constant 3 : i32
    %133 = arith.muli %132, %c3_i32_80 : i32
    %c0_i32_81 = arith.constant 0 : i32
    %134 = arith.addi %133, %c0_i32_81 : i32
    %c2_i32_82 = arith.constant 2 : i32
    %135 = arith.muli %134, %c2_i32_82 : i32
    %c0_i32_83 = arith.constant 0 : i32
    %136 = arith.addi %135, %c0_i32_83 : i32
    %137 = arith.index_cast %136 : i32 to index
    %138 = memref.load %arg1[%137] : memref<24xi32, #tpu.memory_space<smem>>
    %c0_i32_84 = arith.constant 0 : i32
    %139 = arith.maxsi %138, %c0_i32_84 : i32
    %c3_i32_85 = arith.constant 3 : i32
    %140 = arith.minsi %139, %c3_i32_85 : i32
    %141 = arith.index_cast %140 : i32 to index
    %c0_86 = arith.constant 0 : index
    %c0_87 = arith.constant 0 : index
    %142 = vector.load %arg3[%141, %c0_86, %c0_87] : memref<4x784x32xbf16, #tpu.memory_space<vmem>>, vector<1x784x32xbf16>
    %143 = vector.shape_cast %142 : vector<1x784x32xbf16> to vector<784x32xbf16>
    %cst_88 = arith.constant dense<0.000000e+00> : vector<128x32xf32>
    %144 = tpu.matmul %0, %143, %cst_88 {dimension_numbers = #tpu.dot_dimension_numbers<[1], [0], [0], [1], [0, 0, 1, 1], [], []>} : vector<128x784xbf16>, vector<784x32xbf16>, vector<128x32xf32> -> vector<128x32xf32>
    %145 = arith.index_cast %140 : i32 to index
    %c0_89 = arith.constant 0 : index
    %c0_90 = arith.constant 0 : index
    %146 = vector.load %arg4[%145, %c0_89, %c0_90] : memref<4x1x32xf32, #tpu.memory_space<vmem>>, vector<1x1x32xf32>
    %147 = vector.shape_cast %146 : vector<1x1x32xf32> to vector<1x32xf32>
    %148 = vector.broadcast %147 : vector<1x32xf32> to vector<128x32xf32>
    %149 = arith.addf %144, %148 : vector<128x32xf32>
    %cst_91 = arith.constant 0.000000e+00 : f32
    %150 = vector.broadcast %cst_91 : f32 to vector<128x32xf32>
    %151 = arith.maximumf %149, %150 : vector<128x32xf32>
    %c3_i32_92 = arith.constant 3 : i32
    %152 = arith.muli %132, %c3_i32_92 : i32
    %c0_i32_93 = arith.constant 0 : i32
    %153 = arith.addi %152, %c0_i32_93 : i32
    %c2_i32_94 = arith.constant 2 : i32
    %154 = arith.muli %153, %c2_i32_94 : i32
    %c1_i32_95 = arith.constant 1 : i32
    %155 = arith.addi %154, %c1_i32_95 : i32
    %156 = arith.index_cast %155 : i32 to index
    %157 = memref.load %arg1[%156] : memref<24xi32, #tpu.memory_space<smem>>
    %c0_i32_96 = arith.constant 0 : i32
    %158 = arith.maxsi %157, %c0_i32_96 : i32
    %c3_i32_97 = arith.constant 3 : i32
    %159 = arith.minsi %158, %c3_i32_97 : i32
    %160 = arith.index_cast %159 : i32 to index
    %c0_98 = arith.constant 0 : index
    %c0_99 = arith.constant 0 : index
    %161 = vector.load %arg3[%160, %c0_98, %c0_99] : memref<4x784x32xbf16, #tpu.memory_space<vmem>>, vector<1x784x32xbf16>
    %162 = vector.shape_cast %161 : vector<1x784x32xbf16> to vector<784x32xbf16>
    %cst_100 = arith.constant dense<0.000000e+00> : vector<128x32xf32>
    %163 = tpu.matmul %0, %162, %cst_100 {dimension_numbers = #tpu.dot_dimension_numbers<[1], [0], [0], [1], [0, 0, 1, 1], [], []>} : vector<128x784xbf16>, vector<784x32xbf16>, vector<128x32xf32> -> vector<128x32xf32>
    %164 = arith.index_cast %159 : i32 to index
    %c0_101 = arith.constant 0 : index
    %c0_102 = arith.constant 0 : index
    %165 = vector.load %arg4[%164, %c0_101, %c0_102] : memref<4x1x32xf32, #tpu.memory_space<vmem>>, vector<1x1x32xf32>
    %166 = vector.shape_cast %165 : vector<1x1x32xf32> to vector<1x32xf32>
    %167 = vector.broadcast %166 : vector<1x32xf32> to vector<128x32xf32>
    %168 = arith.addf %163, %167 : vector<128x32xf32>
    %cst_103 = arith.constant 0.000000e+00 : f32
    %169 = vector.broadcast %cst_103 : f32 to vector<128x32xf32>
    %170 = arith.maximumf %168, %169 : vector<128x32xf32>
    %171 = arith.addf %151, %170 : vector<128x32xf32>
    %172 = arith.truncf %171 : vector<128x32xf32> to vector<128x32xbf16>
    %c3_i32_104 = arith.constant 3 : i32
    %173 = arith.muli %132, %c3_i32_104 : i32
    %c1_i32_105 = arith.constant 1 : i32
    %174 = arith.addi %173, %c1_i32_105 : i32
    %c2_i32_106 = arith.constant 2 : i32
    %175 = arith.muli %174, %c2_i32_106 : i32
    %c0_i32_107 = arith.constant 0 : i32
    %176 = arith.addi %175, %c0_i32_107 : i32
    %177 = arith.index_cast %176 : i32 to index
    %178 = memref.load %arg1[%177] : memref<24xi32, #tpu.memory_space<smem>>
    %c0_i32_108 = arith.constant 0 : i32
    %179 = arith.maxsi %178, %c0_i32_108 : i32
    %c3_i32_109 = arith.constant 3 : i32
    %180 = arith.minsi %179, %c3_i32_109 : i32
    %181 = arith.index_cast %180 : i32 to index
    %c0_110 = arith.constant 0 : index
    %c0_111 = arith.constant 0 : index
    %182 = vector.load %arg5[%181, %c0_110, %c0_111] : memref<4x32x32xbf16, #tpu.memory_space<vmem>>, vector<1x32x32xbf16>
    %183 = vector.shape_cast %182 : vector<1x32x32xbf16> to vector<32x32xbf16>
    %cst_112 = arith.constant dense<0.000000e+00> : vector<128x32xf32>
    %184 = tpu.matmul %172, %183, %cst_112 {dimension_numbers = #tpu.dot_dimension_numbers<[1], [0], [0], [1], [0, 0, 1, 1], [], []>} : vector<128x32xbf16>, vector<32x32xbf16>, vector<128x32xf32> -> vector<128x32xf32>
    %185 = arith.index_cast %180 : i32 to index
    %c0_113 = arith.constant 0 : index
    %c0_114 = arith.constant 0 : index
    %186 = vector.load %arg6[%185, %c0_113, %c0_114] : memref<4x1x32xf32, #tpu.memory_space<vmem>>, vector<1x1x32xf32>
    %187 = vector.shape_cast %186 : vector<1x1x32xf32> to vector<1x32xf32>
    %188 = vector.broadcast %187 : vector<1x32xf32> to vector<128x32xf32>
    %189 = arith.addf %184, %188 : vector<128x32xf32>
    %cst_115 = arith.constant 0.000000e+00 : f32
    %190 = vector.broadcast %cst_115 : f32 to vector<128x32xf32>
    %191 = arith.maximumf %189, %190 : vector<128x32xf32>
    %c3_i32_116 = arith.constant 3 : i32
    %192 = arith.muli %132, %c3_i32_116 : i32
    %c1_i32_117 = arith.constant 1 : i32
    %193 = arith.addi %192, %c1_i32_117 : i32
    %c2_i32_118 = arith.constant 2 : i32
    %194 = arith.muli %193, %c2_i32_118 : i32
    %c1_i32_119 = arith.constant 1 : i32
    %195 = arith.addi %194, %c1_i32_119 : i32
    %196 = arith.index_cast %195 : i32 to index
    %197 = memref.load %arg1[%196] : memref<24xi32, #tpu.memory_space<smem>>
    %c0_i32_120 = arith.constant 0 : i32
    %198 = arith.maxsi %197, %c0_i32_120 : i32
    %c3_i32_121 = arith.constant 3 : i32
    %199 = arith.minsi %198, %c3_i32_121 : i32
    %200 = arith.index_cast %199 : i32 to index
    %c0_122 = arith.constant 0 : index
    %c0_123 = arith.constant 0 : index
    %201 = vector.load %arg5[%200, %c0_122, %c0_123] : memref<4x32x32xbf16, #tpu.memory_space<vmem>>, vector<1x32x32xbf16>
    %202 = vector.shape_cast %201 : vector<1x32x32xbf16> to vector<32x32xbf16>
    %cst_124 = arith.constant dense<0.000000e+00> : vector<128x32xf32>
    %203 = tpu.matmul %172, %202, %cst_124 {dimension_numbers = #tpu.dot_dimension_numbers<[1], [0], [0], [1], [0, 0, 1, 1], [], []>} : vector<128x32xbf16>, vector<32x32xbf16>, vector<128x32xf32> -> vector<128x32xf32>
    %204 = arith.index_cast %199 : i32 to index
    %c0_125 = arith.constant 0 : index
    %c0_126 = arith.constant 0 : index
    %205 = vector.load %arg6[%204, %c0_125, %c0_126] : memref<4x1x32xf32, #tpu.memory_space<vmem>>, vector<1x1x32xf32>
    %206 = vector.shape_cast %205 : vector<1x1x32xf32> to vector<1x32xf32>
    %207 = vector.broadcast %206 : vector<1x32xf32> to vector<128x32xf32>
    %208 = arith.addf %203, %207 : vector<128x32xf32>
    %cst_127 = arith.constant 0.000000e+00 : f32
    %209 = vector.broadcast %cst_127 : f32 to vector<128x32xf32>
    %210 = arith.maximumf %208, %209 : vector<128x32xf32>
    %211 = arith.addf %191, %210 : vector<128x32xf32>
    %212 = arith.truncf %211 : vector<128x32xf32> to vector<128x32xbf16>
    %c3_i32_128 = arith.constant 3 : i32
    %213 = arith.muli %132, %c3_i32_128 : i32
    %c2_i32_129 = arith.constant 2 : i32
    %214 = arith.addi %213, %c2_i32_129 : i32
    %c2_i32_130 = arith.constant 2 : i32
    %215 = arith.muli %214, %c2_i32_130 : i32
    %c0_i32_131 = arith.constant 0 : i32
    %216 = arith.addi %215, %c0_i32_131 : i32
    %217 = arith.index_cast %216 : i32 to index
    %218 = memref.load %arg1[%217] : memref<24xi32, #tpu.memory_space<smem>>
    %c0_i32_132 = arith.constant 0 : i32
    %219 = arith.maxsi %218, %c0_i32_132 : i32
    %c3_i32_133 = arith.constant 3 : i32
    %220 = arith.minsi %219, %c3_i32_133 : i32
    %221 = arith.index_cast %220 : i32 to index
    %c0_134 = arith.constant 0 : index
    %c0_135 = arith.constant 0 : index
    %222 = vector.load %arg7[%221, %c0_134, %c0_135] : memref<4x32x32xbf16, #tpu.memory_space<vmem>>, vector<1x32x32xbf16>
    %223 = vector.shape_cast %222 : vector<1x32x32xbf16> to vector<32x32xbf16>
    %cst_136 = arith.constant dense<0.000000e+00> : vector<128x32xf32>
    %224 = tpu.matmul %212, %223, %cst_136 {dimension_numbers = #tpu.dot_dimension_numbers<[1], [0], [0], [1], [0, 0, 1, 1], [], []>} : vector<128x32xbf16>, vector<32x32xbf16>, vector<128x32xf32> -> vector<128x32xf32>
    %225 = arith.index_cast %220 : i32 to index
    %c0_137 = arith.constant 0 : index
    %c0_138 = arith.constant 0 : index
    %226 = vector.load %arg8[%225, %c0_137, %c0_138] : memref<4x1x32xf32, #tpu.memory_space<vmem>>, vector<1x1x32xf32>
    %227 = vector.shape_cast %226 : vector<1x1x32xf32> to vector<1x32xf32>
    %228 = vector.broadcast %227 : vector<1x32xf32> to vector<128x32xf32>
    %229 = arith.addf %224, %228 : vector<128x32xf32>
    %cst_139 = arith.constant 0.000000e+00 : f32
    %230 = vector.broadcast %cst_139 : f32 to vector<128x32xf32>
    %231 = arith.maximumf %229, %230 : vector<128x32xf32>
    %c3_i32_140 = arith.constant 3 : i32
    %232 = arith.muli %132, %c3_i32_140 : i32
    %c2_i32_141 = arith.constant 2 : i32
    %233 = arith.addi %232, %c2_i32_141 : i32
    %c2_i32_142 = arith.constant 2 : i32
    %234 = arith.muli %233, %c2_i32_142 : i32
    %c1_i32_143 = arith.constant 1 : i32
    %235 = arith.addi %234, %c1_i32_143 : i32
    %236 = arith.index_cast %235 : i32 to index
    %237 = memref.load %arg1[%236] : memref<24xi32, #tpu.memory_space<smem>>
    %c0_i32_144 = arith.constant 0 : i32
    %238 = arith.maxsi %237, %c0_i32_144 : i32
    %c3_i32_145 = arith.constant 3 : i32
    %239 = arith.minsi %238, %c3_i32_145 : i32
    %240 = arith.index_cast %239 : i32 to index
    %c0_146 = arith.constant 0 : index
    %c0_147 = arith.constant 0 : index
    %241 = vector.load %arg7[%240, %c0_146, %c0_147] : memref<4x32x32xbf16, #tpu.memory_space<vmem>>, vector<1x32x32xbf16>
    %242 = vector.shape_cast %241 : vector<1x32x32xbf16> to vector<32x32xbf16>
    %cst_148 = arith.constant dense<0.000000e+00> : vector<128x32xf32>
    %243 = tpu.matmul %212, %242, %cst_148 {dimension_numbers = #tpu.dot_dimension_numbers<[1], [0], [0], [1], [0, 0, 1, 1], [], []>} : vector<128x32xbf16>, vector<32x32xbf16>, vector<128x32xf32> -> vector<128x32xf32>
    %244 = arith.index_cast %239 : i32 to index
    %c0_149 = arith.constant 0 : index
    %c0_150 = arith.constant 0 : index
    %245 = vector.load %arg8[%244, %c0_149, %c0_150] : memref<4x1x32xf32, #tpu.memory_space<vmem>>, vector<1x1x32xf32>
    %246 = vector.shape_cast %245 : vector<1x1x32xf32> to vector<1x32xf32>
    %247 = vector.broadcast %246 : vector<1x32xf32> to vector<128x32xf32>
    %248 = arith.addf %243, %247 : vector<128x32xf32>
    %cst_151 = arith.constant 0.000000e+00 : f32
    %249 = vector.broadcast %cst_151 : f32 to vector<128x32xf32>
    %250 = arith.maximumf %248, %249 : vector<128x32xf32>
    %251 = arith.addf %231, %250 : vector<128x32xf32>
    %252 = arith.truncf %251 : vector<128x32xf32> to vector<128x32xbf16>
    %cst_152 = arith.constant dense<0.000000e+00> : vector<128x128xf32>
    %253 = tpu.matmul %252, %1, %cst_152 {dimension_numbers = #tpu.dot_dimension_numbers<[1], [0], [0], [1], [0, 0, 1, 1], [], []>} : vector<128x32xbf16>, vector<32x128xbf16>, vector<128x128xf32> -> vector<128x128xf32>
    %254 = vector.broadcast %2 : vector<1x128xf32> to vector<128x128xf32>
    %255 = arith.addf %253, %254 : vector<128x128xf32>
    %c1 = arith.constant 1 : index
    %c0_153 = arith.constant 0 : index
    %c0_154 = arith.constant 0 : index
    %256 = vector.load %arg11[%c1, %c0_153, %c0_154] : memref<2x128x128xf32, #tpu.memory_space<vmem>>, vector<1x128x128xf32>
    %257 = vector.shape_cast %256 : vector<1x128x128xf32> to vector<128x128xf32>
    %258 = vector.shape_cast %255 : vector<128x128xf32> to vector<1x128x128xf32>
    tpu.vector_store %arg11[%c1, %c0_153, %c0_154], %258 {strides = array<i32>} : memref<2x128x128xf32, #tpu.memory_space<vmem>>, vector<1x128x128xf32>,
    return
  }
  func.func @transform_0(%arg0: i32, %arg1: memref<24xi32, #tpu.memory_space<smem>>) -> (i32, i32) {
    %c0_i32 = arith.constant 0 : i32
    %c0_i32_0 = arith.constant 0 : i32
    %c0_i32_1 = arith.constant 0 : i32
    return %c0_i32, %c0_i32_0 : i32, i32
  }
  func.func @transform_1(%arg0: i32, %arg1: memref<24xi32, #tpu.memory_space<smem>>) -> (i32, i32, i32) {
    %c0_i32 = arith.constant 0 : i32
    %c0_i32_0 = arith.constant 0 : i32
    %c0_i32_1 = arith.constant 0 : i32
    %c0_i32_2 = arith.constant 0 : i32
    return %c0_i32, %c0_i32_0, %c0_i32_1 : i32, i32, i32
  }
  func.func @transform_2(%arg0: i32, %arg1: memref<24xi32, #tpu.memory_space<smem>>) -> (i32, i32, i32) {
    %c0_i32 = arith.constant 0 : i32
    %c0_i32_0 = arith.constant 0 : i32
    %c0_i32_1 = arith.constant 0 : i32
    %c0_i32_2 = arith.constant 0 : i32
    return %c0_i32, %c0_i32_0, %c0_i32_1 : i32, i32, i32
  }
  func.func @transform_3(%arg0: i32, %arg1: memref<24xi32, #tpu.memory_space<smem>>) -> (i32, i32, i32) {
    %c0_i32 = arith.constant 0 : i32
    %c0_i32_0 = arith.constant 0 : i32
    %c0_i32_1 = arith.constant 0 : i32
    %c0_i32_2 = arith.constant 0 : i32
    return %c0_i32, %c0_i32_0, %c0_i32_1 : i32, i32, i32
  }
  func.func @transform_4(%arg0: i32, %arg1: memref<24xi32, #tpu.memory_space<smem>>) -> (i32, i32, i32) {
    %c0_i32 = arith.constant 0 : i32
    %c0_i32_0 = arith.constant 0 : i32
    %c0_i32_1 = arith.constant 0 : i32
    %c0_i32_2 = arith.constant 0 : i32
    return %c0_i32, %c0_i32_0, %c0_i32_1 : i32, i32, i32
  }
  func.func @transform_5(%arg0: i32, %arg1: memref<24xi32, #tpu.memory_space<smem>>) -> (i32, i32, i32) {
    %c0_i32 = arith.constant 0 : i32
    %c0_i32_0 = arith.constant 0 : i32
    %c0_i32_1 = arith.constant 0 : i32
    %c0_i32_2 = arith.constant 0 : i32
    return %c0_i32, %c0_i32_0, %c0_i32_1 : i32, i32, i32
  }
  func.func @transform_6(%arg0: i32, %arg1: memref<24xi32, #tpu.memory_space<smem>>) -> (i32, i32, i32) {
    %c0_i32 = arith.constant 0 : i32
    %c0_i32_0 = arith.constant 0 : i32
    %c0_i32_1 = arith.constant 0 : i32
    %c0_i32_2 = arith.constant 0 : i32
    return %c0_i32, %c0_i32_0, %c0_i32_1 : i32, i32, i32
  }
  func.func @transform_7(%arg0: i32, %arg1: memref<24xi32, #tpu.memory_space<smem>>) -> (i32, i32) {
    %c0_i32 = arith.constant 0 : i32
    %c0_i32_0 = arith.constant 0 : i32
    %c0_i32_1 = arith.constant 0 : i32
    return %c0_i32, %c0_i32_0 : i32, i32
  }
  func.func @transform_8(%arg0: i32, %arg1: memref<24xi32, #tpu.memory_space<smem>>) -> (i32, i32) {
    %c0_i32 = arith.constant 0 : i32
    %c0_i32_0 = arith.constant 0 : i32
    %c0_i32_1 = arith.constant 0 : i32
    return %c0_i32, %c0_i32_0 : i32, i32
  }
  func.func @transform_9(%arg0: i32, %arg1: memref<24xi32, #tpu.memory_space<smem>>) -> (i32, i32, i32) {
    %c0_i32 = arith.constant 0 : i32
    %c0_i32_0 = arith.constant 0 : i32
    %c0_i32_1 = arith.constant 0 : i32
    return %arg0, %c0_i32, %c0_i32_0 : i32, i32, i32
  }
}

</mosaic_0001>

<llo_original>
// kernel: pathnet_forward.1
$region0: #{pathnet_forward.1}
  #allocation0 [shape = 'u32[]', space=smem, size = 0x4, offset = 0x4, fixed_abs, tag = 'smem constant byte address 0x4 - core index']
  #allocation1 [shape = 'u32[144,128]{1,0:T(1,128)}', space=vmem, size = 0x12000, scoped, tag = 'internal scratch']
  #allocation2 [shape = 's32[1]{0}', space=sflag, size = 0x4, scoped, tag = 'scoped memory for pathnet_forward.1']
  #allocation3 [shape = 'u8[512]{0}', space=smem, size = 0x200, scoped, tag = 'prefetched SMEM operand 0']
  %s0 = inlined_call_operand.vmem [shape: s32[24], index: 0, kind: input, shape index: {}]
  %s1 = inlined_call_operand.vmem [shape: bf16[128,784], index: 1, kind: input, shape index: {}]
  %s2 = inlined_call_operand.vmem [shape: bf16[4,784,32], index: 2, kind: input, shape index: {}]
  %s3 = inlined_call_operand.vmem [shape: f32[4,1,32], index: 3, kind: input, shape index: {}]
  %s4 = inlined_call_operand.vmem [shape: bf16[4,32,32], index: 4, kind: input, shape index: {}]
  %s5 = inlined_call_operand.vmem [shape: f32[4,1,32], index: 5, kind: input, shape index: {}]
  %s6 = inlined_call_operand.vmem [shape: bf16[4,32,32], index: 6, kind: input, shape index: {}]
  %s7 = inlined_call_operand.vmem [shape: f32[4,1,32], index: 7, kind: input, shape index: {}]
  %s8 = inlined_call_operand.vmem [shape: bf16[32,128], index: 8, kind: input, shape index: {}]
  %s9 = inlined_call_operand.vmem [shape: f32[1,128], index: 9, kind: input, shape index: {}]
  %s10 = inlined_call_operand.vmem [shape: f32[4,128,128], index: 10, kind: output, shape index: {}]
  %s11 = sld [smem:[#allocation0]]
  $region69: #{pathnet_forward.1} parent=0
    _
  %s13 = ssub.s32 1, %s11
  %s14 = scalar_select 0, %s13, %s11
  %s15 = sshll.u32 %s0, 4
  %s16 = int_to_ptr.vmem [resolvable:$true] %s15
  %18 = dma.vmem_to_smem %s16, 16, [#allocation3], [#allocation2]
  %19 = dma.done [#allocation2], 16
  %20 = sfence
  loop: start=0, step=1, limit=4
  $region2: #{pathnet_forward.1} parent=0 // loop_pre_header
    _
  $region3: #{pathnet_forward.1} parent=0 // loop_header
    %s22 = sphi 0, %s26
    %p23 = scmp.ge.s32.totalorder %s22, 4
    %s30 = sphi 0, %s30
    %s32 = sphi 0, %s30
    %s33 = sphi 0, %s32
    %s47 = sphi 0, %s33
    %s51 = sphi 0, %s51
    %s53 = sphi 0, %s51
    %s54 = sphi 0, %s53
    %s68 = sphi 0, %s54
    %s72 = sphi 0, %s72
    %s74 = sphi 0, %s72
    %s75 = sphi 0, %s74
    %s89 = sphi 0, %s75
    %s93 = sphi 0, %s93
    %s95 = sphi 0, %s93
    %s96 = sphi 0, %s95
    %s110 = sphi 0, %s96
    %s114 = sphi 0, %s114
    %s116 = sphi 0, %s114
    %s117 = sphi 0, %s116
    %s131 = sphi 0, %s117
    %s135 = sphi 0, %s135
    %s137 = sphi 0, %s135
    %s138 = sphi 0, %s137
    %s152 = sphi 0, %s138
    %s156 = sphi 0, %s156
    %s158 = sphi 0, %s156
    %s159 = sphi 0, %s158
    %s173 = sphi 0, %s159
    %s177 = sphi 0, %s177
    %s179 = sphi 0, %s177
    %s180 = sphi 0, %s179
    %s194 = sphi 0, %s180
    %s198 = sphi 0, %s198
    %s200 = sphi 0, %s198
    %s201 = sphi 0, %s200
    %s215 = sphi 0, %s201
    %s221 = sphi 0, %s223
    %s224 = sphi 0, %s221
    %s225 = sphi 0, %s224
    %s241 = sphi 0, %s225
  $region4: #{pathnet_forward.1} parent=0 // loop_header_branch
    %25 = sbr.rel (%p23) target = $region8
  $region5: #{pathnet_forward.1} parent=0 // loop_body
    %s27 = ssub.s32 %s22, 1
    %s28 = ssub.s32 %s22, 2
    %s29 = sadd.s32 %s22, 1
    %s31 = sadd.s32 %s30, 1
    %p34 = scmp.eq.s32.totalorder %s22, 1
    %p35 = scmp.ne.s32.totalorder %s30, %s32
    %p36 = scmp.eq.s32.totalorder %s22, 0
    %p37 = por %p35, %p36
    %p38 = scmp.ne.s32.totalorder %s30, %s32
    %p39 = scmp.eq.s32.totalorder %s27, 1
    %p40 = por %p38, %p39
    %p41 = scmp.ne.s32.totalorder %s32, %s33
    %p42 = scmp.eq.s32.totalorder %s27, 0
    %p43 = por %p41, %p42
    %p44 = scmp.ne.s32.totalorder %s32, %s33
    %p45 = scmp.eq.s32.totalorder %s28, 1
    %p46 = por %p44, %p45
    %p48 = scmp.ne.s32.totalorder %s33, %s47
    %p49 = scmp.eq.s32.totalorder %s28, 0
    %p50 = por %p48, %p49
    %s52 = sadd.s32 %s51, 1
    %p55 = scmp.eq.s32.totalorder %s22, 1
    %p56 = scmp.ne.s32.totalorder %s51, %s53
    %p57 = scmp.eq.s32.totalorder %s22, 0
    %p58 = por %p56, %p57
    %p59 = scmp.ne.s32.totalorder %s51, %s53
    %p60 = scmp.eq.s32.totalorder %s27, 1
    %p61 = por %p59, %p60
    %p62 = scmp.ne.s32.totalorder %s53, %s54
    %p63 = scmp.eq.s32.totalorder %s27, 0
    %p64 = por %p62, %p63
    %p65 = scmp.ne.s32.totalorder %s53, %s54
    %p66 = scmp.eq.s32.totalorder %s28, 1
    %p67 = por %p65, %p66
    %p69 = scmp.ne.s32.totalorder %s54, %s68
    %p70 = scmp.eq.s32.totalorder %s28, 0
    %p71 = por %p69, %p70
    %s73 = sadd.s32 %s72, 1
    %p76 = scmp.eq.s32.totalorder %s22, 1
    %p77 = scmp.ne.s32.totalorder %s72, %s74
    %p78 = scmp.eq.s32.totalorder %s22, 0
    %p79 = por %p77, %p78
    %p80 = scmp.ne.s32.totalorder %s72, %s74
    %p81 = scmp.eq.s32.totalorder %s27, 1
    %p82 = por %p80, %p81
    %p83 = scmp.ne.s32.totalorder %s74, %s75
    %p84 = scmp.eq.s32.totalorder %s27, 0
    %p85 = por %p83, %p84
    %p86 = scmp.ne.s32.totalorder %s74, %s75
    %p87 = scmp.eq.s32.totalorder %s28, 1
    %p88 = por %p86, %p87
    %p90 = scmp.ne.s32.totalorder %s75, %s89
    %p91 = scmp.eq.s32.totalorder %s28, 0
    %p92 = por %p90, %p91
    %s94 = sadd.s32 %s93, 1
    %p97 = scmp.eq.s32.totalorder %s22, 1
    %p98 = scmp.ne.s32.totalorder %s93, %s95
    %p99 = scmp.eq.s32.totalorder %s22, 0
    %p100 = por %p98, %p99
    %p101 = scmp.ne.s32.totalorder %s93, %s95
    %p102 = scmp.eq.s32.totalorder %s27, 1
    %p103 = por %p101, %p102
    %p104 = scmp.ne.s32.totalorder %s95, %s96
    %p105 = scmp.eq.s32.totalorder %s27, 0
    %p106 = por %p104, %p105
    %p107 = scmp.ne.s32.totalorder %s95, %s96
    %p108 = scmp.eq.s32.totalorder %s28, 1
    %p109 = por %p107, %p108
    %p111 = scmp.ne.s32.totalorder %s96, %s110
    %p112 = scmp.eq.s32.totalorder %s28, 0
    %p113 = por %p111, %p112
    %s115 = sadd.s32 %s114, 1
    %p118 = scmp.eq.s32.totalorder %s22, 1
    %p119 = scmp.ne.s32.totalorder %s114, %s116
    %p120 = scmp.eq.s32.totalorder %s22, 0
    %p121 = por %p119, %p120
    %p122 = scmp.ne.s32.totalorder %s114, %s116
    %p123 = scmp.eq.s32.totalorder %s27, 1
    %p124 = por %p122, %p123
    %p125 = scmp.ne.s32.totalorder %s116, %s117
    %p126 = scmp.eq.s32.totalorder %s27, 0
    %p127 = por %p125, %p126
    %p128 = scmp.ne.s32.totalorder %s116, %s117
    %p129 = scmp.eq.s32.totalorder %s28, 1
    %p130 = por %p128, %p129
    %p132 = scmp.ne.s32.totalorder %s117, %s131
    %p133 = scmp.eq.s32.totalorder %s28, 0
    %p134 = por %p132, %p133
    %s136 = sadd.s32 %s135, 1
    %p139 = scmp.eq.s32.totalorder %s22, 1
    %p140 = scmp.ne.s32.totalorder %s135, %s137
    %p141 = scmp.eq.s32.totalorder %s22, 0
    %p142 = por %p140, %p141
    %p143 = scmp.ne.s32.totalorder %s135, %s137
    %p144 = scmp.eq.s32.totalorder %s27, 1
    %p145 = por %p143, %p144
    %p146 = scmp.ne.s32.totalorder %s137, %s138
    %p147 = scmp.eq.s32.totalorder %s27, 0
    %p148 = por %p146, %p147
    %p149 = scmp.ne.s32.totalorder %s137, %s138
    %p150 = scmp.eq.s32.totalorder %s28, 1
    %p151 = por %p149, %p150
    %p153 = scmp.ne.s32.totalorder %s138, %s152
    %p154 = scmp.eq.s32.totalorder %s28, 0
    %p155 = por %p153, %p154
    %s157 = sadd.s32 %s156, 1
    %p160 = scmp.eq.s32.totalorder %s22, 1
    %p161 = scmp.ne.s32.totalorder %s156, %s158
    %p162 = scmp.eq.s32.totalorder %s22, 0
    %p163 = por %p161, %p162
    %p164 = scmp.ne.s32.totalorder %s156, %s158
    %p165 = scmp.eq.s32.totalorder %s27, 1
    %p166 = por %p164, %p165
    %p167 = scmp.ne.s32.totalorder %s158, %s159
    %p168 = scmp.eq.s32.totalorder %s27, 0
    %p169 = por %p167, %p168
    %p170 = scmp.ne.s32.totalorder %s158, %s159
    %p171 = scmp.eq.s32.totalorder %s28, 1
    %p172 = por %p170, %p171
    %p174 = scmp.ne.s32.totalorder %s159, %s173
    %p175 = scmp.eq.s32.totalorder %s28, 0
    %p176 = por %p174, %p175
    %s178 = sadd.s32 %s177, 1
    %p181 = scmp.eq.s32.totalorder %s22, 1
    %p182 = scmp.ne.s32.totalorder %s177, %s179
    %p183 = scmp.eq.s32.totalorder %s22, 0
    %p184 = por %p182, %p183
    %p185 = scmp.ne.s32.totalorder %s177, %s179
    %p186 = scmp.eq.s32.totalorder %s27, 1
    %p187 = por %p185, %p186
    %p188 = scmp.ne.s32.totalorder %s179, %s180
    %p189 = scmp.eq.s32.totalorder %s27, 0
    %p190 = por %p188, %p189
    %p191 = scmp.ne.s32.totalorder %s179, %s180
    %p192 = scmp.eq.s32.totalorder %s28, 1
    %p193 = por %p191, %p192
    %p195 = scmp.ne.s32.totalorder %s180, %s194
    %p196 = scmp.eq.s32.totalorder %s28, 0
    %p197 = por %p195, %p196
    %s199 = sadd.s32 %s198, 1
    %p202 = scmp.eq.s32.totalorder %s22, 1
    %p203 = scmp.ne.s32.totalorder %s198, %s200
    %p204 = scmp.eq.s32.totalorder %s22, 0
    %p205 = por %p203, %p204
    %p206 = scmp.ne.s32.totalorder %s198, %s200
    %p207 = scmp.eq.s32.totalorder %s27, 1
    %p208 = por %p206, %p207
    %p209 = scmp.ne.s32.totalorder %s200, %s201
    %p210 = scmp.eq.s32.totalorder %s27, 0
    %p211 = por %p209, %p210
    %p212 = scmp.ne.s32.totalorder %s200, %s201
    %p213 = scmp.eq.s32.totalorder %s28, 1
    %p214 = por %p212, %p213
    %p216 = scmp.ne.s32.totalorder %s201, %s215
    %p217 = scmp.eq.s32.totalorder %s28, 0
    %p218 = por %p216, %p217
    %s219 = ssub.s32 %s22, %s29
    %p220 = scmp.eq.s32.totalorder %s219, 0
    %s222 = sadd.s32 %s221, 1
    %s223 = scalar_select %p220, %s221, %s222
    %p226 = pneg %p220
    %p227 = scmp.eq.s32.totalorder %s22, 1
    %p228 = por %p226, %p227
    %p229 = scmp.ne.s32.totalorder %s221, %s224
    %p230 = scmp.eq.s32.totalorder %s22, 0
    %p231 = por %p229, %p230
    %p232 = scmp.ne.s32.totalorder %s221, %s224
    %p233 = scmp.eq.s32.totalorder %s27, 1
    %p234 = por %p232, %p233
    %p235 = scmp.ne.s32.totalorder %s224, %s225
    %p236 = scmp.eq.s32.totalorder %s27, 0
    %p237 = por %p235, %p236
    %p238 = scmp.ne.s32.totalorder %s224, %s225
    %p239 = scmp.eq.s32.totalorder %s28, 1
    %p240 = por %p238, %p239
    %p242 = scmp.ne.s32.totalorder %s225, %s241
    %p243 = scmp.eq.s32.totalorder %s28, 0
    %p244 = por %p242, %p243
    %p245 = scmp.le.s32.totalorder 1, %s22
    %p246 = scmp.lt.s32.totalorder %s22, 3
    %p247 = pnand %p245, %p246
    %p248 = pneg %p247
    // Predicated region
    $region9: #{pathnet_forward.1} parent=5 // pred_check
      _
    $region10: #{pathnet_forward.1} parent=5 // pred_check_branch
      %250 = sbr.rel (%p247) target = $region12
    $region11: #{pathnet_forward.1} parent=5 // pred_region
      %s251 = ssub.s32 %s22, 1
      // Predicated region
      $region13: #{pathnet_forward.1} parent=11 // pred_check
        %p252 = pneg %p43
      $region14: #{pathnet_forward.1} parent=11 // pred_check_branch
        %254 = sbr.rel (%p252) target = $region16
      $region15: #{pathnet_forward.1} parent=11 // pred_region
        _
      $region16: #{pathnet_forward.1} parent=11 // pred_fallthru
        _
      // Predicated region
      $region17: #{pathnet_forward.1} parent=11 // pred_check
        %p255 = pneg %p64
      $region18: #{pathnet_forward.1} parent=11 // pred_check_branch
        %257 = sbr.rel (%p255) target = $region20
      $region19: #{pathnet_forward.1} parent=11 // pred_region
        _
      $region20: #{pathnet_forward.1} parent=11 // pred_fallthru
        _
      // Predicated region
      $region21: #{pathnet_forward.1} parent=11 // pred_check
        %p258 = pneg %p85
      $region22: #{pathnet_forward.1} parent=11 // pred_check_branch
        %260 = sbr.rel (%p258) target = $region24
      $region23: #{pathnet_forward.1} parent=11 // pred_region
        _
      $region24: #{pathnet_forward.1} parent=11 // pred_fallthru
        _
      // Predicated region
      $region25: #{pathnet_forward.1} parent=11 // pred_check
        %p261 = pneg %p106
      $region26: #{pathnet_forward.1} parent=11 // pred_check_branch
        %263 = sbr.rel (%p261) target = $region28
      $region27: #{pathnet_forward.1} parent=11 // pred_region
        _
      $region28: #{pathnet_forward.1} parent=11 // pred_fallthru
        _
      // Predicated region
      $region29: #{pathnet_forward.1} parent=11 // pred_check
        %p264 = pneg %p127
      $region30: #{pathnet_forward.1} parent=11 // pred_check_branch
        %266 = sbr.rel (%p264) target = $region32
      $region31: #{pathnet_forward.1} parent=11 // pred_region
        _
      $region32: #{pathnet_forward.1} parent=11 // pred_fallthru
        _
      // Predicated region
      $region33: #{pathnet_forward.1} parent=11 // pred_check
        %p267 = pneg %p148
      $region34: #{pathnet_forward.1} parent=11 // pred_check_branch
        %269 = sbr.rel (%p267) target = $region36
      $region35: #{pathnet_forward.1} parent=11 // pred_region
        _
      $region36: #{pathnet_forward.1} parent=11 // pred_fallthru
        _
      // Predicated region
      $region37: #{pathnet_forward.1} parent=11 // pred_check
        %p270 = pneg %p169
      $region38: #{pathnet_forward.1} parent=11 // pred_check_branch
        %272 = sbr.rel (%p270) target = $region40
      $region39: #{pathnet_forward.1} parent=11 // pred_region
        _
      $region40: #{pathnet_forward.1} parent=11 // pred_fallthru
        _
      // Predicated region
      $region41: #{pathnet_forward.1} parent=11 // pred_check
        %p273 = pneg %p190
      $region42: #{pathnet_forward.1} parent=11 // pred_check_branch
        %275 = sbr.rel (%p273) target = $region44
      $region43: #{pathnet_forward.1} parent=11 // pred_region
        _
      $region44: #{pathnet_forward.1} parent=11 // pred_fallthru
        _
      // Predicated region
      $region45: #{pathnet_forward.1} parent=11 // pred_check
        %p276 = pneg %p211
      $region46: #{pathnet_forward.1} parent=11 // pred_check_branch
        %278 = sbr.rel (%p276) target = $region48
      $region47: #{pathnet_forward.1} parent=11 // pred_region
        _
      $region48: #{pathnet_forward.1} parent=11 // pred_fallthru
        _
    $region12: #{pathnet_forward.1} parent=5 // pred_fallthru
      _
    %p279 = scmp.lt.s32.totalorder %s22, 2
    // Predicated region
    $region49: #{pathnet_forward.1} parent=5 // pred_check
      %p280 = pneg %p279
    $region50: #{pathnet_forward.1} parent=5 // pred_check_branch
      %282 = sbr.rel (%p280) target = $region52
    $region51: #{pathnet_forward.1} parent=5 // pred_region
      _
    $region52: #{pathnet_forward.1} parent=5 // pred_fallthru
      _
    %p283 = scmp.le.s32.totalorder 1, %s22
    %p284 = scmp.lt.s32.totalorder %s22, 3
    %p285 = pnand %p283, %p284
    %p286 = pneg %p285
    // Predicated region
    $region53: #{pathnet_forward.1} parent=5 // pred_check
      _
    $region54: #{pathnet_forward.1} parent=5 // pred_check_branch
      %288 = sbr.rel (%p285) target = $region56
    $region55: #{pathnet_forward.1} parent=5 // pred_region
      %s289 = ssub.s32 %s22, 1
      %p290 = pneg %p43
      %p291 = pneg %p40
      %p292 = pneg %p64
      %p293 = pneg %p61
      %p294 = pneg %p85
      %p295 = pneg %p82
      %p296 = pneg %p106
      %p297 = pneg %p103
      %p298 = pneg %p127
      %p299 = pneg %p124
      %p300 = pneg %p148
      %p301 = pneg %p145
      %p302 = pneg %p169
      %p303 = pneg %p166
      %p304 = pneg %p190
      %p305 = pneg %p187
      %p306 = pneg %p211
      %p307 = pneg %p208
      %p308 = pneg %p237
      %p309 = pneg %p234
      %s310 = smul.u32 2, %s27
      %p311 = scmp.lt.s32.totalorder %s310, 3
      %s312 = scalar_select %p311, %s310, 3
      %s313 = smul.addr %s312, 16
      %s314 = smul.addr %s313, 8
      %s315 = scalar_lea.vmem %s10, %s314
      %s316 = smul.u32 2, %s27
      %p317 = scmp.lt.s32.totalorder %s316, 3
      %s318 = scalar_select %p317, %s316, 3
      %s319 = smul.addr %s318, 16
      %s320 = smul.addr %s319, 8
      %s321 = scalar_lea.vmem %s10, %s320
      %s322 = smul.u32 2, %s27
      %v324 = vld [vmem:[%s1] sm:$0xff]
      %v325 = vld [vmem:[%s1 + $0x8] sm:$0xff]
      %v326 = vld [vmem:[%s1 + $0x10] sm:$0xff]
      %v327 = vld [vmem:[%s1 + $0x18] sm:$0xf]
      %v328 = vld [vmem:[%s1 + $0x1c] sm:$0xff]
      %v329 = vld [vmem:[%s1 + $0x24] sm:$0xff]
      %v330 = vld [vmem:[%s1 + $0x2c] sm:$0xff]
      %v331 = vld [vmem:[%s1 + $0x34] sm:$0xf]
      %v332 = vld [vmem:[%s1 + $0x38] sm:$0xff]
      %v333 = vld [vmem:[%s1 + $0x40] sm:$0xff]
      %v334 = vld [vmem:[%s1 + $0x48] sm:$0xff]
      %v335 = vld [vmem:[%s1 + $0x50] sm:$0xf]
      %v336 = vld [vmem:[%s1 + $0x54] sm:$0xff]
      %v337 = vld [vmem:[%s1 + $0x5c] sm:$0xff]
      %v338 = vld [vmem:[%s1 + $0x64] sm:$0xff]
      %v339 = vld [vmem:[%s1 + $0x6c] sm:$0xf]
      %v340 = vld [vmem:[%s1 + $0x70] sm:$0xff]
      %v341 = vld [vmem:[%s1 + $0x78] sm:$0xff]
      %v342 = vld [vmem:[%s1 + $0x80] sm:$0xff]
      %v343 = vld [vmem:[%s1 + $0x88] sm:$0xf]
      %v344 = vld [vmem:[%s1 + $0x8c] sm:$0xff]
      %v345 = vld [vmem:[%s1 + $0x94] sm:$0xff]
      %v346 = vld [vmem:[%s1 + $0x9c] sm:$0xff]
      %v347 = vld [vmem:[%s1 + $0xa4] sm:$0xf]
      %v348 = vld [vmem:[%s1 + $0xa8] sm:$0xff]
      %v349 = vld [vmem:[%s1 + $0xb0] sm:$0xff]
      %v350 = vld [vmem:[%s1 + $0xb8] sm:$0xff]
      %v351 = vld [vmem:[%s1 + $0xc0] sm:$0xf]
      %v352 = vld [vmem:[%s1 + $0xc4] sm:$0xff]
      %v353 = vld [vmem:[%s1 + $0xcc] sm:$0xff]
      %v354 = vld [vmem:[%s1 + $0xd4] sm:$0xff]
      %v355 = vld [vmem:[%s1 + $0xdc] sm:$0xf]
      %v356 = vld [vmem:[%s1 + $0xe0] sm:$0xff]
      %v357 = vld [vmem:[%s1 + $0xe8] sm:$0xff]
      %v358 = vld [vmem:[%s1 + $0xf0] sm:$0xff]
      %v359 = vld [vmem:[%s1 + $0xf8] sm:$0xf]
      %v360 = vld [vmem:[%s1 + $0xfc] sm:$0xff]
      %v361 = vld [vmem:[%s1 + $0x104] sm:$0xff]
      %v362 = vld [vmem:[%s1 + $0x10c] sm:$0xff]
      %v363 = vld [vmem:[%s1 + $0x114] sm:$0xf]
      %v364 = vld [vmem:[%s1 + $0x118] sm:$0xff]
      %v365 = vld [vmem:[%s1 + $0x120] sm:$0xff]
      %v366 = vld [vmem:[%s1 + $0x128] sm:$0xff]
      %v367 = vld [vmem:[%s1 + $0x130] sm:$0xf]
      %v368 = vld [vmem:[%s1 + $0x134] sm:$0xff]
      %v369 = vld [vmem:[%s1 + $0x13c] sm:$0xff]
      %v370 = vld [vmem:[%s1 + $0x144] sm:$0xff]
      %v371 = vld [vmem:[%s1 + $0x14c] sm:$0xf]
      %v372 = vld [vmem:[%s1 + $0x150] sm:$0xff]
      %v373 = vld [vmem:[%s1 + $0x158] sm:$0xff]
      %v374 = vld [vmem:[%s1 + $0x160] sm:$0xff]
      %v375 = vld [vmem:[%s1 + $0x168] sm:$0xf]
      %v376 = vld [vmem:[%s1 + $0x16c] sm:$0xff]
      %v377 = vld [vmem:[%s1 + $0x174] sm:$0xff]
      %v378 = vld [vmem:[%s1 + $0x17c] sm:$0xff]
      %v379 = vld [vmem:[%s1 + $0x184] sm:$0xf]
      %v380 = vld [vmem:[%s1 + $0x188] sm:$0xff]
      %v381 = vld [vmem:[%s1 + $0x190] sm:$0xff]
      %v382 = vld [vmem:[%s1 + $0x198] sm:$0xff]
      %v383 = vld [vmem:[%s1 + $0x1a0] sm:$0xf]
      %v384 = vld [vmem:[%s1 + $0x1a4] sm:$0xff]
      %v385 = vld [vmem:[%s1 + $0x1ac] sm:$0xff]
      %v386 = vld [vmem:[%s1 + $0x1b4] sm:$0xff]
      %v387 = vld [vmem:[%s1 + $0x1bc] sm:$0xf]
      %v388 = vld [vmem:[%s8] sm:$0xf]
      %v389 = vld [vmem:[%s8 + $0x4] sm:$0xf]
      %v390 = vld [vmem:[%s8 + $0x8] sm:$0xf]
      %v391 = vld [vmem:[%s8 + $0xc] sm:$0xf]
      %v392 = vld [vmem:[%s9] sm:$0x1]
      %s393 = smul.u32 %s27, 12
      %s394 = sld [smem:[#allocation3 + %s393]]
      %p395 = scmp.gt.s32.totalorder %s394, 0
      %s396 = scalar_select %p395, %s394, 0
      %p397 = scmp.lt.s32.totalorder %s396, 3
      %s398 = scalar_select %p397, %s396, 3
      %s399 = smul.u32 %s398, 98
      %s400 = smul.addr %s399, 4
      %s401 = scalar_lea.vmem %s2, %s400
      %v402 = vld [vmem:[%s401] sm:$0xf]
      %v403 = vld [vmem:[%s401 + $0x4] sm:$0xf]
      %v404 = vld [vmem:[%s401 + $0x8] sm:$0xf]
      %v405 = vld [vmem:[%s401 + $0xc] sm:$0xf]
      %v406 = vld [vmem:[%s401 + $0x10] sm:$0xf]
      %v407 = vld [vmem:[%s401 + $0x14] sm:$0xf]
      %v408 = vld [vmem:[%s401 + $0x18] sm:$0xf]
      %v409 = vld [vmem:[%s401 + $0x1c] sm:$0xf]
      %v410 = vld [vmem:[%s401 + $0x20] sm:$0xf]
      %v411 = vld [vmem:[%s401 + $0x24] sm:$0xf]
      %v412 = vld [vmem:[%s401 + $0x28] sm:$0xf]
      %v413 = vld [vmem:[%s401 + $0x2c] sm:$0xf]
      %v414 = vld [vmem:[%s401 + $0x30] sm:$0xf]
      %v415 = vld [vmem:[%s401 + $0x34] sm:$0xf]
      %v416 = vld [vmem:[%s401 + $0x38] sm:$0xf]
      %v417 = vld [vmem:[%s401 + $0x3c] sm:$0xf]
      %v418 = vld [vmem:[%s401 + $0x40] sm:$0xf]
      %v419 = vld [vmem:[%s401 + $0x44] sm:$0xf]
      %v420 = vld [vmem:[%s401 + $0x48] sm:$0xf]
      %v421 = vld [vmem:[%s401 + $0x4c] sm:$0xf]
      %v422 = vld [vmem:[%s401 + $0x50] sm:$0xf]
      %v423 = vld [vmem:[%s401 + $0x54] sm:$0xf]
      %v424 = vld [vmem:[%s401 + $0x58] sm:$0xf]
      %v425 = vld [vmem:[%s401 + $0x5c] sm:$0xf]
      %v426 = vld [vmem:[%s401 + $0x60] sm:$0xf]
      %v427 = vld [vmem:[%s401 + $0x64] sm:$0xf]
      %v428 = vld [vmem:[%s401 + $0x68] sm:$0xf]
      %v429 = vld [vmem:[%s401 + $0x6c] sm:$0xf]
      %v430 = vld [vmem:[%s401 + $0x70] sm:$0xf]
      %v431 = vld [vmem:[%s401 + $0x74] sm:$0xf]
      %v432 = vld [vmem:[%s401 + $0x78] sm:$0xf]
      %v433 = vld [vmem:[%s401 + $0x7c] sm:$0xf]
      %v434 = vld [vmem:[%s401 + $0x80] sm:$0xf]
      %v435 = vld [vmem:[%s401 + $0x84] sm:$0xf]
      %v436 = vld [vmem:[%s401 + $0x88] sm:$0xf]
      %v437 = vld [vmem:[%s401 + $0x8c] sm:$0xf]
      %v438 = vld [vmem:[%s401 + $0x90] sm:$0xf]
      %v439 = vld [vmem:[%s401 + $0x94] sm:$0xf]
      %v440 = vld [vmem:[%s401 + $0x98] sm:$0xf]
      %v441 = vld [vmem:[%s401 + $0x9c] sm:$0xf]
      %v442 = vld [vmem:[%s401 + $0xa0] sm:$0xf]
      %v443 = vld [vmem:[%s401 + $0xa4] sm:$0xf]
      %v444 = vld [vmem:[%s401 + $0xa8] sm:$0xf]
      %v445 = vld [vmem:[%s401 + $0xac] sm:$0xf]
      %v446 = vld [vmem:[%s401 + $0xb0] sm:$0xf]
      %v447 = vld [vmem:[%s401 + $0xb4] sm:$0xf]
      %v448 = vld [vmem:[%s401 + $0xb8] sm:$0xf]
      %v449 = vld [vmem:[%s401 + $0xbc] sm:$0xf]
      %v450 = vld [vmem:[%s401 + $0xc0] sm:$0xf]
      %v451 = vld [vmem:[%s401 + $0xc4] sm:$0xf]
      %v452 = vld [vmem:[%s401 + $0xc8] sm:$0xf]
      %v453 = vld [vmem:[%s401 + $0xcc] sm:$0xf]
      %v454 = vld [vmem:[%s401 + $0xd0] sm:$0xf]
      %v455 = vld [vmem:[%s401 + $0xd4] sm:$0xf]
      %v456 = vld [vmem:[%s401 + $0xd8] sm:$0xf]
      %v457 = vld [vmem:[%s401 + $0xdc] sm:$0xf]
      %v458 = vld [vmem:[%s401 + $0xe0] sm:$0xf]
      %v459 = vld [vmem:[%s401 + $0xe4] sm:$0xf]
      %v460 = vld [vmem:[%s401 + $0xe8] sm:$0xf]
      %v461 = vld [vmem:[%s401 + $0xec] sm:$0xf]
      %v462 = vld [vmem:[%s401 + $0xf0] sm:$0xf]
      %v463 = vld [vmem:[%s401 + $0xf4] sm:$0xf]
      %v464 = vld [vmem:[%s401 + $0xf8] sm:$0xf]
      %v465 = vld [vmem:[%s401 + $0xfc] sm:$0xf]
      %v466 = vld [vmem:[%s401 + $0x100] sm:$0xf]
      %v467 = vld [vmem:[%s401 + $0x104] sm:$0xf]
      %v468 = vld [vmem:[%s401 + $0x108] sm:$0xf]
      %v469 = vld [vmem:[%s401 + $0x10c] sm:$0xf]
      %v470 = vld [vmem:[%s401 + $0x110] sm:$0xf]
      %v471 = vld [vmem:[%s401 + $0x114] sm:$0xf]
      %v472 = vld [vmem:[%s401 + $0x118] sm:$0xf]
      %v473 = vld [vmem:[%s401 + $0x11c] sm:$0xf]
      %v474 = vld [vmem:[%s401 + $0x120] sm:$0xf]
      %v475 = vld [vmem:[%s401 + $0x124] sm:$0xf]
      %v476 = vld [vmem:[%s401 + $0x128] sm:$0xf]
      %v477 = vld [vmem:[%s401 + $0x12c] sm:$0xf]
      %v478 = vld [vmem:[%s401 + $0x130] sm:$0xf]
      %v479 = vld [vmem:[%s401 + $0x134] sm:$0xf]
      %v480 = vld [vmem:[%s401 + $0x138] sm:$0xf]
      %v481 = vld [vmem:[%s401 + $0x13c] sm:$0xf]
      %v482 = vld [vmem:[%s401 + $0x140] sm:$0xf]
      %v483 = vld [vmem:[%s401 + $0x144] sm:$0xf]
      %v484 = vld [vmem:[%s401 + $0x148] sm:$0xf]
      %v485 = vld [vmem:[%s401 + $0x14c] sm:$0xf]
      %v486 = vld [vmem:[%s401 + $0x150] sm:$0xf]
      %v487 = vld [vmem:[%s401 + $0x154] sm:$0xf]
      %v488 = vld [vmem:[%s401 + $0x158] sm:$0xf]
      %v489 = vld [vmem:[%s401 + $0x15c] sm:$0xf]
      %v490 = vld [vmem:[%s401 + $0x160] sm:$0xf]
      %v491 = vld [vmem:[%s401 + $0x164] sm:$0xf]
      %v492 = vld [vmem:[%s401 + $0x168] sm:$0xf]
      %v493 = vld [vmem:[%s401 + $0x16c] sm:$0xf]
      %v494 = vld [vmem:[%s401 + $0x170] sm:$0xf]
      %v495 = vld [vmem:[%s401 + $0x174] sm:$0xf]
      %v496 = vld [vmem:[%s401 + $0x178] sm:$0xf]
      %v497 = vld [vmem:[%s401 + $0x17c] sm:$0xf]
      %v498 = vld [vmem:[%s401 + $0x180] sm:$0xf]
      %v499 = vld [vmem:[%s401 + $0x184] sm:$0xf]
      %s500 = scalar_lea.vmem %s3, %s398
      %v501 = vld [vmem:[%s500] sm:$0x1]
      %v503 = vlaneseq
      %v504 = vshrl.u32 %v503, 7
      %v505 = vsub.s32 0, %v504
      %v506 = vrot.slane %v501, %v505
      %v572 = vunpack.c.l.b16 %v324
      %v573 = vunpack.c.h.b16 %v324
      %v574 = vunpack.c.l.b16 %v325
      %v575 = vunpack.c.h.b16 %v325
      %v576 = vunpack.c.l.b16 %v326
      %v577 = vunpack.c.h.b16 %v326
      %v578 = vunpack.c.l.b16 %v327
      %v579 = vunpack.c.l.b16 %v328
      %v580 = vunpack.c.h.b16 %v328
      %v581 = vunpack.c.l.b16 %v329
      %v582 = vunpack.c.h.b16 %v329
      %v583 = vunpack.c.l.b16 %v330
      %v584 = vunpack.c.h.b16 %v330
      %v585 = vunpack.c.l.b16 %v331
      %v586 = vunpack.c.l.b16 %v332
      %v587 = vunpack.c.h.b16 %v332
      %v588 = vunpack.c.l.b16 %v333
      %v589 = vunpack.c.h.b16 %v333
      %v590 = vunpack.c.l.b16 %v334
      %v591 = vunpack.c.h.b16 %v334
      %v592 = vunpack.c.l.b16 %v335
      %v593 = vunpack.c.l.b16 %v336
      %v594 = vunpack.c.h.b16 %v336
      %v595 = vunpack.c.l.b16 %v337
      %v596 = vunpack.c.h.b16 %v337
      %v597 = vunpack.c.l.b16 %v338
      %v598 = vunpack.c.h.b16 %v338
      %v599 = vunpack.c.l.b16 %v339
      %v600 = vunpack.c.l.b16 %v340
      %v601 = vunpack.c.h.b16 %v340
      %v602 = vunpack.c.l.b16 %v341
      %v603 = vunpack.c.h.b16 %v341
      %v604 = vunpack.c.l.b16 %v342
      %v605 = vunpack.c.h.b16 %v342
      %v606 = vunpack.c.l.b16 %v343
      %v607 = vunpack.c.l.b16 %v344
      %v608 = vunpack.c.h.b16 %v344
      %v609 = vunpack.c.l.b16 %v345
      %v610 = vunpack.c.h.b16 %v345
      %v611 = vunpack.c.l.b16 %v346
      %v612 = vunpack.c.h.b16 %v346
      %v613 = vunpack.c.l.b16 %v347
      %v614 = vunpack.c.l.b16 %v348
      %v615 = vunpack.c.h.b16 %v348
      %v616 = vunpack.c.l.b16 %v349
      %v617 = vunpack.c.h.b16 %v349
      %v618 = vunpack.c.l.b16 %v350
      %v619 = vunpack.c.h.b16 %v350
      %v620 = vunpack.c.l.b16 %v351
      %v621 = vunpack.c.l.b16 %v352
      %v622 = vunpack.c.h.b16 %v352
      %v623 = vunpack.c.l.b16 %v353
      %v624 = vunpack.c.h.b16 %v353
      %v625 = vunpack.c.l.b16 %v354
      %v626 = vunpack.c.h.b16 %v354
      %v627 = vunpack.c.l.b16 %v355
      %v628 = vunpack.c.l.b16 %v356
      %v629 = vunpack.c.h.b16 %v356
      %v630 = vunpack.c.l.b16 %v357
      %v631 = vunpack.c.h.b16 %v357
      %v632 = vunpack.c.l.b16 %v358
      %v633 = vunpack.c.h.b16 %v358
      %v634 = vunpack.c.l.b16 %v359
      %v635 = vunpack.c.l.b16 %v360
      %v636 = vunpack.c.h.b16 %v360
      %v637 = vunpack.c.l.b16 %v361
      %v638 = vunpack.c.h.b16 %v361
      %v639 = vunpack.c.l.b16 %v362
      %v640 = vunpack.c.h.b16 %v362
      %v641 = vunpack.c.l.b16 %v363
      %v642 = vunpack.c.l.b16 %v364
      %v643 = vunpack.c.h.b16 %v364
      %v644 = vunpack.c.l.b16 %v365
      %v645 = vunpack.c.h.b16 %v365
      %v646 = vunpack.c.l.b16 %v366
      %v647 = vunpack.c.h.b16 %v366
      %v648 = vunpack.c.l.b16 %v367
      %v649 = vunpack.c.l.b16 %v368
      %v650 = vunpack.c.h.b16 %v368
      %v651 = vunpack.c.l.b16 %v369
      %v652 = vunpack.c.h.b16 %v369
      %v653 = vunpack.c.l.b16 %v370
      %v654 = vunpack.c.h.b16 %v370
      %v655 = vunpack.c.l.b16 %v371
      %v656 = vunpack.c.l.b16 %v372
      %v657 = vunpack.c.h.b16 %v372
      %v658 = vunpack.c.l.b16 %v373
      %v659 = vunpack.c.h.b16 %v373
      %v660 = vunpack.c.l.b16 %v374
      %v661 = vunpack.c.h.b16 %v374
      %v662 = vunpack.c.l.b16 %v375
      %v663 = vunpack.c.l.b16 %v376
      %v664 = vunpack.c.h.b16 %v376
      %v665 = vunpack.c.l.b16 %v377
      %v666 = vunpack.c.h.b16 %v377
      %v667 = vunpack.c.l.b16 %v378
      %v668 = vunpack.c.h.b16 %v378
      %v669 = vunpack.c.l.b16 %v379
      %v670 = vunpack.c.l.b16 %v380
      %v671 = vunpack.c.h.b16 %v380
      %v672 = vunpack.c.l.b16 %v381
      %v673 = vunpack.c.h.b16 %v381
      %v674 = vunpack.c.l.b16 %v382
      %v675 = vunpack.c.h.b16 %v382
      %v676 = vunpack.c.l.b16 %v383
      %v677 = vunpack.c.l.b16 %v384
      %v678 = vunpack.c.h.b16 %v384
      %v679 = vunpack.c.l.b16 %v385
      %v680 = vunpack.c.h.b16 %v385
      %v681 = vunpack.c.l.b16 %v386
      %v682 = vunpack.c.h.b16 %v386
      %v683 = vunpack.c.l.b16 %v387
      %v684 = vpack.c.b16 %v579, %v572
      %v685 = vpack.c.b16 %v580, %v573
      %v686 = vpack.c.b16 %v581, %v574
      %v687 = vpack.c.b16 %v582, %v575
      %v688 = vpack.c.b16 %v583, %v576
      %v689 = vpack.c.b16 %v584, %v577
      %v690 = vpack.c.b16 %v585, %v578
      %v691 = vpack.c.b16 %v593, %v586
      %v692 = vpack.c.b16 %v594, %v587
      %v693 = vpack.c.b16 %v595, %v588
      %v694 = vpack.c.b16 %v596, %v589
      %v695 = vpack.c.b16 %v597, %v590
      %v696 = vpack.c.b16 %v598, %v591
      %v697 = vpack.c.b16 %v599, %v592
      %v698 = vpack.c.b16 %v607, %v600
      %v699 = vpack.c.b16 %v608, %v601
      %v700 = vpack.c.b16 %v609, %v602
      %v701 = vpack.c.b16 %v610, %v603
      %v702 = vpack.c.b16 %v611, %v604
      %v703 = vpack.c.b16 %v612, %v605
      %v704 = vpack.c.b16 %v613, %v606
      %v705 = vpack.c.b16 %v621, %v614
      %v706 = vpack.c.b16 %v622, %v615
      %v707 = vpack.c.b16 %v623, %v616
      %v708 = vpack.c.b16 %v624, %v617
      %v709 = vpack.c.b16 %v625, %v618
      %v710 = vpack.c.b16 %v626, %v619
      %v711 = vpack.c.b16 %v627, %v620
      %v712 = vpack.c.b16 %v635, %v628
      %v713 = vpack.c.b16 %v636, %v629
      %v714 = vpack.c.b16 %v637, %v630
      %v715 = vpack.c.b16 %v638, %v631
      %v716 = vpack.c.b16 %v639, %v632
      %v717 = vpack.c.b16 %v640, %v633
      %v718 = vpack.c.b16 %v641, %v634
      %v719 = vpack.c.b16 %v649, %v642
      %v720 = vpack.c.b16 %v650, %v643
      %v721 = vpack.c.b16 %v651, %v644
      %v722 = vpack.c.b16 %v652, %v645
      %v723 = vpack.c.b16 %v653, %v646
      %v724 = vpack.c.b16 %v654, %v647
      %v725 = vpack.c.b16 %v655, %v648
      %v726 = vpack.c.b16 %v663, %v656
      %v727 = vpack.c.b16 %v664, %v657
      %v728 = vpack.c.b16 %v665, %v658
      %v729 = vpack.c.b16 %v666, %v659
      %v730 = vpack.c.b16 %v667, %v660
      %v731 = vpack.c.b16 %v668, %v661
      %v732 = vpack.c.b16 %v669, %v662
      %v733 = vpack.c.b16 %v677, %v670
      %v734 = vpack.c.b16 %v678, %v671
      %v735 = vpack.c.b16 %v679, %v672
      %v736 = vpack.c.b16 %v680, %v673
      %v737 = vpack.c.b16 %v681, %v674
      %v738 = vpack.c.b16 %v682, %v675
      %v739 = vpack.c.b16 %v683, %v676
      %v886 = vunpack.c.l.b16 %v402
      %v887 = vunpack.c.l.b16 %v403
      %v888 = vunpack.c.l.b16 %v404
      %v889 = vunpack.c.l.b16 %v405
      %v890 = vunpack.c.l.b16 %v406
      %v891 = vunpack.c.l.b16 %v407
      %v892 = vunpack.c.l.b16 %v408
      %v893 = vunpack.c.l.b16 %v409
      %v894 = vunpack.c.l.b16 %v410
      %v895 = vunpack.c.l.b16 %v411
      %v896 = vunpack.c.l.b16 %v412
      %v897 = vunpack.c.l.b16 %v413
      %v898 = vunpack.c.l.b16 %v414
      %v899 = vunpack.c.l.b16 %v415
      %v900 = vunpack.c.l.b16 %v416
      %v901 = vunpack.c.l.b16 %v417
      %v902 = vunpack.c.l.b16 %v418
      %v903 = vunpack.c.l.b16 %v419
      %v904 = vunpack.c.l.b16 %v420
      %v905 = vunpack.c.l.b16 %v421
      %v906 = vunpack.c.l.b16 %v422
      %v907 = vunpack.c.l.b16 %v423
      %v908 = vunpack.c.l.b16 %v424
      %v909 = vunpack.c.l.b16 %v425
      %v910 = vunpack.c.l.b16 %v426
      %v911 = vunpack.c.l.b16 %v427
      %v912 = vunpack.c.l.b16 %v428
      %v913 = vunpack.c.l.b16 %v429
      %v914 = vunpack.c.l.b16 %v430
      %v915 = vunpack.c.l.b16 %v431
      %v916 = vunpack.c.l.b16 %v432
      %v917 = vunpack.c.l.b16 %v433
      %v918 = vunpack.c.l.b16 %v434
      %v919 = vunpack.c.l.b16 %v435
      %v920 = vunpack.c.l.b16 %v436
      %v921 = vunpack.c.l.b16 %v437
      %v922 = vunpack.c.l.b16 %v438
      %v923 = vunpack.c.l.b16 %v439
      %v924 = vunpack.c.l.b16 %v440
      %v925 = vunpack.c.l.b16 %v441
      %v926 = vunpack.c.l.b16 %v442
      %v927 = vunpack.c.l.b16 %v443
      %v928 = vunpack.c.l.b16 %v444
      %v929 = vunpack.c.l.b16 %v445
      %v930 = vunpack.c.l.b16 %v446
      %v931 = vunpack.c.l.b16 %v447
      %v932 = vunpack.c.l.b16 %v448
      %v933 = vunpack.c.l.b16 %v449
      %v934 = vunpack.c.l.b16 %v450
      %v935 = vunpack.c.l.b16 %v451
      %v936 = vunpack.c.l.b16 %v452
      %v937 = vunpack.c.l.b16 %v453
      %v938 = vunpack.c.l.b16 %v454
      %v939 = vunpack.c.l.b16 %v455
      %v940 = vunpack.c.l.b16 %v456
      %v941 = vunpack.c.l.b16 %v457
      %v942 = vunpack.c.l.b16 %v458
      %v943 = vunpack.c.l.b16 %v459
      %v944 = vunpack.c.l.b16 %v460
      %v945 = vunpack.c.l.b16 %v461
      %v946 = vunpack.c.l.b16 %v462
      %v947 = vunpack.c.l.b16 %v463
      %v948 = vunpack.c.l.b16 %v464
      %v949 = vunpack.c.l.b16 %v465
      %v950 = vunpack.c.l.b16 %v466
      %v951 = vunpack.c.l.b16 %v467
      %v952 = vunpack.c.l.b16 %v468
      %v953 = vunpack.c.l.b16 %v469
      %v954 = vunpack.c.l.b16 %v470
      %v955 = vunpack.c.l.b16 %v471
      %v956 = vunpack.c.l.b16 %v472
      %v957 = vunpack.c.l.b16 %v473
      %v958 = vunpack.c.l.b16 %v474
      %v959 = vunpack.c.l.b16 %v475
      %v960 = vunpack.c.l.b16 %v476
      %v961 = vunpack.c.l.b16 %v477
      %v962 = vunpack.c.l.b16 %v478
      %v963 = vunpack.c.l.b16 %v479
      %v964 = vunpack.c.l.b16 %v480
      %v965 = vunpack.c.l.b16 %v481
      %v966 = vunpack.c.l.b16 %v482
      %v967 = vunpack.c.l.b16 %v483
      %v968 = vunpack.c.l.b16 %v484
      %v969 = vunpack.c.l.b16 %v485
      %v970 = vunpack.c.l.b16 %v486
      %v971 = vunpack.c.l.b16 %v487
      %v972 = vunpack.c.l.b16 %v488
      %v973 = vunpack.c.l.b16 %v489
      %v974 = vunpack.c.l.b16 %v490
      %v975 = vunpack.c.l.b16 %v491
      %v976 = vunpack.c.l.b16 %v492
      %v977 = vunpack.c.l.b16 %v493
      %v978 = vunpack.c.l.b16 %v494
      %v979 = vunpack.c.l.b16 %v495
      %v980 = vunpack.c.l.b16 %v496
      %v981 = vunpack.c.l.b16 %v497
      %v982 = vunpack.c.l.b16 %v498
      %v983 = vunpack.c.l.b16 %v499
      %v984 = vpack.c.b16 %v887, %v886
      %v985 = vpack.c.b16 %v889, %v888
      %v986 = vpack.c.b16 %v891, %v890
      %v987 = vpack.c.b16 %v893, %v892
      %v988 = vpack.c.b16 %v895, %v894
      %v989 = vpack.c.b16 %v897, %v896
      %v990 = vpack.c.b16 %v899, %v898
      %v991 = vpack.c.b16 %v901, %v900
      %v992 = vpack.c.b16 %v903, %v902
      %v993 = vpack.c.b16 %v905, %v904
      %v994 = vpack.c.b16 %v907, %v906
      %v995 = vpack.c.b16 %v909, %v908
      %v996 = vpack.c.b16 %v911, %v910
      %v997 = vpack.c.b16 %v913, %v912
      %v998 = vpack.c.b16 %v915, %v914
      %v999 = vpack.c.b16 %v917, %v916
      %v1000 = vpack.c.b16 %v919, %v918
      %v1001 = vpack.c.b16 %v921, %v920
      %v1002 = vpack.c.b16 %v923, %v922
      %v1003 = vpack.c.b16 %v925, %v924
      %v1004 = vpack.c.b16 %v927, %v926
      %v1005 = vpack.c.b16 %v929, %v928
      %v1006 = vpack.c.b16 %v931, %v930
      %v1007 = vpack.c.b16 %v933, %v932
      %v1008 = vpack.c.b16 %v935, %v934
      %v1009 = vpack.c.b16 %v937, %v936
      %v1010 = vpack.c.b16 %v939, %v938
      %v1011 = vpack.c.b16 %v941, %v940
      %v1012 = vpack.c.b16 %v943, %v942
      %v1013 = vpack.c.b16 %v945, %v944
      %v1014 = vpack.c.b16 %v947, %v946
      %v1015 = vpack.c.b16 %v949, %v948
      %v1016 = vpack.c.b16 %v951, %v950
      %v1017 = vpack.c.b16 %v953, %v952
      %v1018 = vpack.c.b16 %v955, %v954
      %v1019 = vpack.c.b16 %v957, %v956
      %v1020 = vpack.c.b16 %v959, %v958
      %v1021 = vpack.c.b16 %v961, %v960
      %v1022 = vpack.c.b16 %v963, %v962
      %v1023 = vpack.c.b16 %v965, %v964
      %v1024 = vpack.c.b16 %v967, %v966
      %v1025 = vpack.c.b16 %v969, %v968
      %v1026 = vpack.c.b16 %v971, %v970
      %v1027 = vpack.c.b16 %v973, %v972
      %v1028 = vpack.c.b16 %v975, %v974
      %v1029 = vpack.c.b16 %v977, %v976
      %v1030 = vpack.c.b16 %v979, %v978
      %v1031 = vpack.c.b16 %v981, %v980
      %v1032 = vpack.c.b16 %v983, %v982
      %vm1082 = vcmask 130048
      %v1084 = vsel %vm1082, %v690, 0
      %v1087 = vsel %vm1082, %v697, 0
      %v1090 = vsel %vm1082, %v704, 0
      %v1093 = vsel %vm1082, %v711, 0
      %v1096 = vsel %vm1082, %v718, 0
      %v1099 = vsel %vm1082, %v725, 0
      %v1102 = vsel %vm1082, %v732, 0
      %v1105 = vsel %vm1082, %v739, 0
      %1107 = vmatprep.subr.bf16.mxu0 0
      %1108 = vmatpush1.bf16.msra.mxu0 %v984
      %1109 = vmatprep.subr.bf16.mxu0 0
      %1110 = vmatpush1.bf16.msra.mxu0 %v985
      %1111 = vmatprep.subr.bf16.mxu0 0
      %1112 = vmatpush1.bf16.msra.mxu0 %v986
      %1113 = vmatprep.subr.bf16.mxu0 0
      %1114 = vmatpush1.bf16.msra.mxu0 %v987
      %1115 = vmatprep.subr.bf16.mxu0 0
      %1116 = vmatpush1.bf16.msra.mxu0 %v988
      %1117 = vmatprep.subr.bf16.mxu0 0
      %1118 = vmatpush1.bf16.msra.mxu0 %v989
      %1119 = vmatprep.subr.bf16.mxu0 0
      %1120 = vmatpush1.bf16.msra.mxu0 %v990
      %1121 = vmatprep.subr.bf16.mxu0 0
      %1122 = vmatpush1.bf16.msra.mxu0 %v991
      %1123 = vmatprep.subr.bf16.mxu0 0
      %1124 = vmatpush1.bf16.msra.mxu0 %v992
      %1125 = vmatprep.subr.bf16.mxu0 0
      %1126 = vmatpush1.bf16.msra.mxu0 %v993
      %1127 = vmatprep.subr.bf16.mxu0 0
      %1128 = vmatpush1.bf16.msra.mxu0 %v994
      %1129 = vmatprep.subr.bf16.mxu0 0
      %1130 = vmatpush1.bf16.msra.mxu0 %v995
      %1131 = vmatprep.subr.bf16.mxu0 0
      %1132 = vmatpush1.bf16.msra.mxu0 %v996
      %1133 = vmatprep.subr.bf16.mxu0 0
      %1134 = vmatpush1.bf16.msra.mxu0 %v997
      %1135 = vmatprep.subr.bf16.mxu0 0
      %1136 = vmatpush1.bf16.msra.mxu0 %v998
      %1137 = vmatprep.subr.bf16.mxu0 0
      %1138 = vmatpush1.bf16.msra.mxu0 %v999
      %1139 = vmatprep.mubr.bf16.mxu0 %v685
      %1140 = vmatmul.mubr.bf16.gmra.mrb[0].mxu0 %v684
      %v1141 = vpop.f32.mrb[0].mxu0
      %v1142 = vadd.f32 %v506, %v1141
      %v1143 = vpop.f32.mrb[0].mxu0
      %v1144 = vpop.f32.mrb[0].mxu0
      %v1145 = vadd.f32 %v506, %v1144
      %v1146 = vpop.f32.mrb[0].mxu0
      %1147 = vmatprep.mubr.bf16.mxu0 %v692
      %1148 = vmatmul.mubr.bf16.gmra.mrb[0].mxu0 %v691
      %v1149 = vpop.f32.mrb[0].mxu0
      %v1150 = vadd.f32 %v506, %v1149
      %v1151 = vpop.f32.mrb[0].mxu0
      %v1152 = vpop.f32.mrb[0].mxu0
      %v1153 = vadd.f32 %v506, %v1152
      %v1154 = vpop.f32.mrb[0].mxu0
      %1155 = vmatprep.mubr.bf16.mxu0 %v699
      %1156 = vmatmul.mubr.bf16.gmra.mrb[0].mxu0 %v698
      %v1157 = vpop.f32.mrb[0].mxu0
      %v1158 = vadd.f32 %v506, %v1157
      %v1159 = vpop.f32.mrb[0].mxu0
      %v1160 = vpop.f32.mrb[0].mxu0
      %v1161 = vadd.f32 %v506, %v1160
      %v1162 = vpop.f32.mrb[0].mxu0
      %1163 = vmatprep.mubr.bf16.mxu0 %v706
      %1164 = vmatmul.mubr.bf16.gmra.mrb[0].mxu0 %v705
      %v1165 = vpop.f32.mrb[0].mxu0
      %v1166 = vadd.f32 %v506, %v1165
      %v1167 = vpop.f32.mrb[0].mxu0
      %v1168 = vpop.f32.mrb[0].mxu0
      %v1169 = vadd.f32 %v506, %v1168
      %v1170 = vpop.f32.mrb[0].mxu0
      %1171 = vmatprep.mubr.bf16.mxu0 %v713
      %1172 = vmatmul.mubr.bf16.gmra.mrb[0].mxu0 %v712
      %v1173 = vpop.f32.mrb[0].mxu0
      %v1174 = vadd.f32 %v506, %v1173
      %v1175 = vpop.f32.mrb[0].mxu0
      %v1176 = vpop.f32.mrb[0].mxu0
      %v1177 = vadd.f32 %v506, %v1176
      %v1178 = vpop.f32.mrb[0].mxu0
      %1179 = vmatprep.mubr.bf16.mxu0 %v720
      %1180 = vmatmul.mubr.bf16.gmra.mrb[0].mxu0 %v719
      %v1181 = vpop.f32.mrb[0].mxu0
      %v1182 = vadd.f32 %v506, %v1181
      %v1183 = vpop.f32.mrb[0].mxu0
      %v1184 = vpop.f32.mrb[0].mxu0
      %v1185 = vadd.f32 %v506, %v1184
      %v1186 = vpop.f32.mrb[0].mxu0
      %1187 = vmatprep.mubr.bf16.mxu0 %v727
      %1188 = vmatmul.mubr.bf16.gmra.mrb[0].mxu0 %v726
      %v1189 = vpop.f32.mrb[0].mxu0
      %v1190 = vadd.f32 %v506, %v1189
      %v1191 = vpop.f32.mrb[0].mxu0
      %v1192 = vpop.f32.mrb[0].mxu0
      %v1193 = vadd.f32 %v506, %v1192
      %v1194 = vpop.f32.mrb[0].mxu0
      %1195 = vmatprep.mubr.bf16.mxu0 %v734
      %1196 = vmatmul.mubr.bf16.gmra.mrb[0].mxu0 %v733
      %v1197 = vpop.f32.mrb[0].mxu0
      %v1198 = vadd.f32 %v506, %v1197
      %v1199 = vpop.f32.mrb[0].mxu0
      %v1200 = vpop.f32.mrb[0].mxu0
      %v1201 = vadd.f32 %v506, %v1200
      %v1202 = vpop.f32.mrb[0].mxu0
      %1203 = vdwg.mxu0
      %1204 = vmatprep.subr.bf16.mxu0 0
      %1205 = vmatpush1.bf16.msra.mxu0 %v1000
      %1206 = vmatprep.subr.bf16.mxu0 0
      %1207 = vmatpush1.bf16.msra.mxu0 %v1001
      %1208 = vmatprep.subr.bf16.mxu0 0
      %1209 = vmatpush1.bf16.msra.mxu0 %v1002
      %1210 = vmatprep.subr.bf16.mxu0 0
      %1211 = vmatpush1.bf16.msra.mxu0 %v1003
      %1212 = vmatprep.subr.bf16.mxu0 0
      %1213 = vmatpush1.bf16.msra.mxu0 %v1004
      %1214 = vmatprep.subr.bf16.mxu0 0
      %1215 = vmatpush1.bf16.msra.mxu0 %v1005
      %1216 = vmatprep.subr.bf16.mxu0 0
      %1217 = vmatpush1.bf16.msra.mxu0 %v1006
      %1218 = vmatprep.subr.bf16.mxu0 0
      %1219 = vmatpush1.bf16.msra.mxu0 %v1007
      %1220 = vmatprep.subr.bf16.mxu0 0
      %1221 = vmatpush1.bf16.msra.mxu0 %v1008
      %1222 = vmatprep.subr.bf16.mxu0 0
      %1223 = vmatpush1.bf16.msra.mxu0 %v1009
      %1224 = vmatprep.subr.bf16.mxu0 0
      %1225 = vmatpush1.bf16.msra.mxu0 %v1010
      %1226 = vmatprep.subr.bf16.mxu0 0
      %1227 = vmatpush1.bf16.msra.mxu0 %v1011
      %1228 = vmatprep.subr.bf16.mxu0 0
      %1229 = vmatpush1.bf16.msra.mxu0 %v1012
      %1230 = vmatprep.subr.bf16.mxu0 0
      %1231 = vmatpush1.bf16.msra.mxu0 %v1013
      %1232 = vmatprep.subr.bf16.mxu0 0
      %1233 = vmatpush1.bf16.msra.mxu0 %v1014
      %1234 = vmatprep.subr.bf16.mxu0 0
      %1235 = vmatpush1.bf16.msra.mxu0 %v1015
      %1236 = vmatprep.mubr.bf16.mxu0 %v687
      %1237 = vmatmul.mubr.bf16.gmra.mrb[0].mxu0 %v686
      %v1238 = vpop.f32.mrb[0].mxu0
      %v1239 = vadd.f32 %v1142, %v1238
      %v1240 = vpop.f32.mrb[0].mxu0
      %v1241 = vpop.f32.mrb[0].mxu0
      %v1242 = vadd.f32 %v1145, %v1241
      %v1243 = vpop.f32.mrb[0].mxu0
      %1244 = vmatprep.mubr.bf16.mxu0 %v694
      %1245 = vmatmul.mubr.bf16.gmra.mrb[0].mxu0 %v693
      %v1246 = vpop.f32.mrb[0].mxu0
      %v1247 = vadd.f32 %v1150, %v1246
      %v1248 = vpop.f32.mrb[0].mxu0
      %v1249 = vpop.f32.mrb[0].mxu0
      %v1250 = vadd.f32 %v1153, %v1249
      %v1251 = vpop.f32.mrb[0].mxu0
      %1252 = vmatprep.mubr.bf16.mxu0 %v701
      %1253 = vmatmul.mubr.bf16.gmra.mrb[0].mxu0 %v700
      %v1254 = vpop.f32.mrb[0].mxu0
      %v1255 = vadd.f32 %v1158, %v1254
      %v1256 = vpop.f32.mrb[0].mxu0
      %v1257 = vpop.f32.mrb[0].mxu0
      %v1258 = vadd.f32 %v1161, %v1257
      %v1259 = vpop.f32.mrb[0].mxu0
      %1260 = vmatprep.mubr.bf16.mxu0 %v708
      %1261 = vmatmul.mubr.bf16.gmra.mrb[0].mxu0 %v707
      %v1262 = vpop.f32.mrb[0].mxu0
      %v1263 = vadd.f32 %v1166, %v1262
      %v1264 = vpop.f32.mrb[0].mxu0
      %v1265 = vpop.f32.mrb[0].mxu0
      %v1266 = vadd.f32 %v1169, %v1265
      %v1267 = vpop.f32.mrb[0].mxu0
      %1268 = vmatprep.mubr.bf16.mxu0 %v715
      %1269 = vmatmul.mubr.bf16.gmra.mrb[0].mxu0 %v714
      %v1270 = vpop.f32.mrb[0].mxu0
      %v1271 = vadd.f32 %v1174, %v1270
      %v1272 = vpop.f32.mrb[0].mxu0
      %v1273 = vpop.f32.mrb[0].mxu0
      %v1274 = vadd.f32 %v1177, %v1273
      %v1275 = vpop.f32.mrb[0].mxu0
      %1276 = vmatprep.mubr.bf16.mxu0 %v722
      %1277 = vmatmul.mubr.bf16.gmra.mrb[0].mxu0 %v721
      %v1278 = vpop.f32.mrb[0].mxu0
      %v1279 = vadd.f32 %v1182, %v1278
      %v1280 = vpop.f32.mrb[0].mxu0
      %v1281 = vpop.f32.mrb[0].mxu0
      %v1282 = vadd.f32 %v1185, %v1281
      %v1283 = vpop.f32.mrb[0].mxu0
      %1284 = vmatprep.mubr.bf16.mxu0 %v729
      %1285 = vmatmul.mubr.bf16.gmra.mrb[0].mxu0 %v728
      %v1286 = vpop.f32.mrb[0].mxu0
      %v1287 = vadd.f32 %v1190, %v1286
      %v1288 = vpop.f32.mrb[0].mxu0
      %v1289 = vpop.f32.mrb[0].mxu0
      %v1290 = vadd.f32 %v1193, %v1289
      %v1291 = vpop.f32.mrb[0].mxu0
      %1292 = vmatprep.mubr.bf16.mxu0 %v736
      %1293 = vmatmul.mubr.bf16.gmra.mrb[0].mxu0 %v735
      %v1294 = vpop.f32.mrb[0].mxu0
      %v1295 = vadd.f32 %v1198, %v1294
      %v1296 = vpop.f32.mrb[0].mxu0
      %v1297 = vpop.f32.mrb[0].mxu0
      %v1298 = vadd.f32 %v1201, %v1297
      %v1299 = vpop.f32.mrb[0].mxu0
      %1300 = vdwg.mxu0
      %1301 = vmatprep.subr.bf16.mxu0 0
      %1302 = vmatpush1.bf16.msra.mxu0 %v1016
      %1303 = vmatprep.subr.bf16.mxu0 0
      %1304 = vmatpush1.bf16.msra.mxu0 %v1017
      %1305 = vmatprep.subr.bf16.mxu0 0
      %1306 = vmatpush1.bf16.msra.mxu0 %v1018
      %1307 = vmatprep.subr.bf16.mxu0 0
      %1308 = vmatpush1.bf16.msra.mxu0 %v1019
      %1309 = vmatprep.subr.bf16.mxu0 0
      %1310 = vmatpush1.bf16.msra.mxu0 %v1020
      %1311 = vmatprep.subr.bf16.mxu0 0
      %1312 = vmatpush1.bf16.msra.mxu0 %v1021
      %1313 = vmatprep.subr.bf16.mxu0 0
      %1314 = vmatpush1.bf16.msra.mxu0 %v1022
      %1315 = vmatprep.subr.bf16.mxu0 0
      %1316 = vmatpush1.bf16.msra.mxu0 %v1023
      %1317 = vmatprep.subr.bf16.mxu0 0
      %1318 = vmatpush1.bf16.msra.mxu0 %v1024
      %1319 = vmatprep.subr.bf16.mxu0 0
      %1320 = vmatpush1.bf16.msra.mxu0 %v1025
      %1321 = vmatprep.subr.bf16.mxu0 0
      %1322 = vmatpush1.bf16.msra.mxu0 %v1026
      %1323 = vmatprep.subr.bf16.mxu0 0
      %1324 = vmatpush1.bf16.msra.mxu0 %v1027
      %1325 = vmatprep.subr.bf16.mxu0 0
      %1326 = vmatpush1.bf16.msra.mxu0 %v1028
      %1327 = vmatprep.subr.bf16.mxu0 0
      %1328 = vmatpush1.bf16.msra.mxu0 %v1029
      %1329 = vmatprep.subr.bf16.mxu0 0
      %1330 = vmatpush1.bf16.msra.mxu0 %v1030
      %1331 = vmatprep.subr.bf16.mxu0 0
      %1332 = vmatpush1.bf16.msra.mxu0 %v1031
      %1333 = vmatprep.mubr.bf16.mxu0 %v689
      %1334 = vmatmul.mubr.bf16.gmra.mrb[0].mxu0 %v688
      %v1335 = vpop.f32.mrb[0].mxu0
      %v1336 = vadd.f32 %v1239, %v1335
      %v1337 = vpop.f32.mrb[0].mxu0
      %v1338 = vpop.f32.mrb[0].mxu0
      %v1339 = vadd.f32 %v1242, %v1338
      %v1340 = vpop.f32.mrb[0].mxu0
      %1341 = vmatprep.mubr.bf16.mxu0 %v696
      %1342 = vmatmul.mubr.bf16.gmra.mrb[0].mxu0 %v695
      %v1343 = vpop.f32.mrb[0].mxu0
      %v1344 = vadd.f32 %v1247, %v1343
      %v1345 = vpop.f32.mrb[0].mxu0
      %v1346 = vpop.f32.mrb[0].mxu0
      %v1347 = vadd.f32 %v1250, %v1346
      %v1348 = vpop.f32.mrb[0].mxu0
      %1349 = vmatprep.mubr.bf16.mxu0 %v703
      %1350 = vmatmul.mubr.bf16.gmra.mrb[0].mxu0 %v702
      %v1351 = vpop.f32.mrb[0].mxu0
      %v1352 = vadd.f32 %v1255, %v1351
      %v1353 = vpop.f32.mrb[0].mxu0
      %v1354 = vpop.f32.mrb[0].mxu0
      %v1355 = vadd.f32 %v1258, %v1354
      %v1356 = vpop.f32.mrb[0].mxu0
      %1357 = vmatprep.mubr.bf16.mxu0 %v710
      %1358 = vmatmul.mubr.bf16.gmra.mrb[0].mxu0 %v709
      %v1359 = vpop.f32.mrb[0].mxu0
      %v1360 = vadd.f32 %v1263, %v1359
      %v1361 = vpop.f32.mrb[0].mxu0
      %v1362 = vpop.f32.mrb[0].mxu0
      %v1363 = vadd.f32 %v1266, %v1362
      %v1364 = vpop.f32.mrb[0].mxu0
      %1365 = vmatprep.mubr.bf16.mxu0 %v717
      %1366 = vmatmul.mubr.bf16.gmra.mrb[0].mxu0 %v716
      %v1367 = vpop.f32.mrb[0].mxu0
      %v1368 = vadd.f32 %v1271, %v1367
      %v1369 = vpop.f32.mrb[0].mxu0
      %v1370 = vpop.f32.mrb[0].mxu0
      %v1371 = vadd.f32 %v1274, %v1370
      %v1372 = vpop.f32.mrb[0].mxu0
      %1373 = vmatprep.mubr.bf16.mxu0 %v724
      %1374 = vmatmul.mubr.bf16.gmra.mrb[0].mxu0 %v723
      %v1375 = vpop.f32.mrb[0].mxu0
      %v1376 = vadd.f32 %v1279, %v1375
      %v1377 = vpop.f32.mrb[0].mxu0
      %v1378 = vpop.f32.mrb[0].mxu0
      %v1379 = vadd.f32 %v1282, %v1378
      %v1380 = vpop.f32.mrb[0].mxu0
      %1381 = vmatprep.mubr.bf16.mxu0 %v731
      %1382 = vmatmul.mubr.bf16.gmra.mrb[0].mxu0 %v730
      %v1383 = vpop.f32.mrb[0].mxu0
      %v1384 = vadd.f32 %v1287, %v1383
      %v1385 = vpop.f32.mrb[0].mxu0
      %v1386 = vpop.f32.mrb[0].mxu0
      %v1387 = vadd.f32 %v1290, %v1386
      %v1388 = vpop.f32.mrb[0].mxu0
      %1389 = vmatprep.mubr.bf16.mxu0 %v738
      %1390 = vmatmul.mubr.bf16.gmra.mrb[0].mxu0 %v737
      %v1391 = vpop.f32.mrb[0].mxu0
      %v1392 = vadd.f32 %v1295, %v1391
      %v1393 = vpop.f32.mrb[0].mxu0
      %v1394 = vpop.f32.mrb[0].mxu0
      %v1395 = vadd.f32 %v1298, %v1394
      %v1396 = vpop.f32.mrb[0].mxu0
      %1397 = vdwg.mxu0
      %1398 = vmatprep.subr.bf16.mxu0 0
      %1399 = vmatpush1.bf16.msra.mxu0 %v1032
      %1400 = vmatprep.subr.bf16.mxu0 0
      %1401 = vmatpush1.bf16.msra.mxu0 0
      %1402 = vmatprep.subr.bf16.mxu0 0
      %1403 = vmatpush1.bf16.msra.mxu0 0
      %1404 = vmatprep.subr.bf16.mxu0 0
      %1405 = vmatpush1.bf16.msra.mxu0 0
      %1406 = vmatprep.subr.bf16.mxu0 0
      %1407 = vmatpush1.bf16.msra.mxu0 0
      %1408 = vmatprep.subr.bf16.mxu0 0
      %1409 = vmatpush1.bf16.msra.mxu0 0
      %1410 = vmatprep.subr.bf16.mxu0 0
      %1411 = vmatpush1.bf16.msra.mxu0 0
      %1412 = vmatprep.subr.bf16.mxu0 0
      %1413 = vmatpush1.bf16.msra.mxu0 0
      %1414 = vmatprep.subr.bf16.mxu0 0
      %1415 = vmatpush1.bf16.msra.mxu0 0
      %1416 = vmatprep.subr.bf16.mxu0 0
      %1417 = vmatpush1.bf16.msra.mxu0 0
      %1418 = vmatprep.subr.bf16.mxu0 0
      %1419 = vmatpush1.bf16.msra.mxu0 0
      %1420 = vmatprep.subr.bf16.mxu0 0
      %1421 = vmatpush1.bf16.msra.mxu0 0
      %1422 = vmatprep.subr.bf16.mxu0 0
      %1423 = vmatpush1.bf16.msra.mxu0 0
      %1424 = vmatprep.subr.bf16.mxu0 0
      %1425 = vmatpush1.bf16.msra.mxu0 0
      %1426 = vmatprep.subr.bf16.mxu0 0
      %1427 = vmatpush1.bf16.msra.mxu0 0
      %1428 = vmatprep.subr.bf16.mxu0 0
      %1429 = vmatpush1.bf16.msra.mxu0 0
      %1430 = vmatprep.mubr.bf16.mxu0 0
      %1431 = vmatmul.mubr.bf16.gmra.mrb[0].mxu0 %v1084
      %v1432 = vpop.f32.mrb[0].mxu0
      %v1433 = vadd.f32 %v1336, %v1432
      %v1434 = vpop.f32.mrb[0].mxu0
      %v1435 = vpop.f32.mrb[0].mxu0
      %v1436 = vadd.f32 %v1339, %v1435
      %v1437 = vpop.f32.mrb[0].mxu0
      %1438 = vmatprep.mubr.bf16.mxu0 0
      %1439 = vmatmul.mubr.bf16.gmra.mrb[0].mxu0 %v1087
      %v1440 = vpop.f32.mrb[0].mxu0
      %v1441 = vadd.f32 %v1344, %v1440
      %v1442 = vpop.f32.mrb[0].mxu0
      %v1443 = vpop.f32.mrb[0].mxu0
      %v1444 = vadd.f32 %v1347, %v1443
      %v1445 = vpop.f32.mrb[0].mxu0
      %1446 = vmatprep.mubr.bf16.mxu0 0
      %1447 = vmatmul.mubr.bf16.gmra.mrb[0].mxu0 %v1090
      %v1448 = vpop.f32.mrb[0].mxu0
      %v1449 = vadd.f32 %v1352, %v1448
      %v1450 = vpop.f32.mrb[0].mxu0
      %v1451 = vpop.f32.mrb[0].mxu0
      %v1452 = vadd.f32 %v1355, %v1451
      %v1453 = vpop.f32.mrb[0].mxu0
      %1454 = vmatprep.mubr.bf16.mxu0 0
      %1455 = vmatmul.mubr.bf16.gmra.mrb[0].mxu0 %v1093
      %v1456 = vpop.f32.mrb[0].mxu0
      %v1457 = vadd.f32 %v1360, %v1456
      %v1458 = vpop.f32.mrb[0].mxu0
      %v1459 = vpop.f32.mrb[0].mxu0
      %v1460 = vadd.f32 %v1363, %v1459
      %v1461 = vpop.f32.mrb[0].mxu0
      %1462 = vmatprep.mubr.bf16.mxu0 0
      %1463 = vmatmul.mubr.bf16.gmra.mrb[0].mxu0 %v1096
      %v1464 = vpop.f32.mrb[0].mxu0
      %v1465 = vadd.f32 %v1368, %v1464
      %v1466 = vpop.f32.mrb[0].mxu0
      %v1467 = vpop.f32.mrb[0].mxu0
      %v1468 = vadd.f32 %v1371, %v1467
      %v1469 = vpop.f32.mrb[0].mxu0
      %1470 = vmatprep.mubr.bf16.mxu0 0
      %1471 = vmatmul.mubr.bf16.gmra.mrb[0].mxu0 %v1099
      %v1472 = vpop.f32.mrb[0].mxu0
      %v1473 = vadd.f32 %v1376, %v1472
      %v1474 = vpop.f32.mrb[0].mxu0
      %v1475 = vpop.f32.mrb[0].mxu0
      %v1476 = vadd.f32 %v1379, %v1475
      %v1477 = vpop.f32.mrb[0].mxu0
      %1478 = vmatprep.mubr.bf16.mxu0 0
      %1479 = vmatmul.mubr.bf16.gmra.mrb[0].mxu0 %v1102
      %v1480 = vpop.f32.mrb[0].mxu0
      %v1481 = vadd.f32 %v1384, %v1480
      %v1482 = vpop.f32.mrb[0].mxu0
      %v1483 = vpop.f32.mrb[0].mxu0
      %v1484 = vadd.f32 %v1387, %v1483
      %v1485 = vpop.f32.mrb[0].mxu0
      %1486 = vmatprep.mubr.bf16.mxu0 0
      %1487 = vmatmul.mubr.bf16.gmra.mrb[0].mxu0 %v1105
      %v1488 = vpop.f32.mrb[0].mxu0
      %v1489 = vadd.f32 %v1392, %v1488
      %v1490 = vpop.f32.mrb[0].mxu0
      %v1491 = vpop.f32.mrb[0].mxu0
      %v1492 = vadd.f32 %v1395, %v1491
      %v1493 = vpop.f32.mrb[0].mxu0
      %1494 = vdwg.mxu0
      %v1495 = vmax.f32 %v1433, 0.0
      %v1496 = vmax.f32 %v1436, 0.0
      %v1497 = vmax.f32 %v1441, 0.0
      %v1498 = vmax.f32 %v1444, 0.0
      %v1499 = vmax.f32 %v1449, 0.0
      %v1500 = vmax.f32 %v1452, 0.0
      %v1501 = vmax.f32 %v1457, 0.0
      %v1502 = vmax.f32 %v1460, 0.0
      %v1503 = vmax.f32 %v1465, 0.0
      %v1504 = vmax.f32 %v1468, 0.0
      %v1505 = vmax.f32 %v1473, 0.0
      %v1506 = vmax.f32 %v1476, 0.0
      %v1507 = vmax.f32 %v1481, 0.0
      %v1508 = vmax.f32 %v1484, 0.0
      %v1509 = vmax.f32 %v1489, 0.0
      %v1510 = vmax.f32 %v1492, 0.0
      %s1511 = sadd.s32 %s393, 1
      %s1512 = sld [smem:[#allocation3 + %s1511]]
      %p1513 = scmp.gt.s32.totalorder %s1512, 0
      %s1514 = scalar_select %p1513, %s1512, 0
      %p1515 = scmp.lt.s32.totalorder %s1514, 3
      %s1516 = scalar_select %p1515, %s1514, 3
      %s1517 = smul.u32 %s1516, 98
      %s1518 = smul.addr %s1517, 4
      %s1519 = scalar_lea.vmem %s2, %s1518
      %v1520 = vld [vmem:[%s1519] sm:$0xf]
      %v1521 = vld [vmem:[%s1519 + $0x4] sm:$0xf]
      %v1522 = vld [vmem:[%s1519 + $0x8] sm:$0xf]
      %v1523 = vld [vmem:[%s1519 + $0xc] sm:$0xf]
      %v1524 = vld [vmem:[%s1519 + $0x10] sm:$0xf]
      %v1525 = vld [vmem:[%s1519 + $0x14] sm:$0xf]
      %v1526 = vld [vmem:[%s1519 + $0x18] sm:$0xf]
      %v1527 = vld [vmem:[%s1519 + $0x1c] sm:$0xf]
      %v1528 = vld [vmem:[%s1519 + $0x20] sm:$0xf]
      %v1529 = vld [vmem:[%s1519 + $0x24] sm:$0xf]
      %v1530 = vld [vmem:[%s1519 + $0x28] sm:$0xf]
      %v1531 = vld [vmem:[%s1519 + $0x2c] sm:$0xf]
      %v1532 = vld [vmem:[%s1519 + $0x30] sm:$0xf]
      %v1533 = vld [vmem:[%s1519 + $0x34] sm:$0xf]
      %v1534 = vld [vmem:[%s1519 + $0x38] sm:$0xf]
      %v1535 = vld [vmem:[%s1519 + $0x3c] sm:$0xf]
      %v1536 = vld [vmem:[%s1519 + $0x40] sm:$0xf]
      %v1537 = vld [vmem:[%s1519 + $0x44] sm:$0xf]
      %v1538 = vld [vmem:[%s1519 + $0x48] sm:$0xf]
      %v1539 = vld [vmem:[%s1519 + $0x4c] sm:$0xf]
      %v1540 = vld [vmem:[%s1519 + $0x50] sm:$0xf]
      %v1541 = vld [vmem:[%s1519 + $0x54] sm:$0xf]
      %v1542 = vld [vmem:[%s1519 + $0x58] sm:$0xf]
      %v1543 = vld [vmem:[%s1519 + $0x5c] sm:$0xf]
      %v1544 = vld [vmem:[%s1519 + $0x60] sm:$0xf]
      %v1545 = vld [vmem:[%s1519 + $0x64] sm:$0xf]
      %v1546 = vld [vmem:[%s1519 + $0x68] sm:$0xf]
      %v1547 = vld [vmem:[%s1519 + $0x6c] sm:$0xf]
      %v1548 = vld [vmem:[%s1519 + $0x70] sm:$0xf]
      %v1549 = vld [vmem:[%s1519 + $0x74] sm:$0xf]
      %v1550 = vld [vmem:[%s1519 + $0x78] sm:$0xf]
      %v1551 = vld [vmem:[%s1519 + $0x7c] sm:$0xf]
      %v1552 = vld [vmem:[%s1519 + $0x80] sm:$0xf]
      %v1553 = vld [vmem:[%s1519 + $0x84] sm:$0xf]
      %v1554 = vld [vmem:[%s1519 + $0x88] sm:$0xf]
      %v1555 = vld [vmem:[%s1519 + $0x8c] sm:$0xf]
      %v1556 = vld [vmem:[%s1519 + $0x90] sm:$0xf]
      %v1557 = vld [vmem:[%s1519 + $0x94] sm:$0xf]
      %v1558 = vld [vmem:[%s1519 + $0x98] sm:$0xf]
      %v1559 = vld [vmem:[%s1519 + $0x9c] sm:$0xf]
      %v1560 = vld [vmem:[%s1519 + $0xa0] sm:$0xf]
      %v1561 = vld [vmem:[%s1519 + $0xa4] sm:$0xf]
      %v1562 = vld [vmem:[%s1519 + $0xa8] sm:$0xf]
      %v1563 = vld [vmem:[%s1519 + $0xac] sm:$0xf]
      %v1564 = vld [vmem:[%s1519 + $0xb0] sm:$0xf]
      %v1565 = vld [vmem:[%s1519 + $0xb4] sm:$0xf]
      %v1566 = vld [vmem:[%s1519 + $0xb8] sm:$0xf]
      %v1567 = vld [vmem:[%s1519 + $0xbc] sm:$0xf]
      %v1568 = vld [vmem:[%s1519 + $0xc0] sm:$0xf]
      %v1569 = vld [vmem:[%s1519 + $0xc4] sm:$0xf]
      %v1570 = vld [vmem:[%s1519 + $0xc8] sm:$0xf]
      %v1571 = vld [vmem:[%s1519 + $0xcc] sm:$0xf]
      %v1572 = vld [vmem:[%s1519 + $0xd0] sm:$0xf]
      %v1573 = vld [vmem:[%s1519 + $0xd4] sm:$0xf]
      %v1574 = vld [vmem:[%s1519 + $0xd8] sm:$0xf]
      %v1575 = vld [vmem:[%s1519 + $0xdc] sm:$0xf]
      %v1576 = vld [vmem:[%s1519 + $0xe0] sm:$0xf]
      %v1577 = vld [vmem:[%s1519 + $0xe4] sm:$0xf]
      %v1578 = vld [vmem:[%s1519 + $0xe8] sm:$0xf]
      %v1579 = vld [vmem:[%s1519 + $0xec] sm:$0xf]
      %v1580 = vld [vmem:[%s1519 + $0xf0] sm:$0xf]
      %v1581 = vld [vmem:[%s1519 + $0xf4] sm:$0xf]
      %v1582 = vld [vmem:[%s1519 + $0xf8] sm:$0xf]
      %v1583 = vld [vmem:[%s1519 + $0xfc] sm:$0xf]
      %v1584 = vld [vmem:[%s1519 + $0x100] sm:$0xf]
      %v1585 = vld [vmem:[%s1519 + $0x104] sm:$0xf]
      %v1586 = vld [vmem:[%s1519 + $0x108] sm:$0xf]
      %v1587 = vld [vmem:[%s1519 + $0x10c] sm:$0xf]
      %v1588 = vld [vmem:[%s1519 + $0x110] sm:$0xf]
      %v1589 = vld [vmem:[%s1519 + $0x114] sm:$0xf]
      %v1590 = vld [vmem:[%s1519 + $0x118] sm:$0xf]
      %v1591 = vld [vmem:[%s1519 + $0x11c] sm:$0xf]
      %v1592 = vld [vmem:[%s1519 + $0x120] sm:$0xf]
      %v1593 = vld [vmem:[%s1519 + $0x124] sm:$0xf]
      %v1594 = vld [vmem:[%s1519 + $0x128] sm:$0xf]
      %v1595 = vld [vmem:[%s1519 + $0x12c] sm:$0xf]
      %v1596 = vld [vmem:[%s1519 + $0x130] sm:$0xf]
      %v1597 = vld [vmem:[%s1519 + $0x134] sm:$0xf]
      %v1598 = vld [vmem:[%s1519 + $0x138] sm:$0xf]
      %v1599 = vld [vmem:[%s1519 + $0x13c] sm:$0xf]
      %v1600 = vld [vmem:[%s1519 + $0x140] sm:$0xf]
      %v1601 = vld [vmem:[%s1519 + $0x144] sm:$0xf]
      %v1602 = vld [vmem:[%s1519 + $0x148] sm:$0xf]
      %v1603 = vld [vmem:[%s1519 + $0x14c] sm:$0xf]
      %v1604 = vld [vmem:[%s1519 + $0x150] sm:$0xf]
      %v1605 = vld [vmem:[%s1519 + $0x154] sm:$0xf]
      %v1606 = vld [vmem:[%s1519 + $0x158] sm:$0xf]
      %v1607 = vld [vmem:[%s1519 + $0x15c] sm:$0xf]
      %v1608 = vld [vmem:[%s1519 + $0x160] sm:$0xf]
      %v1609 = vld [vmem:[%s1519 + $0x164] sm:$0xf]
      %v1610 = vld [vmem:[%s1519 + $0x168] sm:$0xf]
      %v1611 = vld [vmem:[%s1519 + $0x16c] sm:$0xf]
      %v1612 = vld [vmem:[%s1519 + $0x170] sm:$0xf]
      %v1613 = vld [vmem:[%s1519 + $0x174] sm:$0xf]
      %v1614 = vld [vmem:[%s1519 + $0x178] sm:$0xf]
      %v1615 = vld [vmem:[%s1519 + $0x17c] sm:$0xf]
      %v1616 = vld [vmem:[%s1519 + $0x180] sm:$0xf]
      %v1617 = vld [vmem:[%s1519 + $0x184] sm:$0xf]
      %s1618 = scalar_lea.vmem %s3, %s1516
      %v1619 = vld [vmem:[%s1618] sm:$0x1]
      %v1621 = vlaneseq
      %v1622 = vshrl.u32 %v1621, 7
      %v1623 = vsub.s32 0, %v1622
      %v1624 = vrot.slane %v1619, %v1623
      %v1724 = vunpack.c.l.b16 %v1520
      %v1725 = vunpack.c.l.b16 %v1521
      %v1726 = vunpack.c.l.b16 %v1522
      %v1727 = vunpack.c.l.b16 %v1523
      %v1728 = vunpack.c.l.b16 %v1524
      %v1729 = vunpack.c.l.b16 %v1525
      %v1730 = vunpack.c.l.b16 %v1526
      %v1731 = vunpack.c.l.b16 %v1527
      %v1732 = vunpack.c.l.b16 %v1528
      %v1733 = vunpack.c.l.b16 %v1529
      %v1734 = vunpack.c.l.b16 %v1530
      %v1735 = vunpack.c.l.b16 %v1531
      %v1736 = vunpack.c.l.b16 %v1532
      %v1737 = vunpack.c.l.b16 %v1533
      %v1738 = vunpack.c.l.b16 %v1534
      %v1739 = vunpack.c.l.b16 %v1535
      %v1740 = vunpack.c.l.b16 %v1536
      %v1741 = vunpack.c.l.b16 %v1537
      %v1742 = vunpack.c.l.b16 %v1538
      %v1743 = vunpack.c.l.b16 %v1539
      %v1744 = vunpack.c.l.b16 %v1540
      %v1745 = vunpack.c.l.b16 %v1541
      %v1746 = vunpack.c.l.b16 %v1542
      %v1747 = vunpack.c.l.b16 %v1543
      %v1748 = vunpack.c.l.b16 %v1544
      %v1749 = vunpack.c.l.b16 %v1545
      %v1750 = vunpack.c.l.b16 %v1546
      %v1751 = vunpack.c.l.b16 %v1547
      %v1752 = vunpack.c.l.b16 %v1548
      %v1753 = vunpack.c.l.b16 %v1549
      %v1754 = vunpack.c.l.b16 %v1550
      %v1755 = vunpack.c.l.b16 %v1551
      %v1756 = vunpack.c.l.b16 %v1552
      %v1757 = vunpack.c.l.b16 %v1553
      %v1758 = vunpack.c.l.b16 %v1554
      %v1759 = vunpack.c.l.b16 %v1555
      %v1760 = vunpack.c.l.b16 %v1556
      %v1761 = vunpack.c.l.b16 %v1557
      %v1762 = vunpack.c.l.b16 %v1558
      %v1763 = vunpack.c.l.b16 %v1559
      %v1764 = vunpack.c.l.b16 %v1560
      %v1765 = vunpack.c.l.b16 %v1561
      %v1766 = vunpack.c.l.b16 %v1562
      %v1767 = vunpack.c.l.b16 %v1563
      %v1768 = vunpack.c.l.b16 %v1564
      %v1769 = vunpack.c.l.b16 %v1565
      %v1770 = vunpack.c.l.b16 %v1566
      %v1771 = vunpack.c.l.b16 %v1567
      %v1772 = vunpack.c.l.b16 %v1568
      %v1773 = vunpack.c.l.b16 %v1569
      %v1774 = vunpack.c.l.b16 %v1570
      %v1775 = vunpack.c.l.b16 %v1571
      %v1776 = vunpack.c.l.b16 %v1572
      %v1777 = vunpack.c.l.b16 %v1573
      %v1778 = vunpack.c.l.b16 %v1574
      %v1779 = vunpack.c.l.b16 %v1575
      %v1780 = vunpack.c.l.b16 %v1576
      %v1781 = vunpack.c.l.b16 %v1577
      %v1782 = vunpack.c.l.b16 %v1578
      %v1783 = vunpack.c.l.b16 %v1579
      %v1784 = vunpack.c.l.b16 %v1580
      %v1785 = vunpack.c.l.b16 %v1581
      %v1786 = vunpack.c.l.b16 %v1582
      %v1787 = vunpack.c.l.b16 %v1583
      %v1788 = vunpack.c.l.b16 %v1584
      %v1789 = vunpack.c.l.b16 %v1585
      %v1790 = vunpack.c.l.b16 %v1586
      %v1791 = vunpack.c.l.b16 %v1587
      %v1792 = vunpack.c.l.b16 %v1588
      %v1793 = vunpack.c.l.b16 %v1589
      %v1794 = vunpack.c.l.b16 %v1590
      %v1795 = vunpack.c.l.b16 %v1591
      %v1796 = vunpack.c.l.b16 %v1592
      %v1797 = vunpack.c.l.b16 %v1593
      %v1798 = vunpack.c.l.b16 %v1594
      %v1799 = vunpack.c.l.b16 %v1595
      %v1800 = vunpack.c.l.b16 %v1596
      %v1801 = vunpack.c.l.b16 %v1597
      %v1802 = vunpack.c.l.b16 %v1598
      %v1803 = vunpack.c.l.b16 %v1599
      %v1804 = vunpack.c.l.b16 %v1600
      %v1805 = vunpack.c.l.b16 %v1601
      %v1806 = vunpack.c.l.b16 %v1602
      %v1807 = vunpack.c.l.b16 %v1603
      %v1808 = vunpack.c.l.b16 %v1604
      %v1809 = vunpack.c.l.b16 %v1605
      %v1810 = vunpack.c.l.b16 %v1606
      %v1811 = vunpack.c.l.b16 %v1607
      %v1812 = vunpack.c.l.b16 %v1608
      %v1813 = vunpack.c.l.b16 %v1609
      %v1814 = vunpack.c.l.b16 %v1610
      %v1815 = vunpack.c.l.b16 %v1611
      %v1816 = vunpack.c.l.b16 %v1612
      %v1817 = vunpack.c.l.b16 %v1613
      %v1818 = vunpack.c.l.b16 %v1614
      %v1819 = vunpack.c.l.b16 %v1615
      %v1820 = vunpack.c.l.b16 %v1616
      %v1821 = vunpack.c.l.b16 %v1617
      %v1822 = vpack.c.b16 %v1725, %v1724
      %v1823 = vpack.c.b16 %v1727, %v1726
      %v1824 = vpack.c.b16 %v1729, %v1728
      %v1825 = vpack.c.b16 %v1731, %v1730
      %v1826 = vpack.c.b16 %v1733, %v1732
      %v1827 = vpack.c.b16 %v1735, %v1734
      %v1828 = vpack.c.b16 %v1737, %v1736
      %v1829 = vpack.c.b16 %v1739, %v1738
      %v1830 = vpack.c.b16 %v1741, %v1740
      %v1831 = vpack.c.b16 %v1743, %v1742
      %v1832 = vpack.c.b16 %v1745, %v1744
      %v1833 = vpack.c.b16 %v1747, %v1746
      %v1834 = vpack.c.b16 %v1749, %v1748
      %v1835 = vpack.c.b16 %v1751, %v1750
      %v1836 = vpack.c.b16 %v1753, %v1752
      %v1837 = vpack.c.b16 %v1755, %v1754
      %v1838 = vpack.c.b16 %v1757, %v1756
      %v1839 = vpack.c.b16 %v1759, %v1758
      %v1840 = vpack.c.b16 %v1761, %v1760
      %v1841 = vpack.c.b16 %v1763, %v1762
      %v1842 = vpack.c.b16 %v1765, %v1764
      %v1843 = vpack.c.b16 %v1767, %v1766
      %v1844 = vpack.c.b16 %v1769, %v1768
      %v1845 = vpack.c.b16 %v1771, %v1770
      %v1846 = vpack.c.b16 %v1773, %v1772
      %v1847 = vpack.c.b16 %v1775, %v1774
      %v1848 = vpack.c.b16 %v1777, %v1776
      %v1849 = vpack.c.b16 %v1779, %v1778
      %v1850 = vpack.c.b16 %v1781, %v1780
      %v1851 = vpack.c.b16 %v1783, %v1782
      %v1852 = vpack.c.b16 %v1785, %v1784
      %v1853 = vpack.c.b16 %v1787, %v1786
      %v1854 = vpack.c.b16 %v1789, %v1788
      %v1855 = vpack.c.b16 %v1791, %v1790
      %v1856 = vpack.c.b16 %v1793, %v1792
      %v1857 = vpack.c.b16 %v1795, %v1794
      %v1858 = vpack.c.b16 %v1797, %v1796
      %v1859 = vpack.c.b16 %v1799, %v1798
      %v1860 = vpack.c.b16 %v1801, %v1800
      %v1861 = vpack.c.b16 %v1803, %v1802
      %v1862 = vpack.c.b16 %v1805, %v1804
      %v1863 = vpack.c.b16 %v1807, %v1806
      %v1864 = vpack.c.b16 %v1809, %v1808
      %v1865 = vpack.c.b16 %v1811, %v1810
      %v1866 = vpack.c.b16 %v1813, %v1812
      %v1867 = vpack.c.b16 %v1815, %v1814
      %v1868 = vpack.c.b16 %v1817, %v1816
      %v1869 = vpack.c.b16 %v1819, %v1818
      %v1870 = vpack.c.b16 %v1821, %v1820
      %1920 = vmatprep.subr.bf16.mxu0 0
      %1921 = vmatpush1.bf16.msra.mxu0 %v1822
      %1922 = vmatprep.subr.bf16.mxu0 0
      %1923 = vmatpush1.bf16.msra.mxu0 %v1823
      %1924 = vmatprep.subr.bf16.mxu0 0
      %1925 = vmatpush1.bf16.msra.mxu0 %v1824
      %1926 = vmatprep.subr.bf16.mxu0 0
      %1927 = vmatpush1.bf16.msra.mxu0 %v1825
      %1928 = vmatprep.subr.bf16.mxu0 0
      %1929 = vmatpush1.bf16.msra.mxu0 %v1826
      %1930 = vmatprep.subr.bf16.mxu0 0
      %1931 = vmatpush1.bf16.msra.mxu0 %v1827
      %1932 = vmatprep.subr.bf16.mxu0 0
      %1933 = vmatpush1.bf16.msra.mxu0 %v1828
      %1934 = vmatprep.subr.bf16.mxu0 0
      %1935 = vmatpush1.bf16.msra.mxu0 %v1829
      %1936 = vmatprep.subr.bf16.mxu0 0
      %1937 = vmatpush1.bf16.msra.mxu0 %v1830
      %1938 = vmatprep.subr.bf16.mxu0 0
      %1939 = vmatpush1.bf16.msra.mxu0 %v1831
      %1940 = vmatprep.subr.bf16.mxu0 0
      %1941 = vmatpush1.bf16.msra.mxu0 %v1832
      %1942 = vmatprep.subr.bf16.mxu0 0
      %1943 = vmatpush1.bf16.msra.mxu0 %v1833
      %1944 = vmatprep.subr.bf16.mxu0 0
      %1945 = vmatpush1.bf16.msra.mxu0 %v1834
      %1946 = vmatprep.subr.bf16.mxu0 0
      %1947 = vmatpush1.bf16.msra.mxu0 %v1835
      %1948 = vmatprep.subr.bf16.mxu0 0
      %1949 = vmatpush1.bf16.msra.mxu0 %v1836
      %1950 = vmatprep.subr.bf16.mxu0 0
      %1951 = vmatpush1.bf16.msra.mxu0 %v1837
      %1952 = vmatprep.mubr.bf16.mxu0 %v685
      %1953 = vmatmul.mubr.bf16.gmra.mrb[0].mxu0 %v684
      %v1954 = vpop.f32.mrb[0].mxu0
      %v1955 = vadd.f32 %v1624, %v1954
      %v1956 = vpop.f32.mrb[0].mxu0
      %v1957 = vpop.f32.mrb[0].mxu0
      %v1958 = vadd.f32 %v1624, %v1957
      %v1959 = vpop.f32.mrb[0].mxu0
      %1960 = vmatprep.mubr.bf16.mxu0 %v692
      %1961 = vmatmul.mubr.bf16.gmra.mrb[0].mxu0 %v691
      %v1962 = vpop.f32.mrb[0].mxu0
      %v1963 = vadd.f32 %v1624, %v1962
      %v1964 = vpop.f32.mrb[0].mxu0
      %v1965 = vpop.f32.mrb[0].mxu0
      %v1966 = vadd.f32 %v1624, %v1965
      %v1967 = vpop.f32.mrb[0].mxu0
      %1968 = vmatprep.mubr.bf16.mxu0 %v699
      %1969 = vmatmul.mubr.bf16.gmra.mrb[0].mxu0 %v698
      %v1970 = vpop.f32.mrb[0].mxu0
      %v1971 = vadd.f32 %v1624, %v1970
      %v1972 = vpop.f32.mrb[0].mxu0
      %v1973 = vpop.f32.mrb[0].mxu0
      %v1974 = vadd.f32 %v1624, %v1973
      %v1975 = vpop.f32.mrb[0].mxu0
      %1976 = vmatprep.mubr.bf16.mxu0 %v706
      %1977 = vmatmul.mubr.bf16.gmra.mrb[0].mxu0 %v705
      %v1978 = vpop.f32.mrb[0].mxu0
      %v1979 = vadd.f32 %v1624, %v1978
      %v1980 = vpop.f32.mrb[0].mxu0
      %v1981 = vpop.f32.mrb[0].mxu0
      %v1982 = vadd.f32 %v1624, %v1981
      %v1983 = vpop.f32.mrb[0].mxu0
      %1984 = vmatprep.mubr.bf16.mxu0 %v713
      %1985 = vmatmul.mubr.bf16.gmra.mrb[0].mxu0 %v712
      %v1986 = vpop.f32.mrb[0].mxu0
      %v1987 = vadd.f32 %v1624, %v1986
      %v1988 = vpop.f32.mrb[0].mxu0
      %v1989 = vpop.f32.mrb[0].mxu0
      %v1990 = vadd.f32 %v1624, %v1989
      %v1991 = vpop.f32.mrb[0].mxu0
      %1992 = vmatprep.mubr.bf16.mxu0 %v720
      %1993 = vmatmul.mubr.bf16.gmra.mrb[0].mxu0 %v719
      %v1994 = vpop.f32.mrb[0].mxu0
      %v1995 = vadd.f32 %v1624, %v1994
      %v1996 = vpop.f32.mrb[0].mxu0
      %v1997 = vpop.f32.mrb[0].mxu0
      %v1998 = vadd.f32 %v1624, %v1997
      %v1999 = vpop.f32.mrb[0].mxu0
      %2000 = vmatprep.mubr.bf16.mxu0 %v727
      %2001 = vmatmul.mubr.bf16.gmra.mrb[0].mxu0 %v726
      %v2002 = vpop.f32.mrb[0].mxu0
      %v2003 = vadd.f32 %v1624, %v2002
      %v2004 = vpop.f32.mrb[0].mxu0
      %v2005 = vpop.f32.mrb[0].mxu0
      %v2006 = vadd.f32 %v1624, %v2005
      %v2007 = vpop.f32.mrb[0].mxu0
      %2008 = vmatprep.mubr.bf16.mxu0 %v734
      %2009 = vmatmul.mubr.bf16.gmra.mrb[0].mxu0 %v733
      %v2010 = vpop.f32.mrb[0].mxu0
      %v2011 = vadd.f32 %v1624, %v2010
      %v2012 = vpop.f32.mrb[0].mxu0
      %v2013 = vpop.f32.mrb[0].mxu0
      %v2014 = vadd.f32 %v1624, %v2013
      %v2015 = vpop.f32.mrb[0].mxu0
      %2016 = vdwg.mxu0
      %2017 = vmatprep.subr.bf16.mxu0 0
      %2018 = vmatpush1.bf16.msra.mxu0 %v1838
      %2019 = vmatprep.subr.bf16.mxu0 0
      %2020 = vmatpush1.bf16.msra.mxu0 %v1839
      %2021 = vmatprep.subr.bf16.mxu0 0
      %2022 = vmatpush1.bf16.msra.mxu0 %v1840
      %2023 = vmatprep.subr.bf16.mxu0 0
      %2024 = vmatpush1.bf16.msra.mxu0 %v1841
      %2025 = vmatprep.subr.bf16.mxu0 0
      %2026 = vmatpush1.bf16.msra.mxu0 %v1842
      %2027 = vmatprep.subr.bf16.mxu0 0
      %2028 = vmatpush1.bf16.msra.mxu0 %v1843
      %2029 = vmatprep.subr.bf16.mxu0 0
      %2030 = vmatpush1.bf16.msra.mxu0 %v1844
      %2031 = vmatprep.subr.bf16.mxu0 0
      %2032 = vmatpush1.bf16.msra.mxu0 %v1845
      %2033 = vmatprep.subr.bf16.mxu0 0
      %2034 = vmatpush1.bf16.msra.mxu0 %v1846
      %2035 = vmatprep.subr.bf16.mxu0 0
      %2036 = vmatpush1.bf16.msra.mxu0 %v1847
      %2037 = vmatprep.subr.bf16.mxu0 0
      %2038 = vmatpush1.bf16.msra.mxu0 %v1848
      %2039 = vmatprep.subr.bf16.mxu0 0
      %2040 = vmatpush1.bf16.msra.mxu0 %v1849
      %2041 = vmatprep.subr.bf16.mxu0 0
      %2042 = vmatpush1.bf16.msra.mxu0 %v1850
      %2043 = vmatprep.subr.bf16.mxu0 0
      %2044 = vmatpush1.bf16.msra.mxu0 %v1851
      %2045 = vmatprep.subr.bf16.mxu0 0
      %2046 = vmatpush1.bf16.msra.mxu0 %v1852
      %2047 = vmatprep.subr.bf16.mxu0 0
      %2048 = vmatpush1.bf16.msra.mxu0 %v1853
      %2049 = vmatprep.mubr.bf16.mxu0 %v687
      %2050 = vmatmul.mubr.bf16.gmra.mrb[0].mxu0 %v686
      %v2051 = vpop.f32.mrb[0].mxu0
      %v2052 = vadd.f32 %v1955, %v2051
      %v2053 = vpop.f32.mrb[0].mxu0
      %v2054 = vpop.f32.mrb[0].mxu0
      %v2055 = vadd.f32 %v1958, %v2054
      %v2056 = vpop.f32.mrb[0].mxu0
      %2057 = vmatprep.mubr.bf16.mxu0 %v694
      %2058 = vmatmul.mubr.bf16.gmra.mrb[0].mxu0 %v693
      %v2059 = vpop.f32.mrb[0].mxu0
      %v2060 = vadd.f32 %v1963, %v2059
      %v2061 = vpop.f32.mrb[0].mxu0
      %v2062 = vpop.f32.mrb[0].mxu0
      %v2063 = vadd.f32 %v1966, %v2062
      %v2064 = vpop.f32.mrb[0].mxu0
      %2065 = vmatprep.mubr.bf16.mxu0 %v701
      %2066 = vmatmul.mubr.bf16.gmra.mrb[0].mxu0 %v700
      %v2067 = vpop.f32.mrb[0].mxu0
      %v2068 = vadd.f32 %v1971, %v2067
      %v2069 = vpop.f32.mrb[0].mxu0
      %v2070 = vpop.f32.mrb[0].mxu0
      %v2071 = vadd.f32 %v1974, %v2070
      %v2072 = vpop.f32.mrb[0].mxu0
      %2073 = vmatprep.mubr.bf16.mxu0 %v708
      %2074 = vmatmul.mubr.bf16.gmra.mrb[0].mxu0 %v707
      %v2075 = vpop.f32.mrb[0].mxu0
      %v2076 = vadd.f32 %v1979, %v2075
      %v2077 = vpop.f32.mrb[0].mxu0
      %v2078 = vpop.f32.mrb[0].mxu0
      %v2079 = vadd.f32 %v1982, %v2078
      %v2080 = vpop.f32.mrb[0].mxu0
      %2081 = vmatprep.mubr.bf16.mxu0 %v715
      %2082 = vmatmul.mubr.bf16.gmra.mrb[0].mxu0 %v714
      %v2083 = vpop.f32.mrb[0].mxu0
      %v2084 = vadd.f32 %v1987, %v2083
      %v2085 = vpop.f32.mrb[0].mxu0
      %v2086 = vpop.f32.mrb[0].mxu0
      %v2087 = vadd.f32 %v1990, %v2086
      %v2088 = vpop.f32.mrb[0].mxu0
      %2089 = vmatprep.mubr.bf16.mxu0 %v722
      %2090 = vmatmul.mubr.bf16.gmra.mrb[0].mxu0 %v721
      %v2091 = vpop.f32.mrb[0].mxu0
      %v2092 = vadd.f32 %v1995, %v2091
      %v2093 = vpop.f32.mrb[0].mxu0
      %v2094 = vpop.f32.mrb[0].mxu0
      %v2095 = vadd.f32 %v1998, %v2094
      %v2096 = vpop.f32.mrb[0].mxu0
      %2097 = vmatprep.mubr.bf16.mxu0 %v729
      %2098 = vmatmul.mubr.bf16.gmra.mrb[0].mxu0 %v728
      %v2099 = vpop.f32.mrb[0].mxu0
      %v2100 = vadd.f32 %v2003, %v2099
      %v2101 = vpop.f32.mrb[0].mxu0
      %v2102 = vpop.f32.mrb[0].mxu0
      %v2103 = vadd.f32 %v2006, %v2102
      %v2104 = vpop.f32.mrb[0].mxu0
      %2105 = vmatprep.mubr.bf16.mxu0 %v736
      %2106 = vmatmul.mubr.bf16.gmra.mrb[0].mxu0 %v735
      %v2107 = vpop.f32.mrb[0].mxu0
      %v2108 = vadd.f32 %v2011, %v2107
      %v2109 = vpop.f32.mrb[0].mxu0
      %v2110 = vpop.f32.mrb[0].mxu0
      %v2111 = vadd.f32 %v2014, %v2110
      %v2112 = vpop.f32.mrb[0].mxu0
      %2113 = vdwg.mxu0
      %2114 = vmatprep.subr.bf16.mxu0 0
      %2115 = vmatpush1.bf16.msra.mxu0 %v1854
      %2116 = vmatprep.subr.bf16.mxu0 0
      %2117 = vmatpush1.bf16.msra.mxu0 %v1855
      %2118 = vmatprep.subr.bf16.mxu0 0
      %2119 = vmatpush1.bf16.msra.mxu0 %v1856
      %2120 = vmatprep.subr.bf16.mxu0 0
      %2121 = vmatpush1.bf16.msra.mxu0 %v1857
      %2122 = vmatprep.subr.bf16.mxu0 0
      %2123 = vmatpush1.bf16.msra.mxu0 %v1858
      %2124 = vmatprep.subr.bf16.mxu0 0
      %2125 = vmatpush1.bf16.msra.mxu0 %v1859
      %2126 = vmatprep.subr.bf16.mxu0 0
      %2127 = vmatpush1.bf16.msra.mxu0 %v1860
      %2128 = vmatprep.subr.bf16.mxu0 0
      %2129 = vmatpush1.bf16.msra.mxu0 %v1861
      %2130 = vmatprep.subr.bf16.mxu0 0
      %2131 = vmatpush1.bf16.msra.mxu0 %v1862
      %2132 = vmatprep.subr.bf16.mxu0 0
      %2133 = vmatpush1.bf16.msra.mxu0 %v1863
      %2134 = vmatprep.subr.bf16.mxu0 0
      %2135 = vmatpush1.bf16.msra.mxu0 %v1864
      %2136 = vmatprep.subr.bf16.mxu0 0
      %2137 = vmatpush1.bf16.msra.mxu0 %v1865
      %2138 = vmatprep.subr.bf16.mxu0 0
      %2139 = vmatpush1.bf16.msra.mxu0 %v1866
      %2140 = vmatprep.subr.bf16.mxu0 0
      %2141 = vmatpush1.bf16.msra.mxu0 %v1867
      %2142 = vmatprep.subr.bf16.mxu0 0
      %2143 = vmatpush1.bf16.msra.mxu0 %v1868
      %2144 = vmatprep.subr.bf16.mxu0 0
      %2145 = vmatpush1.bf16.msra.mxu0 %v1869
      %2146 = vmatprep.mubr.bf16.mxu0 %v689
      %2147 = vmatmul.mubr.bf16.gmra.mrb[0].mxu0 %v688
      %v2148 = vpop.f32.mrb[0].mxu0
      %v2149 = vadd.f32 %v2052, %v2148
      %v2150 = vpop.f32.mrb[0].mxu0
      %v2151 = vpop.f32.mrb[0].mxu0
      %v2152 = vadd.f32 %v2055, %v2151
      %v2153 = vpop.f32.mrb[0].mxu0
      %2154 = vmatprep.mubr.bf16.mxu0 %v696
      %2155 = vmatmul.mubr.bf16.gmra.mrb[0].mxu0 %v695
      %v2156 = vpop.f32.mrb[0].mxu0
      %v2157 = vadd.f32 %v2060, %v2156
      %v2158 = vpop.f32.mrb[0].mxu0
      %v2159 = vpop.f32.mrb[0].mxu0
      %v2160 = vadd.f32 %v2063, %v2159
      %v2161 = vpop.f32.mrb[0].mxu0
      %2162 = vmatprep.mubr.bf16.mxu0 %v703
      %2163 = vmatmul.mubr.bf16.gmra.mrb[0].mxu0 %v702
      %v2164 = vpop.f32.mrb[0].mxu0
      %v2165 = vadd.f32 %v2068, %v2164
      %v2166 = vpop.f32.mrb[0].mxu0
      %v2167 = vpop.f32.mrb[0].mxu0
      %v2168 = vadd.f32 %v2071, %v2167
      %v2169 = vpop.f32.mrb[0].mxu0
      %2170 = vmatprep.mubr.bf16.mxu0 %v710
      %2171 = vmatmul.mubr.bf16.gmra.mrb[0].mxu0 %v709
      %v2172 = vpop.f32.mrb[0].mxu0
      %v2173 = vadd.f32 %v2076, %v2172
      %v2174 = vpop.f32.mrb[0].mxu0
      %v2175 = vpop.f32.mrb[0].mxu0
      %v2176 = vadd.f32 %v2079, %v2175
      %v2177 = vpop.f32.mrb[0].mxu0
      %2178 = vmatprep.mubr.bf16.mxu0 %v717
      %2179 = vmatmul.mubr.bf16.gmra.mrb[0].mxu0 %v716
      %v2180 = vpop.f32.mrb[0].mxu0
      %v2181 = vadd.f32 %v2084, %v2180
      %v2182 = vpop.f32.mrb[0].mxu0
      %v2183 = vpop.f32.mrb[0].mxu0
      %v2184 = vadd.f32 %v2087, %v2183
      %v2185 = vpop.f32.mrb[0].mxu0
      %2186 = vmatprep.mubr.bf16.mxu0 %v724
      %2187 = vmatmul.mubr.bf16.gmra.mrb[0].mxu0 %v723
      %v2188 = vpop.f32.mrb[0].mxu0
      %v2189 = vadd.f32 %v2092, %v2188
      %v2190 = vpop.f32.mrb[0].mxu0
      %v2191 = vpop.f32.mrb[0].mxu0
      %v2192 = vadd.f32 %v2095, %v2191
      %v2193 = vpop.f32.mrb[0].mxu0
      %2194 = vmatprep.mubr.bf16.mxu0 %v731
      %2195 = vmatmul.mubr.bf16.gmra.mrb[0].mxu0 %v730
      %v2196 = vpop.f32.mrb[0].mxu0
      %v2197 = vadd.f32 %v2100, %v2196
      %v2198 = vpop.f32.mrb[0].mxu0
      %v2199 = vpop.f32.mrb[0].mxu0
      %v2200 = vadd.f32 %v2103, %v2199
      %v2201 = vpop.f32.mrb[0].mxu0
      %2202 = vmatprep.mubr.bf16.mxu0 %v738
      %2203 = vmatmul.mubr.bf16.gmra.mrb[0].mxu0 %v737
      %v2204 = vpop.f32.mrb[0].mxu0
      %v2205 = vadd.f32 %v2108, %v2204
      %v2206 = vpop.f32.mrb[0].mxu0
      %v2207 = vpop.f32.mrb[0].mxu0
      %v2208 = vadd.f32 %v2111, %v2207
      %v2209 = vpop.f32.mrb[0].mxu0
      %2210 = vdwg.mxu0
      %2211 = vmatprep.subr.bf16.mxu0 0
      %2212 = vmatpush1.bf16.msra.mxu0 %v1870
      %2213 = vmatprep.subr.bf16.mxu0 0
      %2214 = vmatpush1.bf16.msra.mxu0 0
      %2215 = vmatprep.subr.bf16.mxu0 0
      %2216 = vmatpush1.bf16.msra.mxu0 0
      %2217 = vmatprep.subr.bf16.mxu0 0
      %2218 = vmatpush1.bf16.msra.mxu0 0
      %2219 = vmatprep.subr.bf16.mxu0 0
      %2220 = vmatpush1.bf16.msra.mxu0 0
      %2221 = vmatprep.subr.bf16.mxu0 0
      %2222 = vmatpush1.bf16.msra.mxu0 0
      %2223 = vmatprep.subr.bf16.mxu0 0
      %2224 = vmatpush1.bf16.msra.mxu0 0
      %2225 = vmatprep.subr.bf16.mxu0 0
      %2226 = vmatpush1.bf16.msra.mxu0 0
      %2227 = vmatprep.subr.bf16.mxu0 0
      %2228 = vmatpush1.bf16.msra.mxu0 0
      %2229 = vmatprep.subr.bf16.mxu0 0
      %2230 = vmatpush1.bf16.msra.mxu0 0
      %2231 = vmatprep.subr.bf16.mxu0 0
      %2232 = vmatpush1.bf16.msra.mxu0 0
      %2233 = vmatprep.subr.bf16.mxu0 0
      %2234 = vmatpush1.bf16.msra.mxu0 0
      %2235 = vmatprep.subr.bf16.mxu0 0
      %2236 = vmatpush1.bf16.msra.mxu0 0
      %2237 = vmatprep.subr.bf16.mxu0 0
      %2238 = vmatpush1.bf16.msra.mxu0 0
      %2239 = vmatprep.subr.bf16.mxu0 0
      %2240 = vmatpush1.bf16.msra.mxu0 0
      %2241 = vmatprep.subr.bf16.mxu0 0
      %2242 = vmatpush1.bf16.msra.mxu0 0
      %2243 = vmatprep.mubr.bf16.mxu0 0
      %2244 = vmatmul.mubr.bf16.gmra.mrb[0].mxu0 %v1084
      %v2245 = vpop.f32.mrb[0].mxu0
      %v2246 = vadd.f32 %v2149, %v2245
      %v2247 = vpop.f32.mrb[0].mxu0
      %v2248 = vpop.f32.mrb[0].mxu0
      %v2249 = vadd.f32 %v2152, %v2248
      %v2250 = vpop.f32.mrb[0].mxu0
      %2251 = vmatprep.mubr.bf16.mxu0 0
      %2252 = vmatmul.mubr.bf16.gmra.mrb[0].mxu0 %v1087
      %v2253 = vpop.f32.mrb[0].mxu0
      %v2254 = vadd.f32 %v2157, %v2253
      %v2255 = vpop.f32.mrb[0].mxu0
      %v2256 = vpop.f32.mrb[0].mxu0
      %v2257 = vadd.f32 %v2160, %v2256
      %v2258 = vpop.f32.mrb[0].mxu0
      %2259 = vmatprep.mubr.bf16.mxu0 0
      %2260 = vmatmul.mubr.bf16.gmra.mrb[0].mxu0 %v1090
      %v2261 = vpop.f32.mrb[0].mxu0
      %v2262 = vadd.f32 %v2165, %v2261
      %v2263 = vpop.f32.mrb[0].mxu0
      %v2264 = vpop.f32.mrb[0].mxu0
      %v2265 = vadd.f32 %v2168, %v2264
      %v2266 = vpop.f32.mrb[0].mxu0
      %2267 = vmatprep.mubr.bf16.mxu0 0
      %2268 = vmatmul.mubr.bf16.gmra.mrb[0].mxu0 %v1093
      %v2269 = vpop.f32.mrb[0].mxu0
      %v2270 = vadd.f32 %v2173, %v2269
      %v2271 = vpop.f32.mrb[0].mxu0
      %v2272 = vpop.f32.mrb[0].mxu0
      %v2273 = vadd.f32 %v2176, %v2272
      %v2274 = vpop.f32.mrb[0].mxu0
      %2275 = vmatprep.mubr.bf16.mxu0 0
      %2276 = vmatmul.mubr.bf16.gmra.mrb[0].mxu0 %v1096
      %v2277 = vpop.f32.mrb[0].mxu0
      %v2278 = vadd.f32 %v2181, %v2277
      %v2279 = vpop.f32.mrb[0].mxu0
      %v2280 = vpop.f32.mrb[0].mxu0
      %v2281 = vadd.f32 %v2184, %v2280
      %v2282 = vpop.f32.mrb[0].mxu0
      %2283 = vmatprep.mubr.bf16.mxu0 0
      %2284 = vmatmul.mubr.bf16.gmra.mrb[0].mxu0 %v1099
      %v2285 = vpop.f32.mrb[0].mxu0
      %v2286 = vadd.f32 %v2189, %v2285
      %v2287 = vpop.f32.mrb[0].mxu0
      %v2288 = vpop.f32.mrb[0].mxu0
      %v2289 = vadd.f32 %v2192, %v2288
      %v2290 = vpop.f32.mrb[0].mxu0
      %2291 = vmatprep.mubr.bf16.mxu0 0
      %2292 = vmatmul.mubr.bf16.gmra.mrb[0].mxu0 %v1102
      %v2293 = vpop.f32.mrb[0].mxu0
      %v2294 = vadd.f32 %v2197, %v2293
      %v2295 = vpop.f32.mrb[0].mxu0
      %v2296 = vpop.f32.mrb[0].mxu0
      %v2297 = vadd.f32 %v2200, %v2296
      %v2298 = vpop.f32.mrb[0].mxu0
      %2299 = vmatprep.mubr.bf16.mxu0 0
      %2300 = vmatmul.mubr.bf16.gmra.mrb[0].mxu0 %v1105
      %v2301 = vpop.f32.mrb[0].mxu0
      %v2302 = vadd.f32 %v2205, %v2301
      %v2303 = vpop.f32.mrb[0].mxu0
      %v2304 = vpop.f32.mrb[0].mxu0
      %v2305 = vadd.f32 %v2208, %v2304
      %v2306 = vpop.f32.mrb[0].mxu0
      %2307 = vdwg.mxu0
      %v2308 = vmax.f32 %v2246, 0.0
      %v2309 = vmax.f32 %v2249, 0.0
      %v2310 = vmax.f32 %v2254, 0.0
      %v2311 = vmax.f32 %v2257, 0.0
      %v2312 = vmax.f32 %v2262, 0.0
      %v2313 = vmax.f32 %v2265, 0.0
      %v2314 = vmax.f32 %v2270, 0.0
      %v2315 = vmax.f32 %v2273, 0.0
      %v2316 = vmax.f32 %v2278, 0.0
      %v2317 = vmax.f32 %v2281, 0.0
      %v2318 = vmax.f32 %v2286, 0.0
      %v2319 = vmax.f32 %v2289, 0.0
      %v2320 = vmax.f32 %v2294, 0.0
      %v2321 = vmax.f32 %v2297, 0.0
      %v2322 = vmax.f32 %v2302, 0.0
      %v2323 = vmax.f32 %v2305, 0.0
      %v2324 = vadd.f32 %v1495, %v2308
      %v2325 = vadd.f32 %v1496, %v2309
      %v2326 = vadd.f32 %v1497, %v2310
      %v2327 = vadd.f32 %v1498, %v2311
      %v2328 = vadd.f32 %v1499, %v2312
      %v2329 = vadd.f32 %v1500, %v2313
      %v2330 = vadd.f32 %v1501, %v2314
      %v2331 = vadd.f32 %v1502, %v2315
      %v2332 = vadd.f32 %v1503, %v2316
      %v2333 = vadd.f32 %v1504, %v2317
      %v2334 = vadd.f32 %v1505, %v2318
      %v2335 = vadd.f32 %v1506, %v2319
      %v2336 = vadd.f32 %v1507, %v2320
      %v2337 = vadd.f32 %v1508, %v2321
      %v2338 = vadd.f32 %v1509, %v2322
      %v2339 = vadd.f32 %v1510, %v2323
      %v2340 = vpack.c.bf16 %v2325, %v2324
      %v2341 = vpack.c.bf16 %v2327, %v2326
      %v2342 = vpack.c.bf16 %v2329, %v2328
      %v2343 = vpack.c.bf16 %v2331, %v2330
      %v2344 = vpack.c.bf16 %v2333, %v2332
      %v2345 = vpack.c.bf16 %v2335, %v2334
      %v2346 = vpack.c.bf16 %v2337, %v2336
      %v2347 = vpack.c.bf16 %v2339, %v2338
      %s2348 = smul.u32 %s27, 6
      %s2349 = sadd.s32 %s2348, 1
      %s2350 = smul.u32 %s2349, 2
      %s2351 = sld [smem:[#allocation3 + %s2350]]
      %p2352 = scmp.gt.s32.totalorder %s2351, 0
      %s2353 = scalar_select %p2352, %s2351, 0
      %p2354 = scmp.lt.s32.totalorder %s2353, 3
      %s2355 = scalar_select %p2354, %s2353, 3
      %s2356 = smul.u32 %s2355, 4
      %s2357 = smul.addr %s2356, 4
      %s2358 = scalar_lea.vmem %s4, %s2357
      %v2359 = vld [vmem:[%s2358] sm:$0xf]
      %v2360 = vld [vmem:[%s2358 + $0x4] sm:$0xf]
      %v2361 = vld [vmem:[%s2358 + $0x8] sm:$0xf]
      %v2362 = vld [vmem:[%s2358 + $0xc] sm:$0xf]
      %s2363 = scalar_lea.vmem %s5, %s2355
      %v2364 = vld [vmem:[%s2363] sm:$0x1]
      %v2366 = vlaneseq
      %v2367 = vshrl.u32 %v2366, 7
      %v2368 = vsub.s32 0, %v2367
      %v2369 = vrot.slane %v2364, %v2368
      %v2375 = vunpack.c.l.b16 %v2359
      %v2376 = vunpack.c.l.b16 %v2360
      %v2377 = vunpack.c.l.b16 %v2361
      %v2378 = vunpack.c.l.b16 %v2362
      %v2379 = vpack.c.b16 %v2376, %v2375
      %v2380 = vpack.c.b16 %v2378, %v2377
      %vm2383 = vcmask 261120
      %v2385 = vsel %vm2383, %v2340, 0
      %v2388 = vsel %vm2383, %v2341, 0
      %v2391 = vsel %vm2383, %v2342, 0
      %v2394 = vsel %vm2383, %v2343, 0
      %v2397 = vsel %vm2383, %v2344, 0
      %v2400 = vsel %vm2383, %v2345, 0
      %v2403 = vsel %vm2383, %v2346, 0
      %v2406 = vsel %vm2383, %v2347, 0
      %2408 = vmatprep.subr.bf16.mxu0 0
      %2409 = vmatpush1.bf16.msra.mxu0 %v2379
      %2410 = vmatprep.subr.bf16.mxu0 0
      %2411 = vmatpush1.bf16.msra.mxu0 %v2380
      %2412 = vmatprep.subr.bf16.mxu0 0
      %2413 = vmatpush1.bf16.msra.mxu0 0
      %2414 = vmatprep.subr.bf16.mxu0 0
      %2415 = vmatpush1.bf16.msra.mxu0 0
      %2416 = vmatprep.subr.bf16.mxu0 0
      %2417 = vmatpush1.bf16.msra.mxu0 0
      %2418 = vmatprep.subr.bf16.mxu0 0
      %2419 = vmatpush1.bf16.msra.mxu0 0
      %2420 = vmatprep.subr.bf16.mxu0 0
      %2421 = vmatpush1.bf16.msra.mxu0 0
      %2422 = vmatprep.subr.bf16.mxu0 0
      %2423 = vmatpush1.bf16.msra.mxu0 0
      %2424 = vmatprep.subr.bf16.mxu0 0
      %2425 = vmatpush1.bf16.msra.mxu0 0
      %2426 = vmatprep.subr.bf16.mxu0 0
      %2427 = vmatpush1.bf16.msra.mxu0 0
      %2428 = vmatprep.subr.bf16.mxu0 0
      %2429 = vmatpush1.bf16.msra.mxu0 0
      %2430 = vmatprep.subr.bf16.mxu0 0
      %2431 = vmatpush1.bf16.msra.mxu0 0
      %2432 = vmatprep.subr.bf16.mxu0 0
      %2433 = vmatpush1.bf16.msra.mxu0 0
      %2434 = vmatprep.subr.bf16.mxu0 0
      %2435 = vmatpush1.bf16.msra.mxu0 0
      %2436 = vmatprep.subr.bf16.mxu0 0
      %2437 = vmatpush1.bf16.msra.mxu0 0
      %2438 = vmatprep.subr.bf16.mxu0 0
      %2439 = vmatpush1.bf16.msra.mxu0 0
      %2440 = vmatprep.mubr.bf16.mxu0 0
      %2441 = vmatmul.mubr.bf16.gmra.mrb[0].mxu0 %v2385
      %v2442 = vpop.f32.mrb[0].mxu0
      %v2443 = vadd.f32 %v2369, %v2442
      %v2444 = vpop.f32.mrb[0].mxu0
      %v2445 = vpop.f32.mrb[0].mxu0
      %v2446 = vadd.f32 %v2369, %v2445
      %v2447 = vpop.f32.mrb[0].mxu0
      %2448 = vmatprep.mubr.bf16.mxu0 0
      %2449 = vmatmul.mubr.bf16.gmra.mrb[0].mxu0 %v2388
      %v2450 = vpop.f32.mrb[0].mxu0
      %v2451 = vadd.f32 %v2369, %v2450
      %v2452 = vpop.f32.mrb[0].mxu0
      %v2453 = vpop.f32.mrb[0].mxu0
      %v2454 = vadd.f32 %v2369, %v2453
      %v2455 = vpop.f32.mrb[0].mxu0
      %2456 = vmatprep.mubr.bf16.mxu0 0
      %2457 = vmatmul.mubr.bf16.gmra.mrb[0].mxu0 %v2391
      %v2458 = vpop.f32.mrb[0].mxu0
      %v2459 = vadd.f32 %v2369, %v2458
      %v2460 = vpop.f32.mrb[0].mxu0
      %v2461 = vpop.f32.mrb[0].mxu0
      %v2462 = vadd.f32 %v2369, %v2461
      %v2463 = vpop.f32.mrb[0].mxu0
      %2464 = vmatprep.mubr.bf16.mxu0 0
      %2465 = vmatmul.mubr.bf16.gmra.mrb[0].mxu0 %v2394
      %v2466 = vpop.f32.mrb[0].mxu0
      %v2467 = vadd.f32 %v2369, %v2466
      %v2468 = vpop.f32.mrb[0].mxu0
      %v2469 = vpop.f32.mrb[0].mxu0
      %v2470 = vadd.f32 %v2369, %v2469
      %v2471 = vpop.f32.mrb[0].mxu0
      %2472 = vmatprep.mubr.bf16.mxu0 0
      %2473 = vmatmul.mubr.bf16.gmra.mrb[0].mxu0 %v2397
      %v2474 = vpop.f32.mrb[0].mxu0
      %v2475 = vadd.f32 %v2369, %v2474
      %v2476 = vpop.f32.mrb[0].mxu0
      %v2477 = vpop.f32.mrb[0].mxu0
      %v2478 = vadd.f32 %v2369, %v2477
      %v2479 = vpop.f32.mrb[0].mxu0
      %2480 = vmatprep.mubr.bf16.mxu0 0
      %2481 = vmatmul.mubr.bf16.gmra.mrb[0].mxu0 %v2400
      %v2482 = vpop.f32.mrb[0].mxu0
      %v2483 = vadd.f32 %v2369, %v2482
      %v2484 = vpop.f32.mrb[0].mxu0
      %v2485 = vpop.f32.mrb[0].mxu0
      %v2486 = vadd.f32 %v2369, %v2485
      %v2487 = vpop.f32.mrb[0].mxu0
      %2488 = vmatprep.mubr.bf16.mxu0 0
      %2489 = vmatmul.mubr.bf16.gmra.mrb[0].mxu0 %v2403
      %v2490 = vpop.f32.mrb[0].mxu0
      %v2491 = vadd.f32 %v2369, %v2490
      %v2492 = vpop.f32.mrb[0].mxu0
      %v2493 = vpop.f32.mrb[0].mxu0
      %v2494 = vadd.f32 %v2369, %v2493
      %v2495 = vpop.f32.mrb[0].mxu0
      %2496 = vmatprep.mubr.bf16.mxu0 0
      %2497 = vmatmul.mubr.bf16.gmra.mrb[0].mxu0 %v2406
      %v2498 = vpop.f32.mrb[0].mxu0
      %v2499 = vadd.f32 %v2369, %v2498
      %v2500 = vpop.f32.mrb[0].mxu0
      %v2501 = vpop.f32.mrb[0].mxu0
      %v2502 = vadd.f32 %v2369, %v2501
      %v2503 = vpop.f32.mrb[0].mxu0
      %2504 = vdwg.mxu0
      %v2505 = vmax.f32 %v2443, 0.0
      %v2506 = vmax.f32 %v2446, 0.0
      %v2507 = vmax.f32 %v2451, 0.0
      %v2508 = vmax.f32 %v2454, 0.0
      %v2509 = vmax.f32 %v2459, 0.0
      %v2510 = vmax.f32 %v2462, 0.0
      %v2511 = vmax.f32 %v2467, 0.0
      %v2512 = vmax.f32 %v2470, 0.0
      %v2513 = vmax.f32 %v2475, 0.0
      %v2514 = vmax.f32 %v2478, 0.0
      %v2515 = vmax.f32 %v2483, 0.0
      %v2516 = vmax.f32 %v2486, 0.0
      %v2517 = vmax.f32 %v2491, 0.0
      %v2518 = vmax.f32 %v2494, 0.0
      %v2519 = vmax.f32 %v2499, 0.0
      %v2520 = vmax.f32 %v2502, 0.0
      %s2521 = sadd.s32 %s2350, 1
      %s2522 = sld [smem:[#allocation3 + %s2521]]
      %p2523 = scmp.gt.s32.totalorder %s2522, 0
      %s2524 = scalar_select %p2523, %s2522, 0
      %p2525 = scmp.lt.s32.totalorder %s2524, 3
      %s2526 = scalar_select %p2525, %s2524, 3
      %s2527 = smul.u32 %s2526, 4
      %s2528 = smul.addr %s2527, 4
      %s2529 = scalar_lea.vmem %s4, %s2528
      %v2530 = vld [vmem:[%s2529] sm:$0xf]
      %v2531 = vld [vmem:[%s2529 + $0x4] sm:$0xf]
      %v2532 = vld [vmem:[%s2529 + $0x8] sm:$0xf]
      %v2533 = vld [vmem:[%s2529 + $0xc] sm:$0xf]
      %s2534 = scalar_lea.vmem %s5, %s2526
      %v2535 = vld [vmem:[%s2534] sm:$0x1]
      %v2537 = vlaneseq
      %v2538 = vshrl.u32 %v2537, 7
      %v2539 = vsub.s32 0, %v2538
      %v2540 = vrot.slane %v2535, %v2539
      %v2546 = vunpack.c.l.b16 %v2530
      %v2547 = vunpack.c.l.b16 %v2531
      %v2548 = vunpack.c.l.b16 %v2532
      %v2549 = vunpack.c.l.b16 %v2533
      %v2550 = vpack.c.b16 %v2547, %v2546
      %v2551 = vpack.c.b16 %v2549, %v2548
      %2554 = vmatprep.subr.bf16.mxu0 0
      %2555 = vmatpush1.bf16.msra.mxu0 %v2550
      %2556 = vmatprep.subr.bf16.mxu0 0
      %2557 = vmatpush1.bf16.msra.mxu0 %v2551
      %2558 = vmatprep.subr.bf16.mxu0 0
      %2559 = vmatpush1.bf16.msra.mxu0 0
      %2560 = vmatprep.subr.bf16.mxu0 0
      %2561 = vmatpush1.bf16.msra.mxu0 0
      %2562 = vmatprep.subr.bf16.mxu0 0
      %2563 = vmatpush1.bf16.msra.mxu0 0
      %2564 = vmatprep.subr.bf16.mxu0 0
      %2565 = vmatpush1.bf16.msra.mxu0 0
      %2566 = vmatprep.subr.bf16.mxu0 0
      %2567 = vmatpush1.bf16.msra.mxu0 0
      %2568 = vmatprep.subr.bf16.mxu0 0
      %2569 = vmatpush1.bf16.msra.mxu0 0
      %2570 = vmatprep.subr.bf16.mxu0 0
      %2571 = vmatpush1.bf16.msra.mxu0 0
      %2572 = vmatprep.subr.bf16.mxu0 0
      %2573 = vmatpush1.bf16.msra.mxu0 0
      %2574 = vmatprep.subr.bf16.mxu0 0
      %2575 = vmatpush1.bf16.msra.mxu0 0
      %2576 = vmatprep.subr.bf16.mxu0 0
      %2577 = vmatpush1.bf16.msra.mxu0 0
      %2578 = vmatprep.subr.bf16.mxu0 0
      %2579 = vmatpush1.bf16.msra.mxu0 0
      %2580 = vmatprep.subr.bf16.mxu0 0
      %2581 = vmatpush1.bf16.msra.mxu0 0
      %2582 = vmatprep.subr.bf16.mxu0 0
      %2583 = vmatpush1.bf16.msra.mxu0 0
      %2584 = vmatprep.subr.bf16.mxu0 0
      %2585 = vmatpush1.bf16.msra.mxu0 0
      %2586 = vmatprep.mubr.bf16.mxu0 0
      %2587 = vmatmul.mubr.bf16.gmra.mrb[0].mxu0 %v2385
      %v2588 = vpop.f32.mrb[0].mxu0
      %v2589 = vadd.f32 %v2540, %v2588
      %v2590 = vpop.f32.mrb[0].mxu0
      %v2591 = vpop.f32.mrb[0].mxu0
      %v2592 = vadd.f32 %v2540, %v2591
      %v2593 = vpop.f32.mrb[0].mxu0
      %2594 = vmatprep.mubr.bf16.mxu0 0
      %2595 = vmatmul.mubr.bf16.gmra.mrb[0].mxu0 %v2388
      %v2596 = vpop.f32.mrb[0].mxu0
      %v2597 = vadd.f32 %v2540, %v2596
      %v2598 = vpop.f32.mrb[0].mxu0
      %v2599 = vpop.f32.mrb[0].mxu0
      %v2600 = vadd.f32 %v2540, %v2599
      %v2601 = vpop.f32.mrb[0].mxu0
      %2602 = vmatprep.mubr.bf16.mxu0 0
      %2603 = vmatmul.mubr.bf16.gmra.mrb[0].mxu0 %v2391
      %v2604 = vpop.f32.mrb[0].mxu0
      %v2605 = vadd.f32 %v2540, %v2604
      %v2606 = vpop.f32.mrb[0].mxu0
      %v2607 = vpop.f32.mrb[0].mxu0
      %v2608 = vadd.f32 %v2540, %v2607
      %v2609 = vpop.f32.mrb[0].mxu0
      %2610 = vmatprep.mubr.bf16.mxu0 0
      %2611 = vmatmul.mubr.bf16.gmra.mrb[0].mxu0 %v2394
      %v2612 = vpop.f32.mrb[0].mxu0
      %v2613 = vadd.f32 %v2540, %v2612
      %v2614 = vpop.f32.mrb[0].mxu0
      %v2615 = vpop.f32.mrb[0].mxu0
      %v2616 = vadd.f32 %v2540, %v2615
      %v2617 = vpop.f32.mrb[0].mxu0
      %2618 = vmatprep.mubr.bf16.mxu0 0
      %2619 = vmatmul.mubr.bf16.gmra.mrb[0].mxu0 %v2397
      %v2620 = vpop.f32.mrb[0].mxu0
      %v2621 = vadd.f32 %v2540, %v2620
      %v2622 = vpop.f32.mrb[0].mxu0
      %v2623 = vpop.f32.mrb[0].mxu0
      %v2624 = vadd.f32 %v2540, %v2623
      %v2625 = vpop.f32.mrb[0].mxu0
      %2626 = vmatprep.mubr.bf16.mxu0 0
      %2627 = vmatmul.mubr.bf16.gmra.mrb[0].mxu0 %v2400
      %v2628 = vpop.f32.mrb[0].mxu0
      %v2629 = vadd.f32 %v2540, %v2628
      %v2630 = vpop.f32.mrb[0].mxu0
      %v2631 = vpop.f32.mrb[0].mxu0
      %v2632 = vadd.f32 %v2540, %v2631
      %v2633 = vpop.f32.mrb[0].mxu0
      %2634 = vmatprep.mubr.bf16.mxu0 0
      %2635 = vmatmul.mubr.bf16.gmra.mrb[0].mxu0 %v2403
      %v2636 = vpop.f32.mrb[0].mxu0
      %v2637 = vadd.f32 %v2540, %v2636
      %v2638 = vpop.f32.mrb[0].mxu0
      %v2639 = vpop.f32.mrb[0].mxu0
      %v2640 = vadd.f32 %v2540, %v2639
      %v2641 = vpop.f32.mrb[0].mxu0
      %2642 = vmatprep.mubr.bf16.mxu0 0
      %2643 = vmatmul.mubr.bf16.gmra.mrb[0].mxu0 %v2406
      %v2644 = vpop.f32.mrb[0].mxu0
      %v2645 = vadd.f32 %v2540, %v2644
      %v2646 = vpop.f32.mrb[0].mxu0
      %v2647 = vpop.f32.mrb[0].mxu0
      %v2648 = vadd.f32 %v2540, %v2647
      %v2649 = vpop.f32.mrb[0].mxu0
      %2650 = vdwg.mxu0
      %v2651 = vmax.f32 %v2589, 0.0
      %v2652 = vmax.f32 %v2592, 0.0
      %v2653 = vmax.f32 %v2597, 0.0
      %v2654 = vmax.f32 %v2600, 0.0
      %v2655 = vmax.f32 %v2605, 0.0
      %v2656 = vmax.f32 %v2608, 0.0
      %v2657 = vmax.f32 %v2613, 0.0
      %v2658 = vmax.f32 %v2616, 0.0
      %v2659 = vmax.f32 %v2621, 0.0
      %v2660 = vmax.f32 %v2624, 0.0
      %v2661 = vmax.f32 %v2629, 0.0
      %v2662 = vmax.f32 %v2632, 0.0
      %v2663 = vmax.f32 %v2637, 0.0
      %v2664 = vmax.f32 %v2640, 0.0
      %v2665 = vmax.f32 %v2645, 0.0
      %v2666 = vmax.f32 %v2648, 0.0
      %v2667 = vadd.f32 %v2505, %v2651
      %v2668 = vadd.f32 %v2506, %v2652
      %v2669 = vadd.f32 %v2507, %v2653
      %v2670 = vadd.f32 %v2508, %v2654
      %v2671 = vadd.f32 %v2509, %v2655
      %v2672 = vadd.f32 %v2510, %v2656
      %v2673 = vadd.f32 %v2511, %v2657
      %v2674 = vadd.f32 %v2512, %v2658
      %v2675 = vadd.f32 %v2513, %v2659
      %v2676 = vadd.f32 %v2514, %v2660
      %v2677 = vadd.f32 %v2515, %v2661
      %v2678 = vadd.f32 %v2516, %v2662
      %v2679 = vadd.f32 %v2517, %v2663
      %v2680 = vadd.f32 %v2518, %v2664
      %v2681 = vadd.f32 %v2519, %v2665
      %v2682 = vadd.f32 %v2520, %v2666
      %v2683 = vpack.c.bf16 %v2668, %v2667
      %v2684 = vpack.c.bf16 %v2670, %v2669
      %v2685 = vpack.c.bf16 %v2672, %v2671
      %v2686 = vpack.c.bf16 %v2674, %v2673
      %v2687 = vpack.c.bf16 %v2676, %v2675
      %v2688 = vpack.c.bf16 %v2678, %v2677
      %v2689 = vpack.c.bf16 %v2680, %v2679
      %v2690 = vpack.c.bf16 %v2682, %v2681
      %s2691 = sadd.s32 %s2348, 2
      %s2692 = smul.u32 %s2691, 2
      %s2693 = sld [smem:[#allocation3 + %s2692]]
      %p2694 = scmp.gt.s32.totalorder %s2693, 0
      %s2695 = scalar_select %p2694, %s2693, 0
      %p2696 = scmp.lt.s32.totalorder %s2695, 3
      %s2697 = scalar_select %p2696, %s2695, 3
      %s2698 = smul.u32 %s2697, 4
      %s2699 = smul.addr %s2698, 4
      %s2700 = scalar_lea.vmem %s6, %s2699
      %v2701 = vld [vmem:[%s2700] sm:$0xf]
      %v2702 = vld [vmem:[%s2700 + $0x4] sm:$0xf]
      %v2703 = vld [vmem:[%s2700 + $0x8] sm:$0xf]
      %v2704 = vld [vmem:[%s2700 + $0xc] sm:$0xf]
      %s2705 = scalar_lea.vmem %s7, %s2697
      %v2706 = vld [vmem:[%s2705] sm:$0x1]
      %v2708 = vlaneseq
      %v2709 = vshrl.u32 %v2708, 7
      %v2710 = vsub.s32 0, %v2709
      %v2711 = vrot.slane %v2706, %v2710
      %v2717 = vunpack.c.l.b16 %v2701
      %v2718 = vunpack.c.l.b16 %v2702
      %v2719 = vunpack.c.l.b16 %v2703
      %v2720 = vunpack.c.l.b16 %v2704
      %v2721 = vpack.c.b16 %v2718, %v2717
      %v2722 = vpack.c.b16 %v2720, %v2719
      %v2726 = vsel %vm2383, %v2683, 0
      %v2729 = vsel %vm2383, %v2684, 0
      %v2732 = vsel %vm2383, %v2685, 0
      %v2735 = vsel %vm2383, %v2686, 0
      %v2738 = vsel %vm2383, %v2687, 0
      %v2741 = vsel %vm2383, %v2688, 0
      %v2744 = vsel %vm2383, %v2689, 0
      %v2747 = vsel %vm2383, %v2690, 0
      %2749 = vmatprep.subr.bf16.mxu0 0
      %2750 = vmatpush1.bf16.msra.mxu0 %v2721
      %2751 = vmatprep.subr.bf16.mxu0 0
      %2752 = vmatpush1.bf16.msra.mxu0 %v2722
      %2753 = vmatprep.subr.bf16.mxu0 0
      %2754 = vmatpush1.bf16.msra.mxu0 0
      %2755 = vmatprep.subr.bf16.mxu0 0
      %2756 = vmatpush1.bf16.msra.mxu0 0
      %2757 = vmatprep.subr.bf16.mxu0 0
      %2758 = vmatpush1.bf16.msra.mxu0 0
      %2759 = vmatprep.subr.bf16.mxu0 0
      %2760 = vmatpush1.bf16.msra.mxu0 0
      %2761 = vmatprep.subr.bf16.mxu0 0
      %2762 = vmatpush1.bf16.msra.mxu0 0
      %2763 = vmatprep.subr.bf16.mxu0 0
      %2764 = vmatpush1.bf16.msra.mxu0 0
      %2765 = vmatprep.subr.bf16.mxu0 0
      %2766 = vmatpush1.bf16.msra.mxu0 0
      %2767 = vmatprep.subr.bf16.mxu0 0
      %2768 = vmatpush1.bf16.msra.mxu0 0
      %2769 = vmatprep.subr.bf16.mxu0 0
      %2770 = vmatpush1.bf16.msra.mxu0 0
      %2771 = vmatprep.subr.bf16.mxu0 0
      %2772 = vmatpush1.bf16.msra.mxu0 0
      %2773 = vmatprep.subr.bf16.mxu0 0
      %2774 = vmatpush1.bf16.msra.mxu0 0
      %2775 = vmatprep.subr.bf16.mxu0 0
      %2776 = vmatpush1.bf16.msra.mxu0 0
      %2777 = vmatprep.subr.bf16.mxu0 0
      %2778 = vmatpush1.bf16.msra.mxu0 0
      %2779 = vmatprep.subr.bf16.mxu0 0
      %2780 = vmatpush1.bf16.msra.mxu0 0
      %2781 = vmatprep.mubr.bf16.mxu0 0
      %2782 = vmatmul.mubr.bf16.gmra.mrb[0].mxu0 %v2726
      %v2783 = vpop.f32.mrb[0].mxu0
      %v2784 = vadd.f32 %v2711, %v2783
      %v2785 = vpop.f32.mrb[0].mxu0
      %v2786 = vpop.f32.mrb[0].mxu0
      %v2787 = vadd.f32 %v2711, %v2786
      %v2788 = vpop.f32.mrb[0].mxu0
      %2789 = vmatprep.mubr.bf16.mxu0 0
      %2790 = vmatmul.mubr.bf16.gmra.mrb[0].mxu0 %v2729
      %v2791 = vpop.f32.mrb[0].mxu0
      %v2792 = vadd.f32 %v2711, %v2791
      %v2793 = vpop.f32.mrb[0].mxu0
      %v2794 = vpop.f32.mrb[0].mxu0
      %v2795 = vadd.f32 %v2711, %v2794
      %v2796 = vpop.f32.mrb[0].mxu0
      %2797 = vmatprep.mubr.bf16.mxu0 0
      %2798 = vmatmul.mubr.bf16.gmra.mrb[0].mxu0 %v2732
      %v2799 = vpop.f32.mrb[0].mxu0
      %v2800 = vadd.f32 %v2711, %v2799
      %v2801 = vpop.f32.mrb[0].mxu0
      %v2802 = vpop.f32.mrb[0].mxu0
      %v2803 = vadd.f32 %v2711, %v2802
      %v2804 = vpop.f32.mrb[0].mxu0
      %2805 = vmatprep.mubr.bf16.mxu0 0
      %2806 = vmatmul.mubr.bf16.gmra.mrb[0].mxu0 %v2735
      %v2807 = vpop.f32.mrb[0].mxu0
      %v2808 = vadd.f32 %v2711, %v2807
      %v2809 = vpop.f32.mrb[0].mxu0
      %v2810 = vpop.f32.mrb[0].mxu0
      %v2811 = vadd.f32 %v2711, %v2810
      %v2812 = vpop.f32.mrb[0].mxu0
      %2813 = vmatprep.mubr.bf16.mxu0 0
      %2814 = vmatmul.mubr.bf16.gmra.mrb[0].mxu0 %v2738
      %v2815 = vpop.f32.mrb[0].mxu0
      %v2816 = vadd.f32 %v2711, %v2815
      %v2817 = vpop.f32.mrb[0].mxu0
      %v2818 = vpop.f32.mrb[0].mxu0
      %v2819 = vadd.f32 %v2711, %v2818
      %v2820 = vpop.f32.mrb[0].mxu0
      %2821 = vmatprep.mubr.bf16.mxu0 0
      %2822 = vmatmul.mubr.bf16.gmra.mrb[0].mxu0 %v2741
      %v2823 = vpop.f32.mrb[0].mxu0
      %v2824 = vadd.f32 %v2711, %v2823
      %v2825 = vpop.f32.mrb[0].mxu0
      %v2826 = vpop.f32.mrb[0].mxu0
      %v2827 = vadd.f32 %v2711, %v2826
      %v2828 = vpop.f32.mrb[0].mxu0
      %2829 = vmatprep.mubr.bf16.mxu0 0
      %2830 = vmatmul.mubr.bf16.gmra.mrb[0].mxu0 %v2744
      %v2831 = vpop.f32.mrb[0].mxu0
      %v2832 = vadd.f32 %v2711, %v2831
      %v2833 = vpop.f32.mrb[0].mxu0
      %v2834 = vpop.f32.mrb[0].mxu0
      %v2835 = vadd.f32 %v2711, %v2834
      %v2836 = vpop.f32.mrb[0].mxu0
      %2837 = vmatprep.mubr.bf16.mxu0 0
      %2838 = vmatmul.mubr.bf16.gmra.mrb[0].mxu0 %v2747
      %v2839 = vpop.f32.mrb[0].mxu0
      %v2840 = vadd.f32 %v2711, %v2839
      %v2841 = vpop.f32.mrb[0].mxu0
      %v2842 = vpop.f32.mrb[0].mxu0
      %v2843 = vadd.f32 %v2711, %v2842
      %v2844 = vpop.f32.mrb[0].mxu0
      %2845 = vdwg.mxu0
      %v2846 = vmax.f32 %v2784, 0.0
      %v2847 = vmax.f32 %v2787, 0.0
      %v2848 = vmax.f32 %v2792, 0.0
      %v2849 = vmax.f32 %v2795, 0.0
      %v2850 = vmax.f32 %v2800, 0.0
      %v2851 = vmax.f32 %v2803, 0.0
      %v2852 = vmax.f32 %v2808, 0.0
      %v2853 = vmax.f32 %v2811, 0.0
      %v2854 = vmax.f32 %v2816, 0.0
      %v2855 = vmax.f32 %v2819, 0.0
      %v2856 = vmax.f32 %v2824, 0.0
      %v2857 = vmax.f32 %v2827, 0.0
      %v2858 = vmax.f32 %v2832, 0.0
      %v2859 = vmax.f32 %v2835, 0.0
      %v2860 = vmax.f32 %v2840, 0.0
      %v2861 = vmax.f32 %v2843, 0.0
      %s2862 = sadd.s32 %s2692, 1
      %s2863 = sld [smem:[#allocation3 + %s2862]]
      %p2864 = scmp.gt.s32.totalorder %s2863, 0
      %s2865 = scalar_select %p2864, %s2863, 0
      %p2866 = scmp.lt.s32.totalorder %s2865, 3
      %s2867 = scalar_select %p2866, %s2865, 3
      %s2868 = smul.u32 %s2867, 4
      %s2869 = smul.addr %s2868, 4
      %s2870 = scalar_lea.vmem %s6, %s2869
      %v2871 = vld [vmem:[%s2870] sm:$0xf]
      %v2872 = vld [vmem:[%s2870 + $0x4] sm:$0xf]
      %v2873 = vld [vmem:[%s2870 + $0x8] sm:$0xf]
      %v2874 = vld [vmem:[%s2870 + $0xc] sm:$0xf]
      %s2875 = scalar_lea.vmem %s7, %s2867
      %v2876 = vld [vmem:[%s2875] sm:$0x1]
      %v2878 = vlaneseq
      %v2879 = vshrl.u32 %v2878, 7
      %v2880 = vsub.s32 0, %v2879
      %v2881 = vrot.slane %v2876, %v2880
      %v2887 = vunpack.c.l.b16 %v2871
      %v2888 = vunpack.c.l.b16 %v2872
      %v2889 = vunpack.c.l.b16 %v2873
      %v2890 = vunpack.c.l.b16 %v2874
      %v2891 = vpack.c.b16 %v2888, %v2887
      %v2892 = vpack.c.b16 %v2890, %v2889
      %2895 = vmatprep.subr.bf16.mxu0 0
      %2896 = vmatpush1.bf16.msra.mxu0 %v2891
      %2897 = vmatprep.subr.bf16.mxu0 0
      %2898 = vmatpush1.bf16.msra.mxu0 %v2892
      %2899 = vmatprep.subr.bf16.mxu0 0
      %2900 = vmatpush1.bf16.msra.mxu0 0
      %2901 = vmatprep.subr.bf16.mxu0 0
      %2902 = vmatpush1.bf16.msra.mxu0 0
      %2903 = vmatprep.subr.bf16.mxu0 0
      %2904 = vmatpush1.bf16.msra.mxu0 0
      %2905 = vmatprep.subr.bf16.mxu0 0
      %2906 = vmatpush1.bf16.msra.mxu0 0
      %2907 = vmatprep.subr.bf16.mxu0 0
      %2908 = vmatpush1.bf16.msra.mxu0 0
      %2909 = vmatprep.subr.bf16.mxu0 0
      %2910 = vmatpush1.bf16.msra.mxu0 0
      %2911 = vmatprep.subr.bf16.mxu0 0
      %2912 = vmatpush1.bf16.msra.mxu0 0
      %2913 = vmatprep.subr.bf16.mxu0 0
      %2914 = vmatpush1.bf16.msra.mxu0 0
      %2915 = vmatprep.subr.bf16.mxu0 0
      %2916 = vmatpush1.bf16.msra.mxu0 0
      %2917 = vmatprep.subr.bf16.mxu0 0
      %2918 = vmatpush1.bf16.msra.mxu0 0
      %2919 = vmatprep.subr.bf16.mxu0 0
      %2920 = vmatpush1.bf16.msra.mxu0 0
      %2921 = vmatprep.subr.bf16.mxu0 0
      %2922 = vmatpush1.bf16.msra.mxu0 0
      %2923 = vmatprep.subr.bf16.mxu0 0
      %2924 = vmatpush1.bf16.msra.mxu0 0
      %2925 = vmatprep.subr.bf16.mxu0 0
      %2926 = vmatpush1.bf16.msra.mxu0 0
      %2927 = vmatprep.mubr.bf16.mxu0 0
      %2928 = vmatmul.mubr.bf16.gmra.mrb[0].mxu0 %v2726
      %v2929 = vpop.f32.mrb[0].mxu0
      %v2930 = vadd.f32 %v2881, %v2929
      %v2931 = vpop.f32.mrb[0].mxu0
      %v2932 = vpop.f32.mrb[0].mxu0
      %v2933 = vadd.f32 %v2881, %v2932
      %v2934 = vpop.f32.mrb[0].mxu0
      %2935 = vmatprep.mubr.bf16.mxu0 0
      %2936 = vmatmul.mubr.bf16.gmra.mrb[0].mxu0 %v2729
      %v2937 = vpop.f32.mrb[0].mxu0
      %v2938 = vadd.f32 %v2881, %v2937
      %v2939 = vpop.f32.mrb[0].mxu0
      %v2940 = vpop.f32.mrb[0].mxu0
      %v2941 = vadd.f32 %v2881, %v2940
      %v2942 = vpop.f32.mrb[0].mxu0
      %2943 = vmatprep.mubr.bf16.mxu0 0
      %2944 = vmatmul.mubr.bf16.gmra.mrb[0].mxu0 %v2732
      %v2945 = vpop.f32.mrb[0].mxu0
      %v2946 = vadd.f32 %v2881, %v2945
      %v2947 = vpop.f32.mrb[0].mxu0
      %v2948 = vpop.f32.mrb[0].mxu0
      %v2949 = vadd.f32 %v2881, %v2948
      %v2950 = vpop.f32.mrb[0].mxu0
      %2951 = vmatprep.mubr.bf16.mxu0 0
      %2952 = vmatmul.mubr.bf16.gmra.mrb[0].mxu0 %v2735
      %v2953 = vpop.f32.mrb[0].mxu0
      %v2954 = vadd.f32 %v2881, %v2953
      %v2955 = vpop.f32.mrb[0].mxu0
      %v2956 = vpop.f32.mrb[0].mxu0
      %v2957 = vadd.f32 %v2881, %v2956
      %v2958 = vpop.f32.mrb[0].mxu0
      %2959 = vmatprep.mubr.bf16.mxu0 0
      %2960 = vmatmul.mubr.bf16.gmra.mrb[0].mxu0 %v2738
      %v2961 = vpop.f32.mrb[0].mxu0
      %v2962 = vadd.f32 %v2881, %v2961
      %v2963 = vpop.f32.mrb[0].mxu0
      %v2964 = vpop.f32.mrb[0].mxu0
      %v2965 = vadd.f32 %v2881, %v2964
      %v2966 = vpop.f32.mrb[0].mxu0
      %2967 = vmatprep.mubr.bf16.mxu0 0
      %2968 = vmatmul.mubr.bf16.gmra.mrb[0].mxu0 %v2741
      %v2969 = vpop.f32.mrb[0].mxu0
      %v2970 = vadd.f32 %v2881, %v2969
      %v2971 = vpop.f32.mrb[0].mxu0
      %v2972 = vpop.f32.mrb[0].mxu0
      %v2973 = vadd.f32 %v2881, %v2972
      %v2974 = vpop.f32.mrb[0].mxu0
      %2975 = vmatprep.mubr.bf16.mxu0 0
      %2976 = vmatmul.mubr.bf16.gmra.mrb[0].mxu0 %v2744
      %v2977 = vpop.f32.mrb[0].mxu0
      %v2978 = vadd.f32 %v2881, %v2977
      %v2979 = vpop.f32.mrb[0].mxu0
      %v2980 = vpop.f32.mrb[0].mxu0
      %v2981 = vadd.f32 %v2881, %v2980
      %v2982 = vpop.f32.mrb[0].mxu0
      %2983 = vmatprep.mubr.bf16.mxu0 0
      %2984 = vmatmul.mubr.bf16.gmra.mrb[0].mxu0 %v2747
      %v2985 = vpop.f32.mrb[0].mxu0
      %v2986 = vadd.f32 %v2881, %v2985
      %v2987 = vpop.f32.mrb[0].mxu0
      %v2988 = vpop.f32.mrb[0].mxu0
      %v2989 = vadd.f32 %v2881, %v2988
      %v2990 = vpop.f32.mrb[0].mxu0
      %2991 = vdwg.mxu0
      %v2992 = vmax.f32 %v2930, 0.0
      %v2993 = vmax.f32 %v2933, 0.0
      %v2994 = vmax.f32 %v2938, 0.0
      %v2995 = vmax.f32 %v2941, 0.0
      %v2996 = vmax.f32 %v2946, 0.0
      %v2997 = vmax.f32 %v2949, 0.0
      %v2998 = vmax.f32 %v2954, 0.0
      %v2999 = vmax.f32 %v2957, 0.0
      %v3000 = vmax.f32 %v2962, 0.0
      %v3001 = vmax.f32 %v2965, 0.0
      %v3002 = vmax.f32 %v2970, 0.0
      %v3003 = vmax.f32 %v2973, 0.0
      %v3004 = vmax.f32 %v2978, 0.0
      %v3005 = vmax.f32 %v2981, 0.0
      %v3006 = vmax.f32 %v2986, 0.0
      %v3007 = vmax.f32 %v2989, 0.0
      %v3008 = vadd.f32 %v2846, %v2992
      %v3009 = vadd.f32 %v2847, %v2993
      %v3010 = vadd.f32 %v2848, %v2994
      %v3011 = vadd.f32 %v2849, %v2995
      %v3012 = vadd.f32 %v2850, %v2996
      %v3013 = vadd.f32 %v2851, %v2997
      %v3014 = vadd.f32 %v2852, %v2998
      %v3015 = vadd.f32 %v2853, %v2999
      %v3016 = vadd.f32 %v2854, %v3000
      %v3017 = vadd.f32 %v2855, %v3001
      %v3018 = vadd.f32 %v2856, %v3002
      %v3019 = vadd.f32 %v2857, %v3003
      %v3020 = vadd.f32 %v2858, %v3004
      %v3021 = vadd.f32 %v2859, %v3005
      %v3022 = vadd.f32 %v2860, %v3006
      %v3023 = vadd.f32 %v2861, %v3007
      %v3024 = vpack.c.bf16 %v3009, %v3008
      %v3025 = vpack.c.bf16 %v3011, %v3010
      %v3026 = vpack.c.bf16 %v3013, %v3012
      %v3027 = vpack.c.bf16 %v3015, %v3014
      %v3028 = vpack.c.bf16 %v3017, %v3016
      %v3029 = vpack.c.bf16 %v3019, %v3018
      %v3030 = vpack.c.bf16 %v3021, %v3020
      %v3031 = vpack.c.bf16 %v3023, %v3022
      %v3033 = vlaneseq
      %v3034 = vshrl.u32 %v3033, 7
      %v3035 = vsub.s32 0, %v3034
      %v3036 = vrot.slane %v392, %v3035
      %v3042 = vunpack.c.l.b16 %v388
      %v3043 = vunpack.c.l.b16 %v389
      %v3044 = vunpack.c.l.b16 %v390
      %v3045 = vunpack.c.l.b16 %v391
      %v3046 = vpack.c.b16 %v3043, %v3042
      %v3047 = vpack.c.b16 %v3045, %v3044
      %v3051 = vsel %vm2383, %v3024, 0
      %v3054 = vsel %vm2383, %v3025, 0
      %v3057 = vsel %vm2383, %v3026, 0
      %v3060 = vsel %vm2383, %v3027, 0
      %v3063 = vsel %vm2383, %v3028, 0
      %v3066 = vsel %vm2383, %v3029, 0
      %v3069 = vsel %vm2383, %v3030, 0
      %v3072 = vsel %vm2383, %v3031, 0
      %3074 = vmatprep.subr.bf16.mxu0 0
      %3075 = vmatpush1.bf16.msra.mxu0 %v3046
      %3076 = vmatprep.subr.bf16.mxu0 0
      %3077 = vmatpush1.bf16.msra.mxu0 %v3047
      %3078 = vmatprep.subr.bf16.mxu0 0
      %3079 = vmatpush1.bf16.msra.mxu0 0
      %3080 = vmatprep.subr.bf16.mxu0 0
      %3081 = vmatpush1.bf16.msra.mxu0 0
      %3082 = vmatprep.subr.bf16.mxu0 0
      %3083 = vmatpush1.bf16.msra.mxu0 0
      %3084 = vmatprep.subr.bf16.mxu0 0
      %3085 = vmatpush1.bf16.msra.mxu0 0
      %3086 = vmatprep.subr.bf16.mxu0 0
      %3087 = vmatpush1.bf16.msra.mxu0 0
      %3088 = vmatprep.subr.bf16.mxu0 0
      %3089 = vmatpush1.bf16.msra.mxu0 0
      %3090 = vmatprep.subr.bf16.mxu0 0
      %3091 = vmatpush1.bf16.msra.mxu0 0
      %3092 = vmatprep.subr.bf16.mxu0 0
      %3093 = vmatpush1.bf16.msra.mxu0 0
      %3094 = vmatprep.subr.bf16.mxu0 0
      %3095 = vmatpush1.bf16.msra.mxu0 0
      %3096 = vmatprep.subr.bf16.mxu0 0
      %3097 = vmatpush1.bf16.msra.mxu0 0
      %3098 = vmatprep.subr.bf16.mxu0 0
      %3099 = vmatpush1.bf16.msra.mxu0 0
      %3100 = vmatprep.subr.bf16.mxu0 0
      %3101 = vmatpush1.bf16.msra.mxu0 0
      %3102 = vmatprep.subr.bf16.mxu0 0
      %3103 = vmatpush1.bf16.msra.mxu0 0
      %3104 = vmatprep.subr.bf16.mxu0 0
      %3105 = vmatpush1.bf16.msra.mxu0 0
      %3106 = vmatprep.mubr.bf16.mxu0 0
      %3107 = vmatmul.mubr.bf16.gmra.mrb[0].mxu0 %v3051
      %v3108 = vpop.f32.mrb[0].mxu0
      %v3109 = vadd.f32 %v3036, %v3108
      %v3110 = vpop.f32.mrb[0].mxu0
      %v3111 = vpop.f32.mrb[0].mxu0
      %v3112 = vadd.f32 %v3036, %v3111
      %v3113 = vpop.f32.mrb[0].mxu0
      %3114 = vmatprep.mubr.bf16.mxu0 0
      %3115 = vmatmul.mubr.bf16.gmra.mrb[0].mxu0 %v3054
      %v3116 = vpop.f32.mrb[0].mxu0
      %v3117 = vadd.f32 %v3036, %v3116
      %v3118 = vpop.f32.mrb[0].mxu0
      %v3119 = vpop.f32.mrb[0].mxu0
      %v3120 = vadd.f32 %v3036, %v3119
      %v3121 = vpop.f32.mrb[0].mxu0
      %3122 = vmatprep.mubr.bf16.mxu0 0
      %3123 = vmatmul.mubr.bf16.gmra.mrb[0].mxu0 %v3057
      %v3124 = vpop.f32.mrb[0].mxu0
      %v3125 = vadd.f32 %v3036, %v3124
      %v3126 = vpop.f32.mrb[0].mxu0
      %v3127 = vpop.f32.mrb[0].mxu0
      %v3128 = vadd.f32 %v3036, %v3127
      %v3129 = vpop.f32.mrb[0].mxu0
      %3130 = vmatprep.mubr.bf16.mxu0 0
      %3131 = vmatmul.mubr.bf16.gmra.mrb[0].mxu0 %v3060
      %v3132 = vpop.f32.mrb[0].mxu0
      %v3133 = vadd.f32 %v3036, %v3132
      %v3134 = vpop.f32.mrb[0].mxu0
      %v3135 = vpop.f32.mrb[0].mxu0
      %v3136 = vadd.f32 %v3036, %v3135
      %v3137 = vpop.f32.mrb[0].mxu0
      %3138 = vmatprep.mubr.bf16.mxu0 0
      %3139 = vmatmul.mubr.bf16.gmra.mrb[0].mxu0 %v3063
      %v3140 = vpop.f32.mrb[0].mxu0
      %v3141 = vadd.f32 %v3036, %v3140
      %v3142 = vpop.f32.mrb[0].mxu0
      %v3143 = vpop.f32.mrb[0].mxu0
      %v3144 = vadd.f32 %v3036, %v3143
      %v3145 = vpop.f32.mrb[0].mxu0
      %3146 = vmatprep.mubr.bf16.mxu0 0
      %3147 = vmatmul.mubr.bf16.gmra.mrb[0].mxu0 %v3066
      %v3148 = vpop.f32.mrb[0].mxu0
      %v3149 = vadd.f32 %v3036, %v3148
      %v3150 = vpop.f32.mrb[0].mxu0
      %v3151 = vpop.f32.mrb[0].mxu0
      %v3152 = vadd.f32 %v3036, %v3151
      %v3153 = vpop.f32.mrb[0].mxu0
      %3154 = vmatprep.mubr.bf16.mxu0 0
      %3155 = vmatmul.mubr.bf16.gmra.mrb[0].mxu0 %v3069
      %v3156 = vpop.f32.mrb[0].mxu0
      %v3157 = vadd.f32 %v3036, %v3156
      %v3158 = vpop.f32.mrb[0].mxu0
      %v3159 = vpop.f32.mrb[0].mxu0
      %v3160 = vadd.f32 %v3036, %v3159
      %v3161 = vpop.f32.mrb[0].mxu0
      %3162 = vmatprep.mubr.bf16.mxu0 0
      %3163 = vmatmul.mubr.bf16.gmra.mrb[0].mxu0 %v3072
      %v3164 = vpop.f32.mrb[0].mxu0
      %v3165 = vadd.f32 %v3036, %v3164
      %v3166 = vpop.f32.mrb[0].mxu0
      %v3167 = vpop.f32.mrb[0].mxu0
      %v3168 = vadd.f32 %v3036, %v3167
      %v3169 = vpop.f32.mrb[0].mxu0
      %3170 = vdwg.mxu0
      %3171 = vst [vmem:[%s321] sm:$0xff] %v3109
      %3172 = vst [vmem:[%s321 + $0x8] sm:$0xff] %v3112
      %3173 = vst [vmem:[%s321 + $0x10] sm:$0xff] %v3117
      %3174 = vst [vmem:[%s321 + $0x18] sm:$0xff] %v3120
      %3175 = vst [vmem:[%s321 + $0x20] sm:$0xff] %v3125
      %3176 = vst [vmem:[%s321 + $0x28] sm:$0xff] %v3128
      %3177 = vst [vmem:[%s321 + $0x30] sm:$0xff] %v3133
      %3178 = vst [vmem:[%s321 + $0x38] sm:$0xff] %v3136
      %3179 = vst [vmem:[%s321 + $0x40] sm:$0xff] %v3141
      %3180 = vst [vmem:[%s321 + $0x48] sm:$0xff] %v3144
      %3181 = vst [vmem:[%s321 + $0x50] sm:$0xff] %v3149
      %3182 = vst [vmem:[%s321 + $0x58] sm:$0xff] %v3152
      %3183 = vst [vmem:[%s321 + $0x60] sm:$0xff] %v3157
      %3184 = vst [vmem:[%s321 + $0x68] sm:$0xff] %v3160
      %3185 = vst [vmem:[%s321 + $0x70] sm:$0xff] %v3165
      %3186 = vst [vmem:[%s321 + $0x78] sm:$0xff] %v3168
      %s3187 = smul.u32 %s27, 2
      %s3188 = sadd.s32 %s3187, 1
      %s3189 = smul.u32 %s3188, 6
      %s3190 = sld [smem:[#allocation3 + %s3189]]
      %p3191 = scmp.gt.s32.totalorder %s3190, 0
      %s3192 = scalar_select %p3191, %s3190, 0
      %p3193 = scmp.lt.s32.totalorder %s3192, 3
      %s3194 = scalar_select %p3193, %s3192, 3
      %s3195 = smul.u32 %s3194, 98
      %s3196 = smul.addr %s3195, 4
      %s3197 = scalar_lea.vmem %s2, %s3196
      %v3198 = vld [vmem:[%s3197] sm:$0xf]
      %v3199 = vld [vmem:[%s3197 + $0x4] sm:$0xf]
      %v3200 = vld [vmem:[%s3197 + $0x8] sm:$0xf]
      %v3201 = vld [vmem:[%s3197 + $0xc] sm:$0xf]
      %v3202 = vld [vmem:[%s3197 + $0x10] sm:$0xf]
      %v3203 = vld [vmem:[%s3197 + $0x14] sm:$0xf]
      %v3204 = vld [vmem:[%s3197 + $0x18] sm:$0xf]
      %v3205 = vld [vmem:[%s3197 + $0x1c] sm:$0xf]
      %v3206 = vld [vmem:[%s3197 + $0x20] sm:$0xf]
      %v3207 = vld [vmem:[%s3197 + $0x24] sm:$0xf]
      %v3208 = vld [vmem:[%s3197 + $0x28] sm:$0xf]
      %v3209 = vld [vmem:[%s3197 + $0x2c] sm:$0xf]
      %v3210 = vld [vmem:[%s3197 + $0x30] sm:$0xf]
      %v3211 = vld [vmem:[%s3197 + $0x34] sm:$0xf]
      %v3212 = vld [vmem:[%s3197 + $0x38] sm:$0xf]
      %v3213 = vld [vmem:[%s3197 + $0x3c] sm:$0xf]
      %v3214 = vld [vmem:[%s3197 + $0x40] sm:$0xf]
      %v3215 = vld [vmem:[%s3197 + $0x44] sm:$0xf]
      %v3216 = vld [vmem:[%s3197 + $0x48] sm:$0xf]
      %v3217 = vld [vmem:[%s3197 + $0x4c] sm:$0xf]
      %v3218 = vld [vmem:[%s3197 + $0x50] sm:$0xf]
      %v3219 = vld [vmem:[%s3197 + $0x54] sm:$0xf]
      %v3220 = vld [vmem:[%s3197 + $0x58] sm:$0xf]
      %v3221 = vld [vmem:[%s3197 + $0x5c] sm:$0xf]
      %v3222 = vld [vmem:[%s3197 + $0x60] sm:$0xf]
      %v3223 = vld [vmem:[%s3197 + $0x64] sm:$0xf]
      %v3224 = vld [vmem:[%s3197 + $0x68] sm:$0xf]
      %v3225 = vld [vmem:[%s3197 + $0x6c] sm:$0xf]
      %v3226 = vld [vmem:[%s3197 + $0x70] sm:$0xf]
      %v3227 = vld [vmem:[%s3197 + $0x74] sm:$0xf]
      %v3228 = vld [vmem:[%s3197 + $0x78] sm:$0xf]
      %v3229 = vld [vmem:[%s3197 + $0x7c] sm:$0xf]
      %v3230 = vld [vmem:[%s3197 + $0x80] sm:$0xf]
      %v3231 = vld [vmem:[%s3197 + $0x84] sm:$0xf]
      %v3232 = vld [vmem:[%s3197 + $0x88] sm:$0xf]
      %v3233 = vld [vmem:[%s3197 + $0x8c] sm:$0xf]
      %v3234 = vld [vmem:[%s3197 + $0x90] sm:$0xf]
      %v3235 = vld [vmem:[%s3197 + $0x94] sm:$0xf]
      %v3236 = vld [vmem:[%s3197 + $0x98] sm:$0xf]
      %v3237 = vld [vmem:[%s3197 + $0x9c] sm:$0xf]
      %v3238 = vld [vmem:[%s3197 + $0xa0] sm:$0xf]
      %v3239 = vld [vmem:[%s3197 + $0xa4] sm:$0xf]
      %v3240 = vld [vmem:[%s3197 + $0xa8] sm:$0xf]
      %v3241 = vld [vmem:[%s3197 + $0xac] sm:$0xf]
      %v3242 = vld [vmem:[%s3197 + $0xb0] sm:$0xf]
      %v3243 = vld [vmem:[%s3197 + $0xb4] sm:$0xf]
      %v3244 = vld [vmem:[%s3197 + $0xb8] sm:$0xf]
      %v3245 = vld [vmem:[%s3197 + $0xbc] sm:$0xf]
      %v3246 = vld [vmem:[%s3197 + $0xc0] sm:$0xf]
      %v3247 = vld [vmem:[%s3197 + $0xc4] sm:$0xf]
      %v3248 = vld [vmem:[%s3197 + $0xc8] sm:$0xf]
      %v3249 = vld [vmem:[%s3197 + $0xcc] sm:$0xf]
      %v3250 = vld [vmem:[%s3197 + $0xd0] sm:$0xf]
      %v3251 = vld [vmem:[%s3197 + $0xd4] sm:$0xf]
      %v3252 = vld [vmem:[%s3197 + $0xd8] sm:$0xf]
      %v3253 = vld [vmem:[%s3197 + $0xdc] sm:$0xf]
      %v3254 = vld [vmem:[%s3197 + $0xe0] sm:$0xf]
      %v3255 = vld [vmem:[%s3197 + $0xe4] sm:$0xf]
      %v3256 = vld [vmem:[%s3197 + $0xe8] sm:$0xf]
      %v3257 = vld [vmem:[%s3197 + $0xec] sm:$0xf]
      %v3258 = vld [vmem:[%s3197 + $0xf0] sm:$0xf]
      %v3259 = vld [vmem:[%s3197 + $0xf4] sm:$0xf]
      %v3260 = vld [vmem:[%s3197 + $0xf8] sm:$0xf]
      %v3261 = vld [vmem:[%s3197 + $0xfc] sm:$0xf]
      %v3262 = vld [vmem:[%s3197 + $0x100] sm:$0xf]
      %v3263 = vld [vmem:[%s3197 + $0x104] sm:$0xf]
      %v3264 = vld [vmem:[%s3197 + $0x108] sm:$0xf]
      %v3265 = vld [vmem:[%s3197 + $0x10c] sm:$0xf]
      %v3266 = vld [vmem:[%s3197 + $0x110] sm:$0xf]
      %v3267 = vld [vmem:[%s3197 + $0x114] sm:$0xf]
      %v3268 = vld [vmem:[%s3197 + $0x118] sm:$0xf]
      %v3269 = vld [vmem:[%s3197 + $0x11c] sm:$0xf]
      %v3270 = vld [vmem:[%s3197 + $0x120] sm:$0xf]
      %v3271 = vld [vmem:[%s3197 + $0x124] sm:$0xf]
      %v3272 = vld [vmem:[%s3197 + $0x128] sm:$0xf]
      %v3273 = vld [vmem:[%s3197 + $0x12c] sm:$0xf]
      %v3274 = vld [vmem:[%s3197 + $0x130] sm:$0xf]
      %v3275 = vld [vmem:[%s3197 + $0x134] sm:$0xf]
      %v3276 = vld [vmem:[%s3197 + $0x138] sm:$0xf]
      %v3277 = vld [vmem:[%s3197 + $0x13c] sm:$0xf]
      %v3278 = vld [vmem:[%s3197 + $0x140] sm:$0xf]
      %v3279 = vld [vmem:[%s3197 + $0x144] sm:$0xf]
      %v3280 = vld [vmem:[%s3197 + $0x148] sm:$0xf]
      %v3281 = vld [vmem:[%s3197 + $0x14c] sm:$0xf]
      %v3282 = vld [vmem:[%s3197 + $0x150] sm:$0xf]
      %v3283 = vld [vmem:[%s3197 + $0x154] sm:$0xf]
      %v3284 = vld [vmem:[%s3197 + $0x158] sm:$0xf]
      %v3285 = vld [vmem:[%s3197 + $0x15c] sm:$0xf]
      %v3286 = vld [vmem:[%s3197 + $0x160] sm:$0xf]
      %v3287 = vld [vmem:[%s3197 + $0x164] sm:$0xf]
      %v3288 = vld [vmem:[%s3197 + $0x168] sm:$0xf]
      %v3289 = vld [vmem:[%s3197 + $0x16c] sm:$0xf]
      %v3290 = vld [vmem:[%s3197 + $0x170] sm:$0xf]
      %v3291 = vld [vmem:[%s3197 + $0x174] sm:$0xf]
      %v3292 = vld [vmem:[%s3197 + $0x178] sm:$0xf]
      %v3293 = vld [vmem:[%s3197 + $0x17c] sm:$0xf]
      %v3294 = vld [vmem:[%s3197 + $0x180] sm:$0xf]
      %v3295 = vld [vmem:[%s3197 + $0x184] sm:$0xf]
      %s3296 = scalar_lea.vmem %s3, %s3194
      %v3297 = vld [vmem:[%s3296] sm:$0x1]
      %v3299 = vlaneseq
      %v3300 = vshrl.u32 %v3299, 7
      %v3301 = vsub.s32 0, %v3300
      %v3302 = vrot.slane %v3297, %v3301
      %v3402 = vunpack.c.l.b16 %v3198
      %v3403 = vunpack.c.l.b16 %v3199
      %v3404 = vunpack.c.l.b16 %v3200
      %v3405 = vunpack.c.l.b16 %v3201
      %v3406 = vunpack.c.l.b16 %v3202
      %v3407 = vunpack.c.l.b16 %v3203
      %v3408 = vunpack.c.l.b16 %v3204
      %v3409 = vunpack.c.l.b16 %v3205
      %v3410 = vunpack.c.l.b16 %v3206
      %v3411 = vunpack.c.l.b16 %v3207
      %v3412 = vunpack.c.l.b16 %v3208
      %v3413 = vunpack.c.l.b16 %v3209
      %v3414 = vunpack.c.l.b16 %v3210
      %v3415 = vunpack.c.l.b16 %v3211
      %v3416 = vunpack.c.l.b16 %v3212
      %v3417 = vunpack.c.l.b16 %v3213
      %v3418 = vunpack.c.l.b16 %v3214
      %v3419 = vunpack.c.l.b16 %v3215
      %v3420 = vunpack.c.l.b16 %v3216
      %v3421 = vunpack.c.l.b16 %v3217
      %v3422 = vunpack.c.l.b16 %v3218
      %v3423 = vunpack.c.l.b16 %v3219
      %v3424 = vunpack.c.l.b16 %v3220
      %v3425 = vunpack.c.l.b16 %v3221
      %v3426 = vunpack.c.l.b16 %v3222
      %v3427 = vunpack.c.l.b16 %v3223
      %v3428 = vunpack.c.l.b16 %v3224
      %v3429 = vunpack.c.l.b16 %v3225
      %v3430 = vunpack.c.l.b16 %v3226
      %v3431 = vunpack.c.l.b16 %v3227
      %v3432 = vunpack.c.l.b16 %v3228
      %v3433 = vunpack.c.l.b16 %v3229
      %v3434 = vunpack.c.l.b16 %v3230
      %v3435 = vunpack.c.l.b16 %v3231
      %v3436 = vunpack.c.l.b16 %v3232
      %v3437 = vunpack.c.l.b16 %v3233
      %v3438 = vunpack.c.l.b16 %v3234
      %v3439 = vunpack.c.l.b16 %v3235
      %v3440 = vunpack.c.l.b16 %v3236
      %v3441 = vunpack.c.l.b16 %v3237
      %v3442 = vunpack.c.l.b16 %v3238
      %v3443 = vunpack.c.l.b16 %v3239
      %v3444 = vunpack.c.l.b16 %v3240
      %v3445 = vunpack.c.l.b16 %v3241
      %v3446 = vunpack.c.l.b16 %v3242
      %v3447 = vunpack.c.l.b16 %v3243
      %v3448 = vunpack.c.l.b16 %v3244
      %v3449 = vunpack.c.l.b16 %v3245
      %v3450 = vunpack.c.l.b16 %v3246
      %v3451 = vunpack.c.l.b16 %v3247
      %v3452 = vunpack.c.l.b16 %v3248
      %v3453 = vunpack.c.l.b16 %v3249
      %v3454 = vunpack.c.l.b16 %v3250
      %v3455 = vunpack.c.l.b16 %v3251
      %v3456 = vunpack.c.l.b16 %v3252
      %v3457 = vunpack.c.l.b16 %v3253
      %v3458 = vunpack.c.l.b16 %v3254
      %v3459 = vunpack.c.l.b16 %v3255
      %v3460 = vunpack.c.l.b16 %v3256
      %v3461 = vunpack.c.l.b16 %v3257
      %v3462 = vunpack.c.l.b16 %v3258
      %v3463 = vunpack.c.l.b16 %v3259
      %v3464 = vunpack.c.l.b16 %v3260
      %v3465 = vunpack.c.l.b16 %v3261
      %v3466 = vunpack.c.l.b16 %v3262
      %v3467 = vunpack.c.l.b16 %v3263
      %v3468 = vunpack.c.l.b16 %v3264
      %v3469 = vunpack.c.l.b16 %v3265
      %v3470 = vunpack.c.l.b16 %v3266
      %v3471 = vunpack.c.l.b16 %v3267
      %v3472 = vunpack.c.l.b16 %v3268
      %v3473 = vunpack.c.l.b16 %v3269
      %v3474 = vunpack.c.l.b16 %v3270
      %v3475 = vunpack.c.l.b16 %v3271
      %v3476 = vunpack.c.l.b16 %v3272
      %v3477 = vunpack.c.l.b16 %v3273
      %v3478 = vunpack.c.l.b16 %v3274
      %v3479 = vunpack.c.l.b16 %v3275
      %v3480 = vunpack.c.l.b16 %v3276
      %v3481 = vunpack.c.l.b16 %v3277
      %v3482 = vunpack.c.l.b16 %v3278
      %v3483 = vunpack.c.l.b16 %v3279
      %v3484 = vunpack.c.l.b16 %v3280
      %v3485 = vunpack.c.l.b16 %v3281
      %v3486 = vunpack.c.l.b16 %v3282
      %v3487 = vunpack.c.l.b16 %v3283
      %v3488 = vunpack.c.l.b16 %v3284
      %v3489 = vunpack.c.l.b16 %v3285
      %v3490 = vunpack.c.l.b16 %v3286
      %v3491 = vunpack.c.l.b16 %v3287
      %v3492 = vunpack.c.l.b16 %v3288
      %v3493 = vunpack.c.l.b16 %v3289
      %v3494 = vunpack.c.l.b16 %v3290
      %v3495 = vunpack.c.l.b16 %v3291
      %v3496 = vunpack.c.l.b16 %v3292
      %v3497 = vunpack.c.l.b16 %v3293
      %v3498 = vunpack.c.l.b16 %v3294
      %v3499 = vunpack.c.l.b16 %v3295
      %v3500 = vpack.c.b16 %v3403, %v3402
      %v3501 = vpack.c.b16 %v3405, %v3404
      %v3502 = vpack.c.b16 %v3407, %v3406
      %v3503 = vpack.c.b16 %v3409, %v3408
      %v3504 = vpack.c.b16 %v3411, %v3410
      %v3505 = vpack.c.b16 %v3413, %v3412
      %v3506 = vpack.c.b16 %v3415, %v3414
      %v3507 = vpack.c.b16 %v3417, %v3416
      %v3508 = vpack.c.b16 %v3419, %v3418
      %v3509 = vpack.c.b16 %v3421, %v3420
      %v3510 = vpack.c.b16 %v3423, %v3422
      %v3511 = vpack.c.b16 %v3425, %v3424
      %v3512 = vpack.c.b16 %v3427, %v3426
      %v3513 = vpack.c.b16 %v3429, %v3428
      %v3514 = vpack.c.b16 %v3431, %v3430
      %v3515 = vpack.c.b16 %v3433, %v3432
      %v3516 = vpack.c.b16 %v3435, %v3434
      %v3517 = vpack.c.b16 %v3437, %v3436
      %v3518 = vpack.c.b16 %v3439, %v3438
      %v3519 = vpack.c.b16 %v3441, %v3440
      %v3520 = vpack.c.b16 %v3443, %v3442
      %v3521 = vpack.c.b16 %v3445, %v3444
      %v3522 = vpack.c.b16 %v3447, %v3446
      %v3523 = vpack.c.b16 %v3449, %v3448
      %v3524 = vpack.c.b16 %v3451, %v3450
      %v3525 = vpack.c.b16 %v3453, %v3452
      %v3526 = vpack.c.b16 %v3455, %v3454
      %v3527 = vpack.c.b16 %v3457, %v3456
      %v3528 = vpack.c.b16 %v3459, %v3458
      %v3529 = vpack.c.b16 %v3461, %v3460
      %v3530 = vpack.c.b16 %v3463, %v3462
      %v3531 = vpack.c.b16 %v3465, %v3464
      %v3532 = vpack.c.b16 %v3467, %v3466
      %v3533 = vpack.c.b16 %v3469, %v3468
      %v3534 = vpack.c.b16 %v3471, %v3470
      %v3535 = vpack.c.b16 %v3473, %v3472
      %v3536 = vpack.c.b16 %v3475, %v3474
      %v3537 = vpack.c.b16 %v3477, %v3476
      %v3538 = vpack.c.b16 %v3479, %v3478
      %v3539 = vpack.c.b16 %v3481, %v3480
      %v3540 = vpack.c.b16 %v3483, %v3482
      %v3541 = vpack.c.b16 %v3485, %v3484
      %v3542 = vpack.c.b16 %v3487, %v3486
      %v3543 = vpack.c.b16 %v3489, %v3488
      %v3544 = vpack.c.b16 %v3491, %v3490
      %v3545 = vpack.c.b16 %v3493, %v3492
      %v3546 = vpack.c.b16 %v3495, %v3494
      %v3547 = vpack.c.b16 %v3497, %v3496
      %v3548 = vpack.c.b16 %v3499, %v3498
      %3598 = vmatprep.subr.bf16.mxu0 0
      %3599 = vmatpush1.bf16.msra.mxu0 %v3500
      %3600 = vmatprep.subr.bf16.mxu0 0
      %3601 = vmatpush1.bf16.msra.mxu0 %v3501
      %3602 = vmatprep.subr.bf16.mxu0 0
      %3603 = vmatpush1.bf16.msra.mxu0 %v3502
      %3604 = vmatprep.subr.bf16.mxu0 0
      %3605 = vmatpush1.bf16.msra.mxu0 %v3503
      %3606 = vmatprep.subr.bf16.mxu0 0
      %3607 = vmatpush1.bf16.msra.mxu0 %v3504
      %3608 = vmatprep.subr.bf16.mxu0 0
      %3609 = vmatpush1.bf16.msra.mxu0 %v3505
      %3610 = vmatprep.subr.bf16.mxu0 0
      %3611 = vmatpush1.bf16.msra.mxu0 %v3506
      %3612 = vmatprep.subr.bf16.mxu0 0
      %3613 = vmatpush1.bf16.msra.mxu0 %v3507
      %3614 = vmatprep.subr.bf16.mxu0 0
      %3615 = vmatpush1.bf16.msra.mxu0 %v3508
      %3616 = vmatprep.subr.bf16.mxu0 0
      %3617 = vmatpush1.bf16.msra.mxu0 %v3509
      %3618 = vmatprep.subr.bf16.mxu0 0
      %3619 = vmatpush1.bf16.msra.mxu0 %v3510
      %3620 = vmatprep.subr.bf16.mxu0 0
      %3621 = vmatpush1.bf16.msra.mxu0 %v3511
      %3622 = vmatprep.subr.bf16.mxu0 0
      %3623 = vmatpush1.bf16.msra.mxu0 %v3512
      %3624 = vmatprep.subr.bf16.mxu0 0
      %3625 = vmatpush1.bf16.msra.mxu0 %v3513
      %3626 = vmatprep.subr.bf16.mxu0 0
      %3627 = vmatpush1.bf16.msra.mxu0 %v3514
      %3628 = vmatprep.subr.bf16.mxu0 0
      %3629 = vmatpush1.bf16.msra.mxu0 %v3515
      %3630 = vmatprep.mubr.bf16.mxu0 %v685
      %3631 = vmatmul.mubr.bf16.gmra.mrb[0].mxu0 %v684
      %v3632 = vpop.f32.mrb[0].mxu0
      %v3633 = vadd.f32 %v3302, %v3632
      %v3634 = vpop.f32.mrb[0].mxu0
      %v3635 = vpop.f32.mrb[0].mxu0
      %v3636 = vadd.f32 %v3302, %v3635
      %v3637 = vpop.f32.mrb[0].mxu0
      %3638 = vmatprep.mubr.bf16.mxu0 %v692
      %3639 = vmatmul.mubr.bf16.gmra.mrb[0].mxu0 %v691
      %v3640 = vpop.f32.mrb[0].mxu0
      %v3641 = vadd.f32 %v3302, %v3640
      %v3642 = vpop.f32.mrb[0].mxu0
      %v3643 = vpop.f32.mrb[0].mxu0
      %v3644 = vadd.f32 %v3302, %v3643
      %v3645 = vpop.f32.mrb[0].mxu0
      %3646 = vmatprep.mubr.bf16.mxu0 %v699
      %3647 = vmatmul.mubr.bf16.gmra.mrb[0].mxu0 %v698
      %v3648 = vpop.f32.mrb[0].mxu0
      %v3649 = vadd.f32 %v3302, %v3648
      %v3650 = vpop.f32.mrb[0].mxu0
      %v3651 = vpop.f32.mrb[0].mxu0
      %v3652 = vadd.f32 %v3302, %v3651
      %v3653 = vpop.f32.mrb[0].mxu0
      %3654 = vmatprep.mubr.bf16.mxu0 %v706
      %3655 = vmatmul.mubr.bf16.gmra.mrb[0].mxu0 %v705
      %v3656 = vpop.f32.mrb[0].mxu0
      %v3657 = vadd.f32 %v3302, %v3656
      %v3658 = vpop.f32.mrb[0].mxu0
      %v3659 = vpop.f32.mrb[0].mxu0
      %v3660 = vadd.f32 %v3302, %v3659
      %v3661 = vpop.f32.mrb[0].mxu0
      %3662 = vmatprep.mubr.bf16.mxu0 %v713
      %3663 = vmatmul.mubr.bf16.gmra.mrb[0].mxu0 %v712
      %v3664 = vpop.f32.mrb[0].mxu0
      %v3665 = vadd.f32 %v3302, %v3664
      %v3666 = vpop.f32.mrb[0].mxu0
      %v3667 = vpop.f32.mrb[0].mxu0
      %v3668 = vadd.f32 %v3302, %v3667
      %v3669 = vpop.f32.mrb[0].mxu0
      %3670 = vmatprep.mubr.bf16.mxu0 %v720
      %3671 = vmatmul.mubr.bf16.gmra.mrb[0].mxu0 %v719
      %v3672 = vpop.f32.mrb[0].mxu0
      %v3673 = vadd.f32 %v3302, %v3672
      %v3674 = vpop.f32.mrb[0].mxu0
      %v3675 = vpop.f32.mrb[0].mxu0
      %v3676 = vadd.f32 %v3302, %v3675
      %v3677 = vpop.f32.mrb[0].mxu0
      %3678 = vmatprep.mubr.bf16.mxu0 %v727
      %3679 = vmatmul.mubr.bf16.gmra.mrb[0].mxu0 %v726
      %v3680 = vpop.f32.mrb[0].mxu0
      %v3681 = vadd.f32 %v3302, %v3680
      %v3682 = vpop.f32.mrb[0].mxu0
      %v3683 = vpop.f32.mrb[0].mxu0
      %v3684 = vadd.f32 %v3302, %v3683
      %v3685 = vpop.f32.mrb[0].mxu0
      %3686 = vmatprep.mubr.bf16.mxu0 %v734
      %3687 = vmatmul.mubr.bf16.gmra.mrb[0].mxu0 %v733
      %v3688 = vpop.f32.mrb[0].mxu0
      %v3689 = vadd.f32 %v3302, %v3688
      %v3690 = vpop.f32.mrb[0].mxu0
      %v3691 = vpop.f32.mrb[0].mxu0
      %v3692 = vadd.f32 %v3302, %v3691
      %v3693 = vpop.f32.mrb[0].mxu0
      %3694 = vdwg.mxu0
      %3695 = vmatprep.subr.bf16.mxu0 0
      %3696 = vmatpush1.bf16.msra.mxu0 %v3516
      %3697 = vmatprep.subr.bf16.mxu0 0
      %3698 = vmatpush1.bf16.msra.mxu0 %v3517
      %3699 = vmatprep.subr.bf16.mxu0 0
      %3700 = vmatpush1.bf16.msra.mxu0 %v3518
      %3701 = vmatprep.subr.bf16.mxu0 0
      %3702 = vmatpush1.bf16.msra.mxu0 %v3519
      %3703 = vmatprep.subr.bf16.mxu0 0
      %3704 = vmatpush1.bf16.msra.mxu0 %v3520
      %3705 = vmatprep.subr.bf16.mxu0 0
      %3706 = vmatpush1.bf16.msra.mxu0 %v3521
      %3707 = vmatprep.subr.bf16.mxu0 0
      %3708 = vmatpush1.bf16.msra.mxu0 %v3522
      %3709 = vmatprep.subr.bf16.mxu0 0
      %3710 = vmatpush1.bf16.msra.mxu0 %v3523
      %3711 = vmatprep.subr.bf16.mxu0 0
      %3712 = vmatpush1.bf16.msra.mxu0 %v3524
      %3713 = vmatprep.subr.bf16.mxu0 0
      %3714 = vmatpush1.bf16.msra.mxu0 %v3525
      %3715 = vmatprep.subr.bf16.mxu0 0
      %3716 = vmatpush1.bf16.msra.mxu0 %v3526
      %3717 = vmatprep.subr.bf16.mxu0 0
      %3718 = vmatpush1.bf16.msra.mxu0 %v3527
      %3719 = vmatprep.subr.bf16.mxu0 0
      %3720 = vmatpush1.bf16.msra.mxu0 %v3528
      %3721 = vmatprep.subr.bf16.mxu0 0
      %3722 = vmatpush1.bf16.msra.mxu0 %v3529
      %3723 = vmatprep.subr.bf16.mxu0 0
      %3724 = vmatpush1.bf16.msra.mxu0 %v3530
      %3725 = vmatprep.subr.bf16.mxu0 0
      %3726 = vmatpush1.bf16.msra.mxu0 %v3531
      %3727 = vmatprep.mubr.bf16.mxu0 %v687
      %3728 = vmatmul.mubr.bf16.gmra.mrb[0].mxu0 %v686
      %v3729 = vpop.f32.mrb[0].mxu0
      %v3730 = vadd.f32 %v3633, %v3729
      %v3731 = vpop.f32.mrb[0].mxu0
      %v3732 = vpop.f32.mrb[0].mxu0
      %v3733 = vadd.f32 %v3636, %v3732
      %v3734 = vpop.f32.mrb[0].mxu0
      %3735 = vmatprep.mubr.bf16.mxu0 %v694
      %3736 = vmatmul.mubr.bf16.gmra.mrb[0].mxu0 %v693
      %v3737 = vpop.f32.mrb[0].mxu0
      %v3738 = vadd.f32 %v3641, %v3737
      %v3739 = vpop.f32.mrb[0].mxu0
      %v3740 = vpop.f32.mrb[0].mxu0
      %v3741 = vadd.f32 %v3644, %v3740
      %v3742 = vpop.f32.mrb[0].mxu0
      %3743 = vmatprep.mubr.bf16.mxu0 %v701
      %3744 = vmatmul.mubr.bf16.gmra.mrb[0].mxu0 %v700
      %v3745 = vpop.f32.mrb[0].mxu0
      %v3746 = vadd.f32 %v3649, %v3745
      %v3747 = vpop.f32.mrb[0].mxu0
      %v3748 = vpop.f32.mrb[0].mxu0
      %v3749 = vadd.f32 %v3652, %v3748
      %v3750 = vpop.f32.mrb[0].mxu0
      %3751 = vmatprep.mubr.bf16.mxu0 %v708
      %3752 = vmatmul.mubr.bf16.gmra.mrb[0].mxu0 %v707
      %v3753 = vpop.f32.mrb[0].mxu0
      %v3754 = vadd.f32 %v3657, %v3753
      %v3755 = vpop.f32.mrb[0].mxu0
      %v3756 = vpop.f32.mrb[0].mxu0
      %v3757 = vadd.f32 %v3660, %v3756
      %v3758 = vpop.f32.mrb[0].mxu0
      %3759 = vmatprep.mubr.bf16.mxu0 %v715
      %3760 = vmatmul.mubr.bf16.gmra.mrb[0].mxu0 %v714
      %v3761 = vpop.f32.mrb[0].mxu0
      %v3762 = vadd.f32 %v3665, %v3761
      %v3763 = vpop.f32.mrb[0].mxu0
      %v3764 = vpop.f32.mrb[0].mxu0
      %v3765 = vadd.f32 %v3668, %v3764
      %v3766 = vpop.f32.mrb[0].mxu0
      %3767 = vmatprep.mubr.bf16.mxu0 %v722
      %3768 = vmatmul.mubr.bf16.gmra.mrb[0].mxu0 %v721
      %v3769 = vpop.f32.mrb[0].mxu0
      %v3770 = vadd.f32 %v3673, %v3769
      %v3771 = vpop.f32.mrb[0].mxu0
      %v3772 = vpop.f32.mrb[0].mxu0
      %v3773 = vadd.f32 %v3676, %v3772
      %v3774 = vpop.f32.mrb[0].mxu0
      %3775 = vmatprep.mubr.bf16.mxu0 %v729
      %3776 = vmatmul.mubr.bf16.gmra.mrb[0].mxu0 %v728
      %v3777 = vpop.f32.mrb[0].mxu0
      %v3778 = vadd.f32 %v3681, %v3777
      %v3779 = vpop.f32.mrb[0].mxu0
      %v3780 = vpop.f32.mrb[0].mxu0
      %v3781 = vadd.f32 %v3684, %v3780
      %v3782 = vpop.f32.mrb[0].mxu0
      %3783 = vmatprep.mubr.bf16.mxu0 %v736
      %3784 = vmatmul.mubr.bf16.gmra.mrb[0].mxu0 %v735
      %v3785 = vpop.f32.mrb[0].mxu0
      %v3786 = vadd.f32 %v3689, %v3785
      %v3787 = vpop.f32.mrb[0].mxu0
      %v3788 = vpop.f32.mrb[0].mxu0
      %v3789 = vadd.f32 %v3692, %v3788
      %v3790 = vpop.f32.mrb[0].mxu0
      %3791 = vdwg.mxu0
      %3792 = vmatprep.subr.bf16.mxu0 0
      %3793 = vmatpush1.bf16.msra.mxu0 %v3532
      %3794 = vmatprep.subr.bf16.mxu0 0
      %3795 = vmatpush1.bf16.msra.mxu0 %v3533
      %3796 = vmatprep.subr.bf16.mxu0 0
      %3797 = vmatpush1.bf16.msra.mxu0 %v3534
      %3798 = vmatprep.subr.bf16.mxu0 0
      %3799 = vmatpush1.bf16.msra.mxu0 %v3535
      %3800 = vmatprep.subr.bf16.mxu0 0
      %3801 = vmatpush1.bf16.msra.mxu0 %v3536
      %3802 = vmatprep.subr.bf16.mxu0 0
      %3803 = vmatpush1.bf16.msra.mxu0 %v3537
      %3804 = vmatprep.subr.bf16.mxu0 0
      %3805 = vmatpush1.bf16.msra.mxu0 %v3538
      %3806 = vmatprep.subr.bf16.mxu0 0
      %3807 = vmatpush1.bf16.msra.mxu0 %v3539
      %3808 = vmatprep.subr.bf16.mxu0 0
      %3809 = vmatpush1.bf16.msra.mxu0 %v3540
      %3810 = vmatprep.subr.bf16.mxu0 0
      %3811 = vmatpush1.bf16.msra.mxu0 %v3541
      %3812 = vmatprep.subr.bf16.mxu0 0
      %3813 = vmatpush1.bf16.msra.mxu0 %v3542
      %3814 = vmatprep.subr.bf16.mxu0 0
      %3815 = vmatpush1.bf16.msra.mxu0 %v3543
      %3816 = vmatprep.subr.bf16.mxu0 0
      %3817 = vmatpush1.bf16.msra.mxu0 %v3544
      %3818 = vmatprep.subr.bf16.mxu0 0
      %3819 = vmatpush1.bf16.msra.mxu0 %v3545
      %3820 = vmatprep.subr.bf16.mxu0 0
      %3821 = vmatpush1.bf16.msra.mxu0 %v3546
      %3822 = vmatprep.subr.bf16.mxu0 0
      %3823 = vmatpush1.bf16.msra.mxu0 %v3547
      %3824 = vmatprep.mubr.bf16.mxu0 %v689
      %3825 = vmatmul.mubr.bf16.gmra.mrb[0].mxu0 %v688
      %v3826 = vpop.f32.mrb[0].mxu0
      %v3827 = vadd.f32 %v3730, %v3826
      %v3828 = vpop.f32.mrb[0].mxu0
      %v3829 = vpop.f32.mrb[0].mxu0
      %v3830 = vadd.f32 %v3733, %v3829
      %v3831 = vpop.f32.mrb[0].mxu0
      %3832 = vmatprep.mubr.bf16.mxu0 %v696
      %3833 = vmatmul.mubr.bf16.gmra.mrb[0].mxu0 %v695
      %v3834 = vpop.f32.mrb[0].mxu0
      %v3835 = vadd.f32 %v3738, %v3834
      %v3836 = vpop.f32.mrb[0].mxu0
      %v3837 = vpop.f32.mrb[0].mxu0
      %v3838 = vadd.f32 %v3741, %v3837
      %v3839 = vpop.f32.mrb[0].mxu0
      %3840 = vmatprep.mubr.bf16.mxu0 %v703
      %3841 = vmatmul.mubr.bf16.gmra.mrb[0].mxu0 %v702
      %v3842 = vpop.f32.mrb[0].mxu0
      %v3843 = vadd.f32 %v3746, %v3842
      %v3844 = vpop.f32.mrb[0].mxu0
      %v3845 = vpop.f32.mrb[0].mxu0
      %v3846 = vadd.f32 %v3749, %v3845
      %v3847 = vpop.f32.mrb[0].mxu0
      %3848 = vmatprep.mubr.bf16.mxu0 %v710
      %3849 = vmatmul.mubr.bf16.gmra.mrb[0].mxu0 %v709
      %v3850 = vpop.f32.mrb[0].mxu0
      %v3851 = vadd.f32 %v3754, %v3850
      %v3852 = vpop.f32.mrb[0].mxu0
      %v3853 = vpop.f32.mrb[0].mxu0
      %v3854 = vadd.f32 %v3757, %v3853
      %v3855 = vpop.f32.mrb[0].mxu0
      %3856 = vmatprep.mubr.bf16.mxu0 %v717
      %3857 = vmatmul.mubr.bf16.gmra.mrb[0].mxu0 %v716
      %v3858 = vpop.f32.mrb[0].mxu0
      %v3859 = vadd.f32 %v3762, %v3858
      %v3860 = vpop.f32.mrb[0].mxu0
      %v3861 = vpop.f32.mrb[0].mxu0
      %v3862 = vadd.f32 %v3765, %v3861
      %v3863 = vpop.f32.mrb[0].mxu0
      %3864 = vmatprep.mubr.bf16.mxu0 %v724
      %3865 = vmatmul.mubr.bf16.gmra.mrb[0].mxu0 %v723
      %v3866 = vpop.f32.mrb[0].mxu0
      %v3867 = vadd.f32 %v3770, %v3866
      %v3868 = vpop.f32.mrb[0].mxu0
      %v3869 = vpop.f32.mrb[0].mxu0
      %v3870 = vadd.f32 %v3773, %v3869
      %v3871 = vpop.f32.mrb[0].mxu0
      %3872 = vmatprep.mubr.bf16.mxu0 %v731
      %3873 = vmatmul.mubr.bf16.gmra.mrb[0].mxu0 %v730
      %v3874 = vpop.f32.mrb[0].mxu0
      %v3875 = vadd.f32 %v3778, %v3874
      %v3876 = vpop.f32.mrb[0].mxu0
      %v3877 = vpop.f32.mrb[0].mxu0
      %v3878 = vadd.f32 %v3781, %v3877
      %v3879 = vpop.f32.mrb[0].mxu0
      %3880 = vmatprep.mubr.bf16.mxu0 %v738
      %3881 = vmatmul.mubr.bf16.gmra.mrb[0].mxu0 %v737
      %v3882 = vpop.f32.mrb[0].mxu0
      %v3883 = vadd.f32 %v3786, %v3882
      %v3884 = vpop.f32.mrb[0].mxu0
      %v3885 = vpop.f32.mrb[0].mxu0
      %v3886 = vadd.f32 %v3789, %v3885
      %v3887 = vpop.f32.mrb[0].mxu0
      %3888 = vdwg.mxu0
      %3889 = vmatprep.subr.bf16.mxu0 0
      %3890 = vmatpush1.bf16.msra.mxu0 %v3548
      %3891 = vmatprep.subr.bf16.mxu0 0
      %3892 = vmatpush1.bf16.msra.mxu0 0
      %3893 = vmatprep.subr.bf16.mxu0 0
      %3894 = vmatpush1.bf16.msra.mxu0 0
      %3895 = vmatprep.subr.bf16.mxu0 0
      %3896 = vmatpush1.bf16.msra.mxu0 0
      %3897 = vmatprep.subr.bf16.mxu0 0
      %3898 = vmatpush1.bf16.msra.mxu0 0
      %3899 = vmatprep.subr.bf16.mxu0 0
      %3900 = vmatpush1.bf16.msra.mxu0 0
      %3901 = vmatprep.subr.bf16.mxu0 0
      %3902 = vmatpush1.bf16.msra.mxu0 0
      %3903 = vmatprep.subr.bf16.mxu0 0
      %3904 = vmatpush1.bf16.msra.mxu0 0
      %3905 = vmatprep.subr.bf16.mxu0 0
      %3906 = vmatpush1.bf16.msra.mxu0 0
      %3907 = vmatprep.subr.bf16.mxu0 0
      %3908 = vmatpush1.bf16.msra.mxu0 0
      %3909 = vmatprep.subr.bf16.mxu0 0
      %3910 = vmatpush1.bf16.msra.mxu0 0
      %3911 = vmatprep.subr.bf16.mxu0 0
      %3912 = vmatpush1.bf16.msra.mxu0 0
      %3913 = vmatprep.subr.bf16.mxu0 0
      %3914 = vmatpush1.bf16.msra.mxu0 0
      %3915 = vmatprep.subr.bf16.mxu0 0
      %3916 = vmatpush1.bf16.msra.mxu0 0
      %3917 = vmatprep.subr.bf16.mxu0 0
      %3918 = vmatpush1.bf16.msra.mxu0 0
      %3919 = vmatprep.subr.bf16.mxu0 0
      %3920 = vmatpush1.bf16.msra.mxu0 0
      %3921 = vmatprep.mubr.bf16.mxu0 0
      %3922 = vmatmul.mubr.bf16.gmra.mrb[0].mxu0 %v1084
      %v3923 = vpop.f32.mrb[0].mxu0
      %v3924 = vadd.f32 %v3827, %v3923
      %v3925 = vpop.f32.mrb[0].mxu0
      %v3926 = vpop.f32.mrb[0].mxu0
      %v3927 = vadd.f32 %v3830, %v3926
      %v3928 = vpop.f32.mrb[0].mxu0
      %3929 = vmatprep.mubr.bf16.mxu0 0
      %3930 = vmatmul.mubr.bf16.gmra.mrb[0].mxu0 %v1087
      %v3931 = vpop.f32.mrb[0].mxu0
      %v3932 = vadd.f32 %v3835, %v3931
      %v3933 = vpop.f32.mrb[0].mxu0
      %v3934 = vpop.f32.mrb[0].mxu0
      %v3935 = vadd.f32 %v3838, %v3934
      %v3936 = vpop.f32.mrb[0].mxu0
      %3937 = vmatprep.mubr.bf16.mxu0 0
      %3938 = vmatmul.mubr.bf16.gmra.mrb[0].mxu0 %v1090
      %v3939 = vpop.f32.mrb[0].mxu0
      %v3940 = vadd.f32 %v3843, %v3939
      %v3941 = vpop.f32.mrb[0].mxu0
      %v3942 = vpop.f32.mrb[0].mxu0
      %v3943 = vadd.f32 %v3846, %v3942
      %v3944 = vpop.f32.mrb[0].mxu0
      %3945 = vmatprep.mubr.bf16.mxu0 0
      %3946 = vmatmul.mubr.bf16.gmra.mrb[0].mxu0 %v1093
      %v3947 = vpop.f32.mrb[0].mxu0
      %v3948 = vadd.f32 %v3851, %v3947
      %v3949 = vpop.f32.mrb[0].mxu0
      %v3950 = vpop.f32.mrb[0].mxu0
      %v3951 = vadd.f32 %v3854, %v3950
      %v3952 = vpop.f32.mrb[0].mxu0
      %3953 = vmatprep.mubr.bf16.mxu0 0
      %3954 = vmatmul.mubr.bf16.gmra.mrb[0].mxu0 %v1096
      %v3955 = vpop.f32.mrb[0].mxu0
      %v3956 = vadd.f32 %v3859, %v3955
      %v3957 = vpop.f32.mrb[0].mxu0
      %v3958 = vpop.f32.mrb[0].mxu0
      %v3959 = vadd.f32 %v3862, %v3958
      %v3960 = vpop.f32.mrb[0].mxu0
      %3961 = vmatprep.mubr.bf16.mxu0 0
      %3962 = vmatmul.mubr.bf16.gmra.mrb[0].mxu0 %v1099
      %v3963 = vpop.f32.mrb[0].mxu0
      %v3964 = vadd.f32 %v3867, %v3963
      %v3965 = vpop.f32.mrb[0].mxu0
      %v3966 = vpop.f32.mrb[0].mxu0
      %v3967 = vadd.f32 %v3870, %v3966
      %v3968 = vpop.f32.mrb[0].mxu0
      %3969 = vmatprep.mubr.bf16.mxu0 0
      %3970 = vmatmul.mubr.bf16.gmra.mrb[0].mxu0 %v1102
      %v3971 = vpop.f32.mrb[0].mxu0
      %v3972 = vadd.f32 %v3875, %v3971
      %v3973 = vpop.f32.mrb[0].mxu0
      %v3974 = vpop.f32.mrb[0].mxu0
      %v3975 = vadd.f32 %v3878, %v3974
      %v3976 = vpop.f32.mrb[0].mxu0
      %3977 = vmatprep.mubr.bf16.mxu0 0
      %3978 = vmatmul.mubr.bf16.gmra.mrb[0].mxu0 %v1105
      %v3979 = vpop.f32.mrb[0].mxu0
      %v3980 = vadd.f32 %v3883, %v3979
      %v3981 = vpop.f32.mrb[0].mxu0
      %v3982 = vpop.f32.mrb[0].mxu0
      %v3983 = vadd.f32 %v3886, %v3982
      %v3984 = vpop.f32.mrb[0].mxu0
      %3985 = vdwg.mxu0
      %v3986 = vmax.f32 %v3924, 0.0
      %v3987 = vmax.f32 %v3927, 0.0
      %v3988 = vmax.f32 %v3932, 0.0
      %v3989 = vmax.f32 %v3935, 0.0
      %v3990 = vmax.f32 %v3940, 0.0
      %v3991 = vmax.f32 %v3943, 0.0
      %v3992 = vmax.f32 %v3948, 0.0
      %v3993 = vmax.f32 %v3951, 0.0
      %v3994 = vmax.f32 %v3956, 0.0
      %v3995 = vmax.f32 %v3959, 0.0
      %v3996 = vmax.f32 %v3964, 0.0
      %v3997 = vmax.f32 %v3967, 0.0
      %v3998 = vmax.f32 %v3972, 0.0
      %v3999 = vmax.f32 %v3975, 0.0
      %v4000 = vmax.f32 %v3980, 0.0
      %v4001 = vmax.f32 %v3983, 0.0
      %s4002 = sadd.s32 %s3189, 1
      %s4003 = sld [smem:[#allocation3 + %s4002]]
      %p4004 = scmp.gt.s32.totalorder %s4003, 0
      %s4005 = scalar_select %p4004, %s4003, 0
      %p4006 = scmp.lt.s32.totalorder %s4005, 3
      %s4007 = scalar_select %p4006, %s4005, 3
      %s4008 = smul.u32 %s4007, 98
      %s4009 = smul.addr %s4008, 4
      %s4010 = scalar_lea.vmem %s2, %s4009
      %v4011 = vld [vmem:[%s4010] sm:$0xf]
      %v4012 = vld [vmem:[%s4010 + $0x4] sm:$0xf]
      %v4013 = vld [vmem:[%s4010 + $0x8] sm:$0xf]
      %v4014 = vld [vmem:[%s4010 + $0xc] sm:$0xf]
      %v4015 = vld [vmem:[%s4010 + $0x10] sm:$0xf]
      %v4016 = vld [vmem:[%s4010 + $0x14] sm:$0xf]
      %v4017 = vld [vmem:[%s4010 + $0x18] sm:$0xf]
      %v4018 = vld [vmem:[%s4010 + $0x1c] sm:$0xf]
      %v4019 = vld [vmem:[%s4010 + $0x20] sm:$0xf]
      %v4020 = vld [vmem:[%s4010 + $0x24] sm:$0xf]
      %v4021 = vld [vmem:[%s4010 + $0x28] sm:$0xf]
      %v4022 = vld [vmem:[%s4010 + $0x2c] sm:$0xf]
      %v4023 = vld [vmem:[%s4010 + $0x30] sm:$0xf]
      %v4024 = vld [vmem:[%s4010 + $0x34] sm:$0xf]
      %v4025 = vld [vmem:[%s4010 + $0x38] sm:$0xf]
      %v4026 = vld [vmem:[%s4010 + $0x3c] sm:$0xf]
      %v4027 = vld [vmem:[%s4010 + $0x40] sm:$0xf]
      %v4028 = vld [vmem:[%s4010 + $0x44] sm:$0xf]
      %v4029 = vld [vmem:[%s4010 + $0x48] sm:$0xf]
      %v4030 = vld [vmem:[%s4010 + $0x4c] sm:$0xf]
      %v4031 = vld [vmem:[%s4010 + $0x50] sm:$0xf]
      %v4032 = vld [vmem:[%s4010 + $0x54] sm:$0xf]
      %v4033 = vld [vmem:[%s4010 + $0x58] sm:$0xf]
      %v4034 = vld [vmem:[%s4010 + $0x5c] sm:$0xf]
      %v4035 = vld [vmem:[%s4010 + $0x60] sm:$0xf]
      %v4036 = vld [vmem:[%s4010 + $0x64] sm:$0xf]
      %v4037 = vld [vmem:[%s4010 + $0x68] sm:$0xf]
      %v4038 = vld [vmem:[%s4010 + $0x6c] sm:$0xf]
      %v4039 = vld [vmem:[%s4010 + $0x70] sm:$0xf]
      %v4040 = vld [vmem:[%s4010 + $0x74] sm:$0xf]
      %v4041 = vld [vmem:[%s4010 + $0x78] sm:$0xf]
      %v4042 = vld [vmem:[%s4010 + $0x7c] sm:$0xf]
      %v4043 = vld [vmem:[%s4010 + $0x80] sm:$0xf]
      %v4044 = vld [vmem:[%s4010 + $0x84] sm:$0xf]
      %v4045 = vld [vmem:[%s4010 + $0x88] sm:$0xf]
      %v4046 = vld [vmem:[%s4010 + $0x8c] sm:$0xf]
      %v4047 = vld [vmem:[%s4010 + $0x90] sm:$0xf]
      %v4048 = vld [vmem:[%s4010 + $0x94] sm:$0xf]
      %v4049 = vld [vmem:[%s4010 + $0x98] sm:$0xf]
      %v4050 = vld [vmem:[%s4010 + $0x9c] sm:$0xf]
      %v4051 = vld [vmem:[%s4010 + $0xa0] sm:$0xf]
      %v4052 = vld [vmem:[%s4010 + $0xa4] sm:$0xf]
      %v4053 = vld [vmem:[%s4010 + $0xa8] sm:$0xf]
      %v4054 = vld [vmem:[%s4010 + $0xac] sm:$0xf]
      %v4055 = vld [vmem:[%s4010 + $0xb0] sm:$0xf]
      %v4056 = vld [vmem:[%s4010 + $0xb4] sm:$0xf]
      %v4057 = vld [vmem:[%s4010 + $0xb8] sm:$0xf]
      %v4058 = vld [vmem:[%s4010 + $0xbc] sm:$0xf]
      %v4059 = vld [vmem:[%s4010 + $0xc0] sm:$0xf]
      %v4060 = vld [vmem:[%s4010 + $0xc4] sm:$0xf]
      %v4061 = vld [vmem:[%s4010 + $0xc8] sm:$0xf]
      %v4062 = vld [vmem:[%s4010 + $0xcc] sm:$0xf]
      %v4063 = vld [vmem:[%s4010 + $0xd0] sm:$0xf]
      %v4064 = vld [vmem:[%s4010 + $0xd4] sm:$0xf]
      %v4065 = vld [vmem:[%s4010 + $0xd8] sm:$0xf]
      %v4066 = vld [vmem:[%s4010 + $0xdc] sm:$0xf]
      %v4067 = vld [vmem:[%s4010 + $0xe0] sm:$0xf]
      %v4068 = vld [vmem:[%s4010 + $0xe4] sm:$0xf]
      %v4069 = vld [vmem:[%s4010 + $0xe8] sm:$0xf]
      %v4070 = vld [vmem:[%s4010 + $0xec] sm:$0xf]
      %v4071 = vld [vmem:[%s4010 + $0xf0] sm:$0xf]
      %v4072 = vld [vmem:[%s4010 + $0xf4] sm:$0xf]
      %v4073 = vld [vmem:[%s4010 + $0xf8] sm:$0xf]
      %v4074 = vld [vmem:[%s4010 + $0xfc] sm:$0xf]
      %v4075 = vld [vmem:[%s4010 + $0x100] sm:$0xf]
      %v4076 = vld [vmem:[%s4010 + $0x104] sm:$0xf]
      %v4077 = vld [vmem:[%s4010 + $0x108] sm:$0xf]
      %v4078 = vld [vmem:[%s4010 + $0x10c] sm:$0xf]
      %v4079 = vld [vmem:[%s4010 + $0x110] sm:$0xf]
      %v4080 = vld [vmem:[%s4010 + $0x114] sm:$0xf]
      %v4081 = vld [vmem:[%s4010 + $0x118] sm:$0xf]
      %v4082 = vld [vmem:[%s4010 + $0x11c] sm:$0xf]
      %v4083 = vld [vmem:[%s4010 + $0x120] sm:$0xf]
      %v4084 = vld [vmem:[%s4010 + $0x124] sm:$0xf]
      %v4085 = vld [vmem:[%s4010 + $0x128] sm:$0xf]
      %v4086 = vld [vmem:[%s4010 + $0x12c] sm:$0xf]
      %v4087 = vld [vmem:[%s4010 + $0x130] sm:$0xf]
      %v4088 = vld [vmem:[%s4010 + $0x134] sm:$0xf]
      %v4089 = vld [vmem:[%s4010 + $0x138] sm:$0xf]
      %v4090 = vld [vmem:[%s4010 + $0x13c] sm:$0xf]
      %v4091 = vld [vmem:[%s4010 + $0x140] sm:$0xf]
      %v4092 = vld [vmem:[%s4010 + $0x144] sm:$0xf]
      %v4093 = vld [vmem:[%s4010 + $0x148] sm:$0xf]
      %v4094 = vld [vmem:[%s4010 + $0x14c] sm:$0xf]
      %v4095 = vld [vmem:[%s4010 + $0x150] sm:$0xf]
      %v4096 = vld [vmem:[%s4010 + $0x154] sm:$0xf]
      %v4097 = vld [vmem:[%s4010 + $0x158] sm:$0xf]
      %v4098 = vld [vmem:[%s4010 + $0x15c] sm:$0xf]
      %v4099 = vld [vmem:[%s4010 + $0x160] sm:$0xf]
      %v4100 = vld [vmem:[%s4010 + $0x164] sm:$0xf]
      %v4101 = vld [vmem:[%s4010 + $0x168] sm:$0xf]
      %v4102 = vld [vmem:[%s4010 + $0x16c] sm:$0xf]
      %v4103 = vld [vmem:[%s4010 + $0x170] sm:$0xf]
      %v4104 = vld [vmem:[%s4010 + $0x174] sm:$0xf]
      %v4105 = vld [vmem:[%s4010 + $0x178] sm:$0xf]
      %v4106 = vld [vmem:[%s4010 + $0x17c] sm:$0xf]
      %v4107 = vld [vmem:[%s4010 + $0x180] sm:$0xf]
      %v4108 = vld [vmem:[%s4010 + $0x184] sm:$0xf]
      %s4109 = scalar_lea.vmem %s3, %s4007
      %v4110 = vld [vmem:[%s4109] sm:$0x1]
      %v4112 = vlaneseq
      %v4113 = vshrl.u32 %v4112, 7
      %v4114 = vsub.s32 0, %v4113
      %v4115 = vrot.slane %v4110, %v4114
      %v4215 = vunpack.c.l.b16 %v4011
      %v4216 = vunpack.c.l.b16 %v4012
      %v4217 = vunpack.c.l.b16 %v4013
      %v4218 = vunpack.c.l.b16 %v4014
      %v4219 = vunpack.c.l.b16 %v4015
      %v4220 = vunpack.c.l.b16 %v4016
      %v4221 = vunpack.c.l.b16 %v4017
      %v4222 = vunpack.c.l.b16 %v4018
      %v4223 = vunpack.c.l.b16 %v4019
      %v4224 = vunpack.c.l.b16 %v4020
      %v4225 = vunpack.c.l.b16 %v4021
      %v4226 = vunpack.c.l.b16 %v4022
      %v4227 = vunpack.c.l.b16 %v4023
      %v4228 = vunpack.c.l.b16 %v4024
      %v4229 = vunpack.c.l.b16 %v4025
      %v4230 = vunpack.c.l.b16 %v4026
      %v4231 = vunpack.c.l.b16 %v4027
      %v4232 = vunpack.c.l.b16 %v4028
      %v4233 = vunpack.c.l.b16 %v4029
      %v4234 = vunpack.c.l.b16 %v4030
      %v4235 = vunpack.c.l.b16 %v4031
      %v4236 = vunpack.c.l.b16 %v4032
      %v4237 = vunpack.c.l.b16 %v4033
      %v4238 = vunpack.c.l.b16 %v4034
      %v4239 = vunpack.c.l.b16 %v4035
      %v4240 = vunpack.c.l.b16 %v4036
      %v4241 = vunpack.c.l.b16 %v4037
      %v4242 = vunpack.c.l.b16 %v4038
      %v4243 = vunpack.c.l.b16 %v4039
      %v4244 = vunpack.c.l.b16 %v4040
      %v4245 = vunpack.c.l.b16 %v4041
      %v4246 = vunpack.c.l.b16 %v4042
      %v4247 = vunpack.c.l.b16 %v4043
      %v4248 = vunpack.c.l.b16 %v4044
      %v4249 = vunpack.c.l.b16 %v4045
      %v4250 = vunpack.c.l.b16 %v4046
      %v4251 = vunpack.c.l.b16 %v4047
      %v4252 = vunpack.c.l.b16 %v4048
      %v4253 = vunpack.c.l.b16 %v4049
      %v4254 = vunpack.c.l.b16 %v4050
      %v4255 = vunpack.c.l.b16 %v4051
      %v4256 = vunpack.c.l.b16 %v4052
      %v4257 = vunpack.c.l.b16 %v4053
      %v4258 = vunpack.c.l.b16 %v4054
      %v4259 = vunpack.c.l.b16 %v4055
      %v4260 = vunpack.c.l.b16 %v4056
      %v4261 = vunpack.c.l.b16 %v4057
      %v4262 = vunpack.c.l.b16 %v4058
      %v4263 = vunpack.c.l.b16 %v4059
      %v4264 = vunpack.c.l.b16 %v4060
      %v4265 = vunpack.c.l.b16 %v4061
      %v4266 = vunpack.c.l.b16 %v4062
      %v4267 = vunpack.c.l.b16 %v4063
      %v4268 = vunpack.c.l.b16 %v4064
      %v4269 = vunpack.c.l.b16 %v4065
      %v4270 = vunpack.c.l.b16 %v4066
      %v4271 = vunpack.c.l.b16 %v4067
      %v4272 = vunpack.c.l.b16 %v4068
      %v4273 = vunpack.c.l.b16 %v4069
      %v4274 = vunpack.c.l.b16 %v4070
      %v4275 = vunpack.c.l.b16 %v4071
      %v4276 = vunpack.c.l.b16 %v4072
      %v4277 = vunpack.c.l.b16 %v4073
      %v4278 = vunpack.c.l.b16 %v4074
      %v4279 = vunpack.c.l.b16 %v4075
      %v4280 = vunpack.c.l.b16 %v4076
      %v4281 = vunpack.c.l.b16 %v4077
      %v4282 = vunpack.c.l.b16 %v4078
      %v4283 = vunpack.c.l.b16 %v4079
      %v4284 = vunpack.c.l.b16 %v4080
      %v4285 = vunpack.c.l.b16 %v4081
      %v4286 = vunpack.c.l.b16 %v4082
      %v4287 = vunpack.c.l.b16 %v4083
      %v4288 = vunpack.c.l.b16 %v4084
      %v4289 = vunpack.c.l.b16 %v4085
      %v4290 = vunpack.c.l.b16 %v4086
      %v4291 = vunpack.c.l.b16 %v4087
      %v4292 = vunpack.c.l.b16 %v4088
      %v4293 = vunpack.c.l.b16 %v4089
      %v4294 = vunpack.c.l.b16 %v4090
      %v4295 = vunpack.c.l.b16 %v4091
      %v4296 = vunpack.c.l.b16 %v4092
      %v4297 = vunpack.c.l.b16 %v4093
      %v4298 = vunpack.c.l.b16 %v4094
      %v4299 = vunpack.c.l.b16 %v4095
      %v4300 = vunpack.c.l.b16 %v4096
      %v4301 = vunpack.c.l.b16 %v4097
      %v4302 = vunpack.c.l.b16 %v4098
      %v4303 = vunpack.c.l.b16 %v4099
      %v4304 = vunpack.c.l.b16 %v4100
      %v4305 = vunpack.c.l.b16 %v4101
      %v4306 = vunpack.c.l.b16 %v4102
      %v4307 = vunpack.c.l.b16 %v4103
      %v4308 = vunpack.c.l.b16 %v4104
      %v4309 = vunpack.c.l.b16 %v4105
      %v4310 = vunpack.c.l.b16 %v4106
      %v4311 = vunpack.c.l.b16 %v4107
      %v4312 = vunpack.c.l.b16 %v4108
      %v4313 = vpack.c.b16 %v4216, %v4215
      %v4314 = vpack.c.b16 %v4218, %v4217
      %v4315 = vpack.c.b16 %v4220, %v4219
      %v4316 = vpack.c.b16 %v4222, %v4221
      %v4317 = vpack.c.b16 %v4224, %v4223
      %v4318 = vpack.c.b16 %v4226, %v4225
      %v4319 = vpack.c.b16 %v4228, %v4227
      %v4320 = vpack.c.b16 %v4230, %v4229
      %v4321 = vpack.c.b16 %v4232, %v4231
      %v4322 = vpack.c.b16 %v4234, %v4233
      %v4323 = vpack.c.b16 %v4236, %v4235
      %v4324 = vpack.c.b16 %v4238, %v4237
      %v4325 = vpack.c.b16 %v4240, %v4239
      %v4326 = vpack.c.b16 %v4242, %v4241
      %v4327 = vpack.c.b16 %v4244, %v4243
      %v4328 = vpack.c.b16 %v4246, %v4245
      %v4329 = vpack.c.b16 %v4248, %v4247
      %v4330 = vpack.c.b16 %v4250, %v4249
      %v4331 = vpack.c.b16 %v4252, %v4251
      %v4332 = vpack.c.b16 %v4254, %v4253
      %v4333 = vpack.c.b16 %v4256, %v4255
      %v4334 = vpack.c.b16 %v4258, %v4257
      %v4335 = vpack.c.b16 %v4260, %v4259
      %v4336 = vpack.c.b16 %v4262, %v4261
      %v4337 = vpack.c.b16 %v4264, %v4263
      %v4338 = vpack.c.b16 %v4266, %v4265
      %v4339 = vpack.c.b16 %v4268, %v4267
      %v4340 = vpack.c.b16 %v4270, %v4269
      %v4341 = vpack.c.b16 %v4272, %v4271
      %v4342 = vpack.c.b16 %v4274, %v4273
      %v4343 = vpack.c.b16 %v4276, %v4275
      %v4344 = vpack.c.b16 %v4278, %v4277
      %v4345 = vpack.c.b16 %v4280, %v4279
      %v4346 = vpack.c.b16 %v4282, %v4281
      %v4347 = vpack.c.b16 %v4284, %v4283
      %v4348 = vpack.c.b16 %v4286, %v4285
      %v4349 = vpack.c.b16 %v4288, %v4287
      %v4350 = vpack.c.b16 %v4290, %v4289
      %v4351 = vpack.c.b16 %v4292, %v4291
      %v4352 = vpack.c.b16 %v4294, %v4293
      %v4353 = vpack.c.b16 %v4296, %v4295
      %v4354 = vpack.c.b16 %v4298, %v4297
      %v4355 = vpack.c.b16 %v4300, %v4299
      %v4356 = vpack.c.b16 %v4302, %v4301
      %v4357 = vpack.c.b16 %v4304, %v4303
      %v4358 = vpack.c.b16 %v4306, %v4305
      %v4359 = vpack.c.b16 %v4308, %v4307
      %v4360 = vpack.c.b16 %v4310, %v4309
      %v4361 = vpack.c.b16 %v4312, %v4311
      %4411 = vmatprep.subr.bf16.mxu0 0
      %4412 = vmatpush1.bf16.msra.mxu0 %v4313
      %4413 = vmatprep.subr.bf16.mxu0 0
      %4414 = vmatpush1.bf16.msra.mxu0 %v4314
      %4415 = vmatprep.subr.bf16.mxu0 0
      %4416 = vmatpush1.bf16.msra.mxu0 %v4315
      %4417 = vmatprep.subr.bf16.mxu0 0
      %4418 = vmatpush1.bf16.msra.mxu0 %v4316
      %4419 = vmatprep.subr.bf16.mxu0 0
      %4420 = vmatpush1.bf16.msra.mxu0 %v4317
      %4421 = vmatprep.subr.bf16.mxu0 0
      %4422 = vmatpush1.bf16.msra.mxu0 %v4318
      %4423 = vmatprep.subr.bf16.mxu0 0
      %4424 = vmatpush1.bf16.msra.mxu0 %v4319
      %4425 = vmatprep.subr.bf16.mxu0 0
      %4426 = vmatpush1.bf16.msra.mxu0 %v4320
      %4427 = vmatprep.subr.bf16.mxu0 0
      %4428 = vmatpush1.bf16.msra.mxu0 %v4321
      %4429 = vmatprep.subr.bf16.mxu0 0
      %4430 = vmatpush1.bf16.msra.mxu0 %v4322
      %4431 = vmatprep.subr.bf16.mxu0 0
      %4432 = vmatpush1.bf16.msra.mxu0 %v4323
      %4433 = vmatprep.subr.bf16.mxu0 0
      %4434 = vmatpush1.bf16.msra.mxu0 %v4324
      %4435 = vmatprep.subr.bf16.mxu0 0
      %4436 = vmatpush1.bf16.msra.mxu0 %v4325
      %4437 = vmatprep.subr.bf16.mxu0 0
      %4438 = vmatpush1.bf16.msra.mxu0 %v4326
      %4439 = vmatprep.subr.bf16.mxu0 0
      %4440 = vmatpush1.bf16.msra.mxu0 %v4327
      %4441 = vmatprep.subr.bf16.mxu0 0
      %4442 = vmatpush1.bf16.msra.mxu0 %v4328
      %4443 = vmatprep.mubr.bf16.mxu0 %v685
      %4444 = vmatmul.mubr.bf16.gmra.mrb[0].mxu0 %v684
      %v4445 = vpop.f32.mrb[0].mxu0
      %v4446 = vadd.f32 %v4115, %v4445
      %v4447 = vpop.f32.mrb[0].mxu0
      %v4448 = vpop.f32.mrb[0].mxu0
      %v4449 = vadd.f32 %v4115, %v4448
      %v4450 = vpop.f32.mrb[0].mxu0
      %4451 = vmatprep.mubr.bf16.mxu0 %v692
      %4452 = vmatmul.mubr.bf16.gmra.mrb[0].mxu0 %v691
      %v4453 = vpop.f32.mrb[0].mxu0
      %v4454 = vadd.f32 %v4115, %v4453
      %v4455 = vpop.f32.mrb[0].mxu0
      %v4456 = vpop.f32.mrb[0].mxu0
      %v4457 = vadd.f32 %v4115, %v4456
      %v4458 = vpop.f32.mrb[0].mxu0
      %4459 = vmatprep.mubr.bf16.mxu0 %v699
      %4460 = vmatmul.mubr.bf16.gmra.mrb[0].mxu0 %v698
      %v4461 = vpop.f32.mrb[0].mxu0
      %v4462 = vadd.f32 %v4115, %v4461
      %v4463 = vpop.f32.mrb[0].mxu0
      %v4464 = vpop.f32.mrb[0].mxu0
      %v4465 = vadd.f32 %v4115, %v4464
      %v4466 = vpop.f32.mrb[0].mxu0
      %4467 = vmatprep.mubr.bf16.mxu0 %v706
      %4468 = vmatmul.mubr.bf16.gmra.mrb[0].mxu0 %v705
      %v4469 = vpop.f32.mrb[0].mxu0
      %v4470 = vadd.f32 %v4115, %v4469
      %v4471 = vpop.f32.mrb[0].mxu0
      %v4472 = vpop.f32.mrb[0].mxu0
      %v4473 = vadd.f32 %v4115, %v4472
      %v4474 = vpop.f32.mrb[0].mxu0
      %4475 = vmatprep.mubr.bf16.mxu0 %v713
      %4476 = vmatmul.mubr.bf16.gmra.mrb[0].mxu0 %v712
      %v4477 = vpop.f32.mrb[0].mxu0
      %v4478 = vadd.f32 %v4115, %v4477
      %v4479 = vpop.f32.mrb[0].mxu0
      %v4480 = vpop.f32.mrb[0].mxu0
      %v4481 = vadd.f32 %v4115, %v4480
      %v4482 = vpop.f32.mrb[0].mxu0
      %4483 = vmatprep.mubr.bf16.mxu0 %v720
      %4484 = vmatmul.mubr.bf16.gmra.mrb[0].mxu0 %v719
      %v4485 = vpop.f32.mrb[0].mxu0
      %v4486 = vadd.f32 %v4115, %v4485
      %v4487 = vpop.f32.mrb[0].mxu0
      %v4488 = vpop.f32.mrb[0].mxu0
      %v4489 = vadd.f32 %v4115, %v4488
      %v4490 = vpop.f32.mrb[0].mxu0
      %4491 = vmatprep.mubr.bf16.mxu0 %v727
      %4492 = vmatmul.mubr.bf16.gmra.mrb[0].mxu0 %v726
      %v4493 = vpop.f32.mrb[0].mxu0
      %v4494 = vadd.f32 %v4115, %v4493
      %v4495 = vpop.f32.mrb[0].mxu0
      %v4496 = vpop.f32.mrb[0].mxu0
      %v4497 = vadd.f32 %v4115, %v4496
      %v4498 = vpop.f32.mrb[0].mxu0
      %4499 = vmatprep.mubr.bf16.mxu0 %v734
      %4500 = vmatmul.mubr.bf16.gmra.mrb[0].mxu0 %v733
      %v4501 = vpop.f32.mrb[0].mxu0
      %v4502 = vadd.f32 %v4115, %v4501
      %v4503 = vpop.f32.mrb[0].mxu0
      %v4504 = vpop.f32.mrb[0].mxu0
      %v4505 = vadd.f32 %v4115, %v4504
      %v4506 = vpop.f32.mrb[0].mxu0
      %4507 = vdwg.mxu0
      %4508 = vmatprep.subr.bf16.mxu0 0
      %4509 = vmatpush1.bf16.msra.mxu0 %v4329
      %4510 = vmatprep.subr.bf16.mxu0 0
      %4511 = vmatpush1.bf16.msra.mxu0 %v4330
      %4512 = vmatprep.subr.bf16.mxu0 0
      %4513 = vmatpush1.bf16.msra.mxu0 %v4331
      %4514 = vmatprep.subr.bf16.mxu0 0
      %4515 = vmatpush1.bf16.msra.mxu0 %v4332
      %4516 = vmatprep.subr.bf16.mxu0 0
      %4517 = vmatpush1.bf16.msra.mxu0 %v4333
      %4518 = vmatprep.subr.bf16.mxu0 0
      %4519 = vmatpush1.bf16.msra.mxu0 %v4334
      %4520 = vmatprep.subr.bf16.mxu0 0
      %4521 = vmatpush1.bf16.msra.mxu0 %v4335
      %4522 = vmatprep.subr.bf16.mxu0 0
      %4523 = vmatpush1.bf16.msra.mxu0 %v4336
      %4524 = vmatprep.subr.bf16.mxu0 0
      %4525 = vmatpush1.bf16.msra.mxu0 %v4337
      %4526 = vmatprep.subr.bf16.mxu0 0
      %4527 = vmatpush1.bf16.msra.mxu0 %v4338
      %4528 = vmatprep.subr.bf16.mxu0 0
      %4529 = vmatpush1.bf16.msra.mxu0 %v4339
      %4530 = vmatprep.subr.bf16.mxu0 0
      %4531 = vmatpush1.bf16.msra.mxu0 %v4340
      %4532 = vmatprep.subr.bf16.mxu0 0
      %4533 = vmatpush1.bf16.msra.mxu0 %v4341
      %4534 = vmatprep.subr.bf16.mxu0 0
      %4535 = vmatpush1.bf16.msra.mxu0 %v4342
      %4536 = vmatprep.subr.bf16.mxu0 0
      %4537 = vmatpush1.bf16.msra.mxu0 %v4343
      %4538 = vmatprep.subr.bf16.mxu0 0
      %4539 = vmatpush1.bf16.msra.mxu0 %v4344
      %4540 = vmatprep.mubr.bf16.mxu0 %v687
      %4541 = vmatmul.mubr.bf16.gmra.mrb[0].mxu0 %v686
      %v4542 = vpop.f32.mrb[0].mxu0
      %v4543 = vadd.f32 %v4446, %v4542
      %v4544 = vpop.f32.mrb[0].mxu0
      %v4545 = vpop.f32.mrb[0].mxu0
      %v4546 = vadd.f32 %v4449, %v4545
      %v4547 = vpop.f32.mrb[0].mxu0
      %4548 = vmatprep.mubr.bf16.mxu0 %v694
      %4549 = vmatmul.mubr.bf16.gmra.mrb[0].mxu0 %v693
      %v4550 = vpop.f32.mrb[0].mxu0
      %v4551 = vadd.f32 %v4454, %v4550
      %v4552 = vpop.f32.mrb[0].mxu0
      %v4553 = vpop.f32.mrb[0].mxu0
      %v4554 = vadd.f32 %v4457, %v4553
      %v4555 = vpop.f32.mrb[0].mxu0
      %4556 = vmatprep.mubr.bf16.mxu0 %v701
      %4557 = vmatmul.mubr.bf16.gmra.mrb[0].mxu0 %v700
      %v4558 = vpop.f32.mrb[0].mxu0
      %v4559 = vadd.f32 %v4462, %v4558
      %v4560 = vpop.f32.mrb[0].mxu0
      %v4561 = vpop.f32.mrb[0].mxu0
      %v4562 = vadd.f32 %v4465, %v4561
      %v4563 = vpop.f32.mrb[0].mxu0
      %4564 = vmatprep.mubr.bf16.mxu0 %v708
      %4565 = vmatmul.mubr.bf16.gmra.mrb[0].mxu0 %v707
      %v4566 = vpop.f32.mrb[0].mxu0
      %v4567 = vadd.f32 %v4470, %v4566
      %v4568 = vpop.f32.mrb[0].mxu0
      %v4569 = vpop.f32.mrb[0].mxu0
      %v4570 = vadd.f32 %v4473, %v4569
      %v4571 = vpop.f32.mrb[0].mxu0
      %4572 = vmatprep.mubr.bf16.mxu0 %v715
      %4573 = vmatmul.mubr.bf16.gmra.mrb[0].mxu0 %v714
      %v4574 = vpop.f32.mrb[0].mxu0
      %v4575 = vadd.f32 %v4478, %v4574
      %v4576 = vpop.f32.mrb[0].mxu0
      %v4577 = vpop.f32.mrb[0].mxu0
      %v4578 = vadd.f32 %v4481, %v4577
      %v4579 = vpop.f32.mrb[0].mxu0
      %4580 = vmatprep.mubr.bf16.mxu0 %v722
      %4581 = vmatmul.mubr.bf16.gmra.mrb[0].mxu0 %v721
      %v4582 = vpop.f32.mrb[0].mxu0
      %v4583 = vadd.f32 %v4486, %v4582
      %v4584 = vpop.f32.mrb[0].mxu0
      %v4585 = vpop.f32.mrb[0].mxu0
      %v4586 = vadd.f32 %v4489, %v4585
      %v4587 = vpop.f32.mrb[0].mxu0
      %4588 = vmatprep.mubr.bf16.mxu0 %v729
      %4589 = vmatmul.mubr.bf16.gmra.mrb[0].mxu0 %v728
      %v4590 = vpop.f32.mrb[0].mxu0
      %v4591 = vadd.f32 %v4494, %v4590
      %v4592 = vpop.f32.mrb[0].mxu0
      %v4593 = vpop.f32.mrb[0].mxu0
      %v4594 = vadd.f32 %v4497, %v4593
      %v4595 = vpop.f32.mrb[0].mxu0
      %4596 = vmatprep.mubr.bf16.mxu0 %v736
      %4597 = vmatmul.mubr.bf16.gmra.mrb[0].mxu0 %v735
      %v4598 = vpop.f32.mrb[0].mxu0
      %v4599 = vadd.f32 %v4502, %v4598
      %v4600 = vpop.f32.mrb[0].mxu0
      %v4601 = vpop.f32.mrb[0].mxu0
      %v4602 = vadd.f32 %v4505, %v4601
      %v4603 = vpop.f32.mrb[0].mxu0
      %4604 = vdwg.mxu0
      %4605 = vmatprep.subr.bf16.mxu0 0
      %4606 = vmatpush1.bf16.msra.mxu0 %v4345
      %4607 = vmatprep.subr.bf16.mxu0 0
      %4608 = vmatpush1.bf16.msra.mxu0 %v4346
      %4609 = vmatprep.subr.bf16.mxu0 0
      %4610 = vmatpush1.bf16.msra.mxu0 %v4347
      %4611 = vmatprep.subr.bf16.mxu0 0
      %4612 = vmatpush1.bf16.msra.mxu0 %v4348
      %4613 = vmatprep.subr.bf16.mxu0 0
      %4614 = vmatpush1.bf16.msra.mxu0 %v4349
      %4615 = vmatprep.subr.bf16.mxu0 0
      %4616 = vmatpush1.bf16.msra.mxu0 %v4350
      %4617 = vmatprep.subr.bf16.mxu0 0
      %4618 = vmatpush1.bf16.msra.mxu0 %v4351
      %4619 = vmatprep.subr.bf16.mxu0 0
      %4620 = vmatpush1.bf16.msra.mxu0 %v4352
      %4621 = vmatprep.subr.bf16.mxu0 0
      %4622 = vmatpush1.bf16.msra.mxu0 %v4353
      %4623 = vmatprep.subr.bf16.mxu0 0
      %4624 = vmatpush1.bf16.msra.mxu0 %v4354
      %4625 = vmatprep.subr.bf16.mxu0 0
      %4626 = vmatpush1.bf16.msra.mxu0 %v4355
      %4627 = vmatprep.subr.bf16.mxu0 0
      %4628 = vmatpush1.bf16.msra.mxu0 %v4356
      %4629 = vmatprep.subr.bf16.mxu0 0
      %4630 = vmatpush1.bf16.msra.mxu0 %v4357
      %4631 = vmatprep.subr.bf16.mxu0 0
      %4632 = vmatpush1.bf16.msra.mxu0 %v4358
      %4633 = vmatprep.subr.bf16.mxu0 0
      %4634 = vmatpush1.bf16.msra.mxu0 %v4359
      %4635 = vmatprep.subr.bf16.mxu0 0
      %4636 = vmatpush1.bf16.msra.mxu0 %v4360
      %4637 = vmatprep.mubr.bf16.mxu0 %v689
      %4638 = vmatmul.mubr.bf16.gmra.mrb[0].mxu0 %v688
      %v4639 = vpop.f32.mrb[0].mxu0
      %v4640 = vadd.f32 %v4543, %v4639
      %v4641 = vpop.f32.mrb[0].mxu0
      %v4642 = vpop.f32.mrb[0].mxu0
      %v4643 = vadd.f32 %v4546, %v4642
      %v4644 = vpop.f32.mrb[0].mxu0
      %4645 = vmatprep.mubr.bf16.mxu0 %v696
      %4646 = vmatmul.mubr.bf16.gmra.mrb[0].mxu0 %v695
      %v4647 = vpop.f32.mrb[0].mxu0
      %v4648 = vadd.f32 %v4551, %v4647
      %v4649 = vpop.f32.mrb[0].mxu0
      %v4650 = vpop.f32.mrb[0].mxu0
      %v4651 = vadd.f32 %v4554, %v4650
      %v4652 = vpop.f32.mrb[0].mxu0
      %4653 = vmatprep.mubr.bf16.mxu0 %v703
      %4654 = vmatmul.mubr.bf16.gmra.mrb[0].mxu0 %v702
      %v4655 = vpop.f32.mrb[0].mxu0
      %v4656 = vadd.f32 %v4559, %v4655
      %v4657 = vpop.f32.mrb[0].mxu0
      %v4658 = vpop.f32.mrb[0].mxu0
      %v4659 = vadd.f32 %v4562, %v4658
      %v4660 = vpop.f32.mrb[0].mxu0
      %4661 = vmatprep.mubr.bf16.mxu0 %v710
      %4662 = vmatmul.mubr.bf16.gmra.mrb[0].mxu0 %v709
      %v4663 = vpop.f32.mrb[0].mxu0
      %v4664 = vadd.f32 %v4567, %v4663
      %v4665 = vpop.f32.mrb[0].mxu0
      %v4666 = vpop.f32.mrb[0].mxu0
      %v4667 = vadd.f32 %v4570, %v4666
      %v4668 = vpop.f32.mrb[0].mxu0
      %4669 = vmatprep.mubr.bf16.mxu0 %v717
      %4670 = vmatmul.mubr.bf16.gmra.mrb[0].mxu0 %v716
      %v4671 = vpop.f32.mrb[0].mxu0
      %v4672 = vadd.f32 %v4575, %v4671
      %v4673 = vpop.f32.mrb[0].mxu0
      %v4674 = vpop.f32.mrb[0].mxu0
      %v4675 = vadd.f32 %v4578, %v4674
      %v4676 = vpop.f32.mrb[0].mxu0
      %4677 = vmatprep.mubr.bf16.mxu0 %v724
      %4678 = vmatmul.mubr.bf16.gmra.mrb[0].mxu0 %v723
      %v4679 = vpop.f32.mrb[0].mxu0
      %v4680 = vadd.f32 %v4583, %v4679
      %v4681 = vpop.f32.mrb[0].mxu0
      %v4682 = vpop.f32.mrb[0].mxu0
      %v4683 = vadd.f32 %v4586, %v4682
      %v4684 = vpop.f32.mrb[0].mxu0
      %4685 = vmatprep.mubr.bf16.mxu0 %v731
      %4686 = vmatmul.mubr.bf16.gmra.mrb[0].mxu0 %v730
      %v4687 = vpop.f32.mrb[0].mxu0
      %v4688 = vadd.f32 %v4591, %v4687
      %v4689 = vpop.f32.mrb[0].mxu0
      %v4690 = vpop.f32.mrb[0].mxu0
      %v4691 = vadd.f32 %v4594, %v4690
      %v4692 = vpop.f32.mrb[0].mxu0
      %4693 = vmatprep.mubr.bf16.mxu0 %v738
      %4694 = vmatmul.mubr.bf16.gmra.mrb[0].mxu0 %v737
      %v4695 = vpop.f32.mrb[0].mxu0
      %v4696 = vadd.f32 %v4599, %v4695
      %v4697 = vpop.f32.mrb[0].mxu0
      %v4698 = vpop.f32.mrb[0].mxu0
      %v4699 = vadd.f32 %v4602, %v4698
      %v4700 = vpop.f32.mrb[0].mxu0
      %4701 = vdwg.mxu0
      %4702 = vmatprep.subr.bf16.mxu0 0
      %4703 = vmatpush1.bf16.msra.mxu0 %v4361
      %4704 = vmatprep.subr.bf16.mxu0 0
      %4705 = vmatpush1.bf16.msra.mxu0 0
      %4706 = vmatprep.subr.bf16.mxu0 0
      %4707 = vmatpush1.bf16.msra.mxu0 0
      %4708 = vmatprep.subr.bf16.mxu0 0
      %4709 = vmatpush1.bf16.msra.mxu0 0
      %4710 = vmatprep.subr.bf16.mxu0 0
      %4711 = vmatpush1.bf16.msra.mxu0 0
      %4712 = vmatprep.subr.bf16.mxu0 0
      %4713 = vmatpush1.bf16.msra.mxu0 0
      %4714 = vmatprep.subr.bf16.mxu0 0
      %4715 = vmatpush1.bf16.msra.mxu0 0
      %4716 = vmatprep.subr.bf16.mxu0 0
      %4717 = vmatpush1.bf16.msra.mxu0 0
      %4718 = vmatprep.subr.bf16.mxu0 0
      %4719 = vmatpush1.bf16.msra.mxu0 0
      %4720 = vmatprep.subr.bf16.mxu0 0
      %4721 = vmatpush1.bf16.msra.mxu0 0
      %4722 = vmatprep.subr.bf16.mxu0 0
      %4723 = vmatpush1.bf16.msra.mxu0 0
      %4724 = vmatprep.subr.bf16.mxu0 0
      %4725 = vmatpush1.bf16.msra.mxu0 0
      %4726 = vmatprep.subr.bf16.mxu0 0
      %4727 = vmatpush1.bf16.msra.mxu0 0
      %4728 = vmatprep.subr.bf16.mxu0 0
      %4729 = vmatpush1.bf16.msra.mxu0 0
      %4730 = vmatprep.subr.bf16.mxu0 0
      %4731 = vmatpush1.bf16.msra.mxu0 0
      %4732 = vmatprep.subr.bf16.mxu0 0
      %4733 = vmatpush1.bf16.msra.mxu0 0
      %4734 = vmatprep.mubr.bf16.mxu0 0
      %4735 = vmatmul.mubr.bf16.gmra.mrb[0].mxu0 %v1084
      %v4736 = vpop.f32.mrb[0].mxu0
      %v4737 = vadd.f32 %v4640, %v4736
      %v4738 = vpop.f32.mrb[0].mxu0
      %v4739 = vpop.f32.mrb[0].mxu0
      %v4740 = vadd.f32 %v4643, %v4739
      %v4741 = vpop.f32.mrb[0].mxu0
      %4742 = vmatprep.mubr.bf16.mxu0 0
      %4743 = vmatmul.mubr.bf16.gmra.mrb[0].mxu0 %v1087
      %v4744 = vpop.f32.mrb[0].mxu0
      %v4745 = vadd.f32 %v4648, %v4744
      %v4746 = vpop.f32.mrb[0].mxu0
      %v4747 = vpop.f32.mrb[0].mxu0
      %v4748 = vadd.f32 %v4651, %v4747
      %v4749 = vpop.f32.mrb[0].mxu0
      %4750 = vmatprep.mubr.bf16.mxu0 0
      %4751 = vmatmul.mubr.bf16.gmra.mrb[0].mxu0 %v1090
      %v4752 = vpop.f32.mrb[0].mxu0
      %v4753 = vadd.f32 %v4656, %v4752
      %v4754 = vpop.f32.mrb[0].mxu0
      %v4755 = vpop.f32.mrb[0].mxu0
      %v4756 = vadd.f32 %v4659, %v4755
      %v4757 = vpop.f32.mrb[0].mxu0
      %4758 = vmatprep.mubr.bf16.mxu0 0
      %4759 = vmatmul.mubr.bf16.gmra.mrb[0].mxu0 %v1093
      %v4760 = vpop.f32.mrb[0].mxu0
      %v4761 = vadd.f32 %v4664, %v4760
      %v4762 = vpop.f32.mrb[0].mxu0
      %v4763 = vpop.f32.mrb[0].mxu0
      %v4764 = vadd.f32 %v4667, %v4763
      %v4765 = vpop.f32.mrb[0].mxu0
      %4766 = vmatprep.mubr.bf16.mxu0 0
      %4767 = vmatmul.mubr.bf16.gmra.mrb[0].mxu0 %v1096
      %v4768 = vpop.f32.mrb[0].mxu0
      %v4769 = vadd.f32 %v4672, %v4768
      %v4770 = vpop.f32.mrb[0].mxu0
      %v4771 = vpop.f32.mrb[0].mxu0
      %v4772 = vadd.f32 %v4675, %v4771
      %v4773 = vpop.f32.mrb[0].mxu0
      %4774 = vmatprep.mubr.bf16.mxu0 0
      %4775 = vmatmul.mubr.bf16.gmra.mrb[0].mxu0 %v1099
      %v4776 = vpop.f32.mrb[0].mxu0
      %v4777 = vadd.f32 %v4680, %v4776
      %v4778 = vpop.f32.mrb[0].mxu0
      %v4779 = vpop.f32.mrb[0].mxu0
      %v4780 = vadd.f32 %v4683, %v4779
      %v4781 = vpop.f32.mrb[0].mxu0
      %4782 = vmatprep.mubr.bf16.mxu0 0
      %4783 = vmatmul.mubr.bf16.gmra.mrb[0].mxu0 %v1102
      %v4784 = vpop.f32.mrb[0].mxu0
      %v4785 = vadd.f32 %v4688, %v4784
      %v4786 = vpop.f32.mrb[0].mxu0
      %v4787 = vpop.f32.mrb[0].mxu0
      %v4788 = vadd.f32 %v4691, %v4787
      %v4789 = vpop.f32.mrb[0].mxu0
      %4790 = vmatprep.mubr.bf16.mxu0 0
      %4791 = vmatmul.mubr.bf16.gmra.mrb[0].mxu0 %v1105
      %v4792 = vpop.f32.mrb[0].mxu0
      %v4793 = vadd.f32 %v4696, %v4792
      %v4794 = vpop.f32.mrb[0].mxu0
      %v4795 = vpop.f32.mrb[0].mxu0
      %v4796 = vadd.f32 %v4699, %v4795
      %v4797 = vpop.f32.mrb[0].mxu0
      %4798 = vdwg.mxu0
      %v4799 = vmax.f32 %v4737, 0.0
      %v4800 = vmax.f32 %v4740, 0.0
      %v4801 = vmax.f32 %v4745, 0.0
      %v4802 = vmax.f32 %v4748, 0.0
      %v4803 = vmax.f32 %v4753, 0.0
      %v4804 = vmax.f32 %v4756, 0.0
      %v4805 = vmax.f32 %v4761, 0.0
      %v4806 = vmax.f32 %v4764, 0.0
      %v4807 = vmax.f32 %v4769, 0.0
      %v4808 = vmax.f32 %v4772, 0.0
      %v4809 = vmax.f32 %v4777, 0.0
      %v4810 = vmax.f32 %v4780, 0.0
      %v4811 = vmax.f32 %v4785, 0.0
      %v4812 = vmax.f32 %v4788, 0.0
      %v4813 = vmax.f32 %v4793, 0.0
      %v4814 = vmax.f32 %v4796, 0.0
      %v4815 = vadd.f32 %v3986, %v4799
      %v4816 = vadd.f32 %v3987, %v4800
      %v4817 = vadd.f32 %v3988, %v4801
      %v4818 = vadd.f32 %v3989, %v4802
      %v4819 = vadd.f32 %v3990, %v4803
      %v4820 = vadd.f32 %v3991, %v4804
      %v4821 = vadd.f32 %v3992, %v4805
      %v4822 = vadd.f32 %v3993, %v4806
      %v4823 = vadd.f32 %v3994, %v4807
      %v4824 = vadd.f32 %v3995, %v4808
      %v4825 = vadd.f32 %v3996, %v4809
      %v4826 = vadd.f32 %v3997, %v4810
      %v4827 = vadd.f32 %v3998, %v4811
      %v4828 = vadd.f32 %v3999, %v4812
      %v4829 = vadd.f32 %v4000, %v4813
      %v4830 = vadd.f32 %v4001, %v4814
      %v4831 = vpack.c.bf16 %v4816, %v4815
      %v4832 = vpack.c.bf16 %v4818, %v4817
      %v4833 = vpack.c.bf16 %v4820, %v4819
      %v4834 = vpack.c.bf16 %v4822, %v4821
      %v4835 = vpack.c.bf16 %v4824, %v4823
      %v4836 = vpack.c.bf16 %v4826, %v4825
      %v4837 = vpack.c.bf16 %v4828, %v4827
      %v4838 = vpack.c.bf16 %v4830, %v4829
      %s4839 = smul.u32 %s3188, 3
      %s4840 = sadd.s32 %s4839, 1
      %s4841 = smul.u32 %s4840, 2
      %s4842 = sld [smem:[#allocation3 + %s4841]]
      %p4843 = scmp.gt.s32.totalorder %s4842, 0
      %s4844 = scalar_select %p4843, %s4842, 0
      %p4845 = scmp.lt.s32.totalorder %s4844, 3
      %s4846 = scalar_select %p4845, %s4844, 3
      %s4847 = smul.u32 %s4846, 4
      %s4848 = smul.addr %s4847, 4
      %s4849 = scalar_lea.vmem %s4, %s4848
      %v4850 = vld [vmem:[%s4849] sm:$0xf]
      %v4851 = vld [vmem:[%s4849 + $0x4] sm:$0xf]
      %v4852 = vld [vmem:[%s4849 + $0x8] sm:$0xf]
      %v4853 = vld [vmem:[%s4849 + $0xc] sm:$0xf]
      %s4854 = scalar_lea.vmem %s5, %s4846
      %v4855 = vld [vmem:[%s4854] sm:$0x1]
      %v4857 = vlaneseq
      %v4858 = vshrl.u32 %v4857, 7
      %v4859 = vsub.s32 0, %v4858
      %v4860 = vrot.slane %v4855, %v4859
      %v4866 = vunpack.c.l.b16 %v4850
      %v4867 = vunpack.c.l.b16 %v4851
      %v4868 = vunpack.c.l.b16 %v4852
      %v4869 = vunpack.c.l.b16 %v4853
      %v4870 = vpack.c.b16 %v4867, %v4866
      %v4871 = vpack.c.b16 %v4869, %v4868
      %v4875 = vsel %vm2383, %v4831, 0
      %v4878 = vsel %vm2383, %v4832, 0
      %v4881 = vsel %vm2383, %v4833, 0
      %v4884 = vsel %vm2383, %v4834, 0
      %v4887 = vsel %vm2383, %v4835, 0
      %v4890 = vsel %vm2383, %v4836, 0
      %v4893 = vsel %vm2383, %v4837, 0
      %v4896 = vsel %vm2383, %v4838, 0
      %4898 = vmatprep.subr.bf16.mxu0 0
      %4899 = vmatpush1.bf16.msra.mxu0 %v4870
      %4900 = vmatprep.subr.bf16.mxu0 0
      %4901 = vmatpush1.bf16.msra.mxu0 %v4871
      %4902 = vmatprep.subr.bf16.mxu0 0
      %4903 = vmatpush1.bf16.msra.mxu0 0
      %4904 = vmatprep.subr.bf16.mxu0 0
      %4905 = vmatpush1.bf16.msra.mxu0 0
      %4906 = vmatprep.subr.bf16.mxu0 0
      %4907 = vmatpush1.bf16.msra.mxu0 0
      %4908 = vmatprep.subr.bf16.mxu0 0
      %4909 = vmatpush1.bf16.msra.mxu0 0
      %4910 = vmatprep.subr.bf16.mxu0 0
      %4911 = vmatpush1.bf16.msra.mxu0 0
      %4912 = vmatprep.subr.bf16.mxu0 0
      %4913 = vmatpush1.bf16.msra.mxu0 0
      %4914 = vmatprep.subr.bf16.mxu0 0
      %4915 = vmatpush1.bf16.msra.mxu0 0
      %4916 = vmatprep.subr.bf16.mxu0 0
      %4917 = vmatpush1.bf16.msra.mxu0 0
      %4918 = vmatprep.subr.bf16.mxu0 0
      %4919 = vmatpush1.bf16.msra.mxu0 0
      %4920 = vmatprep.subr.bf16.mxu0 0
      %4921 = vmatpush1.bf16.msra.mxu0 0
      %4922 = vmatprep.subr.bf16.mxu0 0
      %4923 = vmatpush1.bf16.msra.mxu0 0
      %4924 = vmatprep.subr.bf16.mxu0 0
      %4925 = vmatpush1.bf16.msra.mxu0 0
      %4926 = vmatprep.subr.bf16.mxu0 0
      %4927 = vmatpush1.bf16.msra.mxu0 0
      %4928 = vmatprep.subr.bf16.mxu0 0
      %4929 = vmatpush1.bf16.msra.mxu0 0
      %4930 = vmatprep.mubr.bf16.mxu0 0
      %4931 = vmatmul.mubr.bf16.gmra.mrb[0].mxu0 %v4875
      %v4932 = vpop.f32.mrb[0].mxu0
      %v4933 = vadd.f32 %v4860, %v4932
      %v4934 = vpop.f32.mrb[0].mxu0
      %v4935 = vpop.f32.mrb[0].mxu0
      %v4936 = vadd.f32 %v4860, %v4935
      %v4937 = vpop.f32.mrb[0].mxu0
      %4938 = vmatprep.mubr.bf16.mxu0 0
      %4939 = vmatmul.mubr.bf16.gmra.mrb[0].mxu0 %v4878
      %v4940 = vpop.f32.mrb[0].mxu0
      %v4941 = vadd.f32 %v4860, %v4940
      %v4942 = vpop.f32.mrb[0].mxu0
      %v4943 = vpop.f32.mrb[0].mxu0
      %v4944 = vadd.f32 %v4860, %v4943
      %v4945 = vpop.f32.mrb[0].mxu0
      %4946 = vmatprep.mubr.bf16.mxu0 0
      %4947 = vmatmul.mubr.bf16.gmra.mrb[0].mxu0 %v4881
      %v4948 = vpop.f32.mrb[0].mxu0
      %v4949 = vadd.f32 %v4860, %v4948
      %v4950 = vpop.f32.mrb[0].mxu0
      %v4951 = vpop.f32.mrb[0].mxu0
      %v4952 = vadd.f32 %v4860, %v4951
      %v4953 = vpop.f32.mrb[0].mxu0
      %4954 = vmatprep.mubr.bf16.mxu0 0
      %4955 = vmatmul.mubr.bf16.gmra.mrb[0].mxu0 %v4884
      %v4956 = vpop.f32.mrb[0].mxu0
      %v4957 = vadd.f32 %v4860, %v4956
      %v4958 = vpop.f32.mrb[0].mxu0
      %v4959 = vpop.f32.mrb[0].mxu0
      %v4960 = vadd.f32 %v4860, %v4959
      %v4961 = vpop.f32.mrb[0].mxu0
      %4962 = vmatprep.mubr.bf16.mxu0 0
      %4963 = vmatmul.mubr.bf16.gmra.mrb[0].mxu0 %v4887
      %v4964 = vpop.f32.mrb[0].mxu0
      %v4965 = vadd.f32 %v4860, %v4964
      %v4966 = vpop.f32.mrb[0].mxu0
      %v4967 = vpop.f32.mrb[0].mxu0
      %v4968 = vadd.f32 %v4860, %v4967
      %v4969 = vpop.f32.mrb[0].mxu0
      %4970 = vmatprep.mubr.bf16.mxu0 0
      %4971 = vmatmul.mubr.bf16.gmra.mrb[0].mxu0 %v4890
      %v4972 = vpop.f32.mrb[0].mxu0
      %v4973 = vadd.f32 %v4860, %v4972
      %v4974 = vpop.f32.mrb[0].mxu0
      %v4975 = vpop.f32.mrb[0].mxu0
      %v4976 = vadd.f32 %v4860, %v4975
      %v4977 = vpop.f32.mrb[0].mxu0
      %4978 = vmatprep.mubr.bf16.mxu0 0
      %4979 = vmatmul.mubr.bf16.gmra.mrb[0].mxu0 %v4893
      %v4980 = vpop.f32.mrb[0].mxu0
      %v4981 = vadd.f32 %v4860, %v4980
      %v4982 = vpop.f32.mrb[0].mxu0
      %v4983 = vpop.f32.mrb[0].mxu0
      %v4984 = vadd.f32 %v4860, %v4983
      %v4985 = vpop.f32.mrb[0].mxu0
      %4986 = vmatprep.mubr.bf16.mxu0 0
      %4987 = vmatmul.mubr.bf16.gmra.mrb[0].mxu0 %v4896
      %v4988 = vpop.f32.mrb[0].mxu0
      %v4989 = vadd.f32 %v4860, %v4988
      %v4990 = vpop.f32.mrb[0].mxu0
      %v4991 = vpop.f32.mrb[0].mxu0
      %v4992 = vadd.f32 %v4860, %v4991
      %v4993 = vpop.f32.mrb[0].mxu0
      %4994 = vdwg.mxu0
      %v4995 = vmax.f32 %v4933, 0.0
      %v4996 = vmax.f32 %v4936, 0.0
      %v4997 = vmax.f32 %v4941, 0.0
      %v4998 = vmax.f32 %v4944, 0.0
      %v4999 = vmax.f32 %v4949, 0.0
      %v5000 = vmax.f32 %v4952, 0.0
      %v5001 = vmax.f32 %v4957, 0.0
      %v5002 = vmax.f32 %v4960, 0.0
      %v5003 = vmax.f32 %v4965, 0.0
      %v5004 = vmax.f32 %v4968, 0.0
      %v5005 = vmax.f32 %v4973, 0.0
      %v5006 = vmax.f32 %v4976, 0.0
      %v5007 = vmax.f32 %v4981, 0.0
      %v5008 = vmax.f32 %v4984, 0.0
      %v5009 = vmax.f32 %v4989, 0.0
      %v5010 = vmax.f32 %v4992, 0.0
      %s5011 = sadd.s32 %s4841, 1
      %s5012 = sld [smem:[#allocation3 + %s5011]]
      %p5013 = scmp.gt.s32.totalorder %s5012, 0
      %s5014 = scalar_select %p5013, %s5012, 0
      %p5015 = scmp.lt.s32.totalorder %s5014, 3
      %s5016 = scalar_select %p5015, %s5014, 3
      %s5017 = smul.u32 %s5016, 4
      %s5018 = smul.addr %s5017, 4
      %s5019 = scalar_lea.vmem %s4, %s5018
      %v5020 = vld [vmem:[%s5019] sm:$0xf]
      %v5021 = vld [vmem:[%s5019 + $0x4] sm:$0xf]
      %v5022 = vld [vmem:[%s5019 + $0x8] sm:$0xf]
      %v5023 = vld [vmem:[%s5019 + $0xc] sm:$0xf]
      %s5024 = scalar_lea.vmem %s5, %s5016
      %v5025 = vld [vmem:[%s5024] sm:$0x1]
      %v5027 = vlaneseq
      %v5028 = vshrl.u32 %v5027, 7
      %v5029 = vsub.s32 0, %v5028
      %v5030 = vrot.slane %v5025, %v5029
      %v5036 = vunpack.c.l.b16 %v5020
      %v5037 = vunpack.c.l.b16 %v5021
      %v5038 = vunpack.c.l.b16 %v5022
      %v5039 = vunpack.c.l.b16 %v5023
      %v5040 = vpack.c.b16 %v5037, %v5036
      %v5041 = vpack.c.b16 %v5039, %v5038
      %5044 = vmatprep.subr.bf16.mxu0 0
      %5045 = vmatpush1.bf16.msra.mxu0 %v5040
      %5046 = vmatprep.subr.bf16.mxu0 0
      %5047 = vmatpush1.bf16.msra.mxu0 %v5041
      %5048 = vmatprep.subr.bf16.mxu0 0
      %5049 = vmatpush1.bf16.msra.mxu0 0
      %5050 = vmatprep.subr.bf16.mxu0 0
      %5051 = vmatpush1.bf16.msra.mxu0 0
      %5052 = vmatprep.subr.bf16.mxu0 0
      %5053 = vmatpush1.bf16.msra.mxu0 0
      %5054 = vmatprep.subr.bf16.mxu0 0
      %5055 = vmatpush1.bf16.msra.mxu0 0
      %5056 = vmatprep.subr.bf16.mxu0 0
      %5057 = vmatpush1.bf16.msra.mxu0 0
      %5058 = vmatprep.subr.bf16.mxu0 0
      %5059 = vmatpush1.bf16.msra.mxu0 0
      %5060 = vmatprep.subr.bf16.mxu0 0
      %5061 = vmatpush1.bf16.msra.mxu0 0
      %5062 = vmatprep.subr.bf16.mxu0 0
      %5063 = vmatpush1.bf16.msra.mxu0 0
      %5064 = vmatprep.subr.bf16.mxu0 0
      %5065 = vmatpush1.bf16.msra.mxu0 0
      %5066 = vmatprep.subr.bf16.mxu0 0
      %5067 = vmatpush1.bf16.msra.mxu0 0
      %5068 = vmatprep.subr.bf16.mxu0 0
      %5069 = vmatpush1.bf16.msra.mxu0 0
      %5070 = vmatprep.subr.bf16.mxu0 0
      %5071 = vmatpush1.bf16.msra.mxu0 0
      %5072 = vmatprep.subr.bf16.mxu0 0
      %5073 = vmatpush1.bf16.msra.mxu0 0
      %5074 = vmatprep.subr.bf16.mxu0 0
      %5075 = vmatpush1.bf16.msra.mxu0 0
      %5076 = vmatprep.mubr.bf16.mxu0 0
      %5077 = vmatmul.mubr.bf16.gmra.mrb[0].mxu0 %v4875
      %v5078 = vpop.f32.mrb[0].mxu0
      %v5079 = vadd.f32 %v5030, %v5078
      %v5080 = vpop.f32.mrb[0].mxu0
      %v5081 = vpop.f32.mrb[0].mxu0
      %v5082 = vadd.f32 %v5030, %v5081
      %v5083 = vpop.f32.mrb[0].mxu0
      %5084 = vmatprep.mubr.bf16.mxu0 0
      %5085 = vmatmul.mubr.bf16.gmra.mrb[0].mxu0 %v4878
      %v5086 = vpop.f32.mrb[0].mxu0
      %v5087 = vadd.f32 %v5030, %v5086
      %v5088 = vpop.f32.mrb[0].mxu0
      %v5089 = vpop.f32.mrb[0].mxu0
      %v5090 = vadd.f32 %v5030, %v5089
      %v5091 = vpop.f32.mrb[0].mxu0
      %5092 = vmatprep.mubr.bf16.mxu0 0
      %5093 = vmatmul.mubr.bf16.gmra.mrb[0].mxu0 %v4881
      %v5094 = vpop.f32.mrb[0].mxu0
      %v5095 = vadd.f32 %v5030, %v5094
      %v5096 = vpop.f32.mrb[0].mxu0
      %v5097 = vpop.f32.mrb[0].mxu0
      %v5098 = vadd.f32 %v5030, %v5097
      %v5099 = vpop.f32.mrb[0].mxu0
      %5100 = vmatprep.mubr.bf16.mxu0 0
      %5101 = vmatmul.mubr.bf16.gmra.mrb[0].mxu0 %v4884
      %v5102 = vpop.f32.mrb[0].mxu0
      %v5103 = vadd.f32 %v5030, %v5102
      %v5104 = vpop.f32.mrb[0].mxu0
      %v5105 = vpop.f32.mrb[0].mxu0
      %v5106 = vadd.f32 %v5030, %v5105
      %v5107 = vpop.f32.mrb[0].mxu0
      %5108 = vmatprep.mubr.bf16.mxu0 0
      %5109 = vmatmul.mubr.bf16.gmra.mrb[0].mxu0 %v4887
      %v5110 = vpop.f32.mrb[0].mxu0
      %v5111 = vadd.f32 %v5030, %v5110
      %v5112 = vpop.f32.mrb[0].mxu0
      %v5113 = vpop.f32.mrb[0].mxu0
      %v5114 = vadd.f32 %v5030, %v5113
      %v5115 = vpop.f32.mrb[0].mxu0
      %5116 = vmatprep.mubr.bf16.mxu0 0
      %5117 = vmatmul.mubr.bf16.gmra.mrb[0].mxu0 %v4890
      %v5118 = vpop.f32.mrb[0].mxu0
      %v5119 = vadd.f32 %v5030, %v5118
      %v5120 = vpop.f32.mrb[0].mxu0
      %v5121 = vpop.f32.mrb[0].mxu0
      %v5122 = vadd.f32 %v5030, %v5121
      %v5123 = vpop.f32.mrb[0].mxu0
      %5124 = vmatprep.mubr.bf16.mxu0 0
      %5125 = vmatmul.mubr.bf16.gmra.mrb[0].mxu0 %v4893
      %v5126 = vpop.f32.mrb[0].mxu0
      %v5127 = vadd.f32 %v5030, %v5126
      %v5128 = vpop.f32.mrb[0].mxu0
      %v5129 = vpop.f32.mrb[0].mxu0
      %v5130 = vadd.f32 %v5030, %v5129
      %v5131 = vpop.f32.mrb[0].mxu0
      %5132 = vmatprep.mubr.bf16.mxu0 0
      %5133 = vmatmul.mubr.bf16.gmra.mrb[0].mxu0 %v4896
      %v5134 = vpop.f32.mrb[0].mxu0
      %v5135 = vadd.f32 %v5030, %v5134
      %v5136 = vpop.f32.mrb[0].mxu0
      %v5137 = vpop.f32.mrb[0].mxu0
      %v5138 = vadd.f32 %v5030, %v5137
      %v5139 = vpop.f32.mrb[0].mxu0
      %5140 = vdwg.mxu0
      %v5141 = vmax.f32 %v5079, 0.0
      %v5142 = vmax.f32 %v5082, 0.0
      %v5143 = vmax.f32 %v5087, 0.0
      %v5144 = vmax.f32 %v5090, 0.0
      %v5145 = vmax.f32 %v5095, 0.0
      %v5146 = vmax.f32 %v5098, 0.0
      %v5147 = vmax.f32 %v5103, 0.0
      %v5148 = vmax.f32 %v5106, 0.0
      %v5149 = vmax.f32 %v5111, 0.0
      %v5150 = vmax.f32 %v5114, 0.0
      %v5151 = vmax.f32 %v5119, 0.0
      %v5152 = vmax.f32 %v5122, 0.0
      %v5153 = vmax.f32 %v5127, 0.0
      %v5154 = vmax.f32 %v5130, 0.0
      %v5155 = vmax.f32 %v5135, 0.0
      %v5156 = vmax.f32 %v5138, 0.0
      %v5157 = vadd.f32 %v4995, %v5141
      %v5158 = vadd.f32 %v4996, %v5142
      %v5159 = vadd.f32 %v4997, %v5143
      %v5160 = vadd.f32 %v4998, %v5144
      %v5161 = vadd.f32 %v4999, %v5145
      %v5162 = vadd.f32 %v5000, %v5146
      %v5163 = vadd.f32 %v5001, %v5147
      %v5164 = vadd.f32 %v5002, %v5148
      %v5165 = vadd.f32 %v5003, %v5149
      %v5166 = vadd.f32 %v5004, %v5150
      %v5167 = vadd.f32 %v5005, %v5151
      %v5168 = vadd.f32 %v5006, %v5152
      %v5169 = vadd.f32 %v5007, %v5153
      %v5170 = vadd.f32 %v5008, %v5154
      %v5171 = vadd.f32 %v5009, %v5155
      %v5172 = vadd.f32 %v5010, %v5156
      %v5173 = vpack.c.bf16 %v5158, %v5157
      %v5174 = vpack.c.bf16 %v5160, %v5159
      %v5175 = vpack.c.bf16 %v5162, %v5161
      %v5176 = vpack.c.bf16 %v5164, %v5163
      %v5177 = vpack.c.bf16 %v5166, %v5165
      %v5178 = vpack.c.bf16 %v5168, %v5167
      %v5179 = vpack.c.bf16 %v5170, %v5169
      %v5180 = vpack.c.bf16 %v5172, %v5171
      %s5181 = sadd.s32 %s4839, 2
      %s5182 = smul.u32 %s5181, 2
      %s5183 = sld [smem:[#allocation3 + %s5182]]
      %p5184 = scmp.gt.s32.totalorder %s5183, 0
      %s5185 = scalar_select %p5184, %s5183, 0
      %p5186 = scmp.lt.s32.totalorder %s5185, 3
      %s5187 = scalar_select %p5186, %s5185, 3
      %s5188 = smul.u32 %s5187, 4
      %s5189 = smul.addr %s5188, 4
      %s5190 = scalar_lea.vmem %s6, %s5189
      %v5191 = vld [vmem:[%s5190] sm:$0xf]
      %v5192 = vld [vmem:[%s5190 + $0x4] sm:$0xf]
      %v5193 = vld [vmem:[%s5190 + $0x8] sm:$0xf]
      %v5194 = vld [vmem:[%s5190 + $0xc] sm:$0xf]
      %s5195 = scalar_lea.vmem %s7, %s5187
      %v5196 = vld [vmem:[%s5195] sm:$0x1]
      %v5198 = vlaneseq
      %v5199 = vshrl.u32 %v5198, 7
      %v5200 = vsub.s32 0, %v5199
      %v5201 = vrot.slane %v5196, %v5200
      %v5207 = vunpack.c.l.b16 %v5191
      %v5208 = vunpack.c.l.b16 %v5192
      %v5209 = vunpack.c.l.b16 %v5193
      %v5210 = vunpack.c.l.b16 %v5194
      %v5211 = vpack.c.b16 %v5208, %v5207
      %v5212 = vpack.c.b16 %v5210, %v5209
      %v5216 = vsel %vm2383, %v5173, 0
      %v5219 = vsel %vm2383, %v5174, 0
      %v5222 = vsel %vm2383, %v5175, 0
      %v5225 = vsel %vm2383, %v5176, 0
      %v5228 = vsel %vm2383, %v5177, 0
      %v5231 = vsel %vm2383, %v5178, 0
      %v5234 = vsel %vm2383, %v5179, 0
      %v5237 = vsel %vm2383, %v5180, 0
      %5239 = vmatprep.subr.bf16.mxu0 0
      %5240 = vmatpush1.bf16.msra.mxu0 %v5211
      %5241 = vmatprep.subr.bf16.mxu0 0
      %5242 = vmatpush1.bf16.msra.mxu0 %v5212
      %5243 = vmatprep.subr.bf16.mxu0 0
      %5244 = vmatpush1.bf16.msra.mxu0 0
      %5245 = vmatprep.subr.bf16.mxu0 0
      %5246 = vmatpush1.bf16.msra.mxu0 0
      %5247 = vmatprep.subr.bf16.mxu0 0
      %5248 = vmatpush1.bf16.msra.mxu0 0
      %5249 = vmatprep.subr.bf16.mxu0 0
      %5250 = vmatpush1.bf16.msra.mxu0 0
      %5251 = vmatprep.subr.bf16.mxu0 0
      %5252 = vmatpush1.bf16.msra.mxu0 0
      %5253 = vmatprep.subr.bf16.mxu0 0
      %5254 = vmatpush1.bf16.msra.mxu0 0
      %5255 = vmatprep.subr.bf16.mxu0 0
      %5256 = vmatpush1.bf16.msra.mxu0 0
      %5257 = vmatprep.subr.bf16.mxu0 0
      %5258 = vmatpush1.bf16.msra.mxu0 0
      %5259 = vmatprep.subr.bf16.mxu0 0
      %5260 = vmatpush1.bf16.msra.mxu0 0
      %5261 = vmatprep.subr.bf16.mxu0 0
      %5262 = vmatpush1.bf16.msra.mxu0 0
      %5263 = vmatprep.subr.bf16.mxu0 0
      %5264 = vmatpush1.bf16.msra.mxu0 0
      %5265 = vmatprep.subr.bf16.mxu0 0
      %5266 = vmatpush1.bf16.msra.mxu0 0
      %5267 = vmatprep.subr.bf16.mxu0 0
      %5268 = vmatpush1.bf16.msra.mxu0 0
      %5269 = vmatprep.subr.bf16.mxu0 0
      %5270 = vmatpush1.bf16.msra.mxu0 0
      %5271 = vmatprep.mubr.bf16.mxu0 0
      %5272 = vmatmul.mubr.bf16.gmra.mrb[0].mxu0 %v5216
      %v5273 = vpop.f32.mrb[0].mxu0
      %v5274 = vadd.f32 %v5201, %v5273
      %v5275 = vpop.f32.mrb[0].mxu0
      %v5276 = vpop.f32.mrb[0].mxu0
      %v5277 = vadd.f32 %v5201, %v5276
      %v5278 = vpop.f32.mrb[0].mxu0
      %5279 = vmatprep.mubr.bf16.mxu0 0
      %5280 = vmatmul.mubr.bf16.gmra.mrb[0].mxu0 %v5219
      %v5281 = vpop.f32.mrb[0].mxu0
      %v5282 = vadd.f32 %v5201, %v5281
      %v5283 = vpop.f32.mrb[0].mxu0
      %v5284 = vpop.f32.mrb[0].mxu0
      %v5285 = vadd.f32 %v5201, %v5284
      %v5286 = vpop.f32.mrb[0].mxu0
      %5287 = vmatprep.mubr.bf16.mxu0 0
      %5288 = vmatmul.mubr.bf16.gmra.mrb[0].mxu0 %v5222
      %v5289 = vpop.f32.mrb[0].mxu0
      %v5290 = vadd.f32 %v5201, %v5289
      %v5291 = vpop.f32.mrb[0].mxu0
      %v5292 = vpop.f32.mrb[0].mxu0
      %v5293 = vadd.f32 %v5201, %v5292
      %v5294 = vpop.f32.mrb[0].mxu0
      %5295 = vmatprep.mubr.bf16.mxu0 0
      %5296 = vmatmul.mubr.bf16.gmra.mrb[0].mxu0 %v5225
      %v5297 = vpop.f32.mrb[0].mxu0
      %v5298 = vadd.f32 %v5201, %v5297
      %v5299 = vpop.f32.mrb[0].mxu0
      %v5300 = vpop.f32.mrb[0].mxu0
      %v5301 = vadd.f32 %v5201, %v5300
      %v5302 = vpop.f32.mrb[0].mxu0
      %5303 = vmatprep.mubr.bf16.mxu0 0
      %5304 = vmatmul.mubr.bf16.gmra.mrb[0].mxu0 %v5228
      %v5305 = vpop.f32.mrb[0].mxu0
      %v5306 = vadd.f32 %v5201, %v5305
      %v5307 = vpop.f32.mrb[0].mxu0
      %v5308 = vpop.f32.mrb[0].mxu0
      %v5309 = vadd.f32 %v5201, %v5308
      %v5310 = vpop.f32.mrb[0].mxu0
      %5311 = vmatprep.mubr.bf16.mxu0 0
      %5312 = vmatmul.mubr.bf16.gmra.mrb[0].mxu0 %v5231
      %v5313 = vpop.f32.mrb[0].mxu0
      %v5314 = vadd.f32 %v5201, %v5313
      %v5315 = vpop.f32.mrb[0].mxu0
      %v5316 = vpop.f32.mrb[0].mxu0
      %v5317 = vadd.f32 %v5201, %v5316
      %v5318 = vpop.f32.mrb[0].mxu0
      %5319 = vmatprep.mubr.bf16.mxu0 0
      %5320 = vmatmul.mubr.bf16.gmra.mrb[0].mxu0 %v5234
      %v5321 = vpop.f32.mrb[0].mxu0
      %v5322 = vadd.f32 %v5201, %v5321
      %v5323 = vpop.f32.mrb[0].mxu0
      %v5324 = vpop.f32.mrb[0].mxu0
      %v5325 = vadd.f32 %v5201, %v5324
      %v5326 = vpop.f32.mrb[0].mxu0
      %5327 = vmatprep.mubr.bf16.mxu0 0
      %5328 = vmatmul.mubr.bf16.gmra.mrb[0].mxu0 %v5237
      %v5329 = vpop.f32.mrb[0].mxu0
      %v5330 = vadd.f32 %v5201, %v5329
      %v5331 = vpop.f32.mrb[0].mxu0
      %v5332 = vpop.f32.mrb[0].mxu0
      %v5333 = vadd.f32 %v5201, %v5332
      %v5334 = vpop.f32.mrb[0].mxu0
      %5335 = vdwg.mxu0
      %v5336 = vmax.f32 %v5274, 0.0
      %v5337 = vmax.f32 %v5277, 0.0
      %v5338 = vmax.f32 %v5282, 0.0
      %v5339 = vmax.f32 %v5285, 0.0
      %v5340 = vmax.f32 %v5290, 0.0
      %v5341 = vmax.f32 %v5293, 0.0
      %v5342 = vmax.f32 %v5298, 0.0
      %v5343 = vmax.f32 %v5301, 0.0
      %v5344 = vmax.f32 %v5306, 0.0
      %v5345 = vmax.f32 %v5309, 0.0
      %v5346 = vmax.f32 %v5314, 0.0
      %v5347 = vmax.f32 %v5317, 0.0
      %v5348 = vmax.f32 %v5322, 0.0
      %v5349 = vmax.f32 %v5325, 0.0
      %v5350 = vmax.f32 %v5330, 0.0
      %v5351 = vmax.f32 %v5333, 0.0
      %s5352 = sadd.s32 %s5182, 1
      %s5353 = sld [smem:[#allocation3 + %s5352]]
      %p5354 = scmp.gt.s32.totalorder %s5353, 0
      %s5355 = scalar_select %p5354, %s5353, 0
      %p5356 = scmp.lt.s32.totalorder %s5355, 3
      %s5357 = scalar_select %p5356, %s5355, 3
      %s5358 = smul.u32 %s5357, 4
      %s5359 = smul.addr %s5358, 4
      %s5360 = scalar_lea.vmem %s6, %s5359
      %v5361 = vld [vmem:[%s5360] sm:$0xf]
      %v5362 = vld [vmem:[%s5360 + $0x4] sm:$0xf]
      %v5363 = vld [vmem:[%s5360 + $0x8] sm:$0xf]
      %v5364 = vld [vmem:[%s5360 + $0xc] sm:$0xf]
      %s5365 = scalar_lea.vmem %s7, %s5357
      %v5366 = vld [vmem:[%s5365] sm:$0x1]
      %v5368 = vlaneseq
      %v5369 = vshrl.u32 %v5368, 7
      %v5370 = vsub.s32 0, %v5369
      %v5371 = vrot.slane %v5366, %v5370
      %v5377 = vunpack.c.l.b16 %v5361
      %v5378 = vunpack.c.l.b16 %v5362
      %v5379 = vunpack.c.l.b16 %v5363
      %v5380 = vunpack.c.l.b16 %v5364
      %v5381 = vpack.c.b16 %v5378, %v5377
      %v5382 = vpack.c.b16 %v5380, %v5379
      %5385 = vmatprep.subr.bf16.mxu0 0
      %5386 = vmatpush1.bf16.msra.mxu0 %v5381
      %5387 = vmatprep.subr.bf16.mxu0 0
      %5388 = vmatpush1.bf16.msra.mxu0 %v5382
      %5389 = vmatprep.subr.bf16.mxu0 0
      %5390 = vmatpush1.bf16.msra.mxu0 0
      %5391 = vmatprep.subr.bf16.mxu0 0
      %5392 = vmatpush1.bf16.msra.mxu0 0
      %5393 = vmatprep.subr.bf16.mxu0 0
      %5394 = vmatpush1.bf16.msra.mxu0 0
      %5395 = vmatprep.subr.bf16.mxu0 0
      %5396 = vmatpush1.bf16.msra.mxu0 0
      %5397 = vmatprep.subr.bf16.mxu0 0
      %5398 = vmatpush1.bf16.msra.mxu0 0
      %5399 = vmatprep.subr.bf16.mxu0 0
      %5400 = vmatpush1.bf16.msra.mxu0 0
      %5401 = vmatprep.subr.bf16.mxu0 0
      %5402 = vmatpush1.bf16.msra.mxu0 0
      %5403 = vmatprep.subr.bf16.mxu0 0
      %5404 = vmatpush1.bf16.msra.mxu0 0
      %5405 = vmatprep.subr.bf16.mxu0 0
      %5406 = vmatpush1.bf16.msra.mxu0 0
      %5407 = vmatprep.subr.bf16.mxu0 0
      %5408 = vmatpush1.bf16.msra.mxu0 0
      %5409 = vmatprep.subr.bf16.mxu0 0
      %5410 = vmatpush1.bf16.msra.mxu0 0
      %5411 = vmatprep.subr.bf16.mxu0 0
      %5412 = vmatpush1.bf16.msra.mxu0 0
      %5413 = vmatprep.subr.bf16.mxu0 0
      %5414 = vmatpush1.bf16.msra.mxu0 0
      %5415 = vmatprep.subr.bf16.mxu0 0
      %5416 = vmatpush1.bf16.msra.mxu0 0
      %5417 = vmatprep.mubr.bf16.mxu0 0
      %5418 = vmatmul.mubr.bf16.gmra.mrb[0].mxu0 %v5216
      %v5419 = vpop.f32.mrb[0].mxu0
      %v5420 = vadd.f32 %v5371, %v5419
      %v5421 = vpop.f32.mrb[0].mxu0
      %v5422 = vpop.f32.mrb[0].mxu0
      %v5423 = vadd.f32 %v5371, %v5422
      %v5424 = vpop.f32.mrb[0].mxu0
      %5425 = vmatprep.mubr.bf16.mxu0 0
      %5426 = vmatmul.mubr.bf16.gmra.mrb[0].mxu0 %v5219
      %v5427 = vpop.f32.mrb[0].mxu0
      %v5428 = vadd.f32 %v5371, %v5427
      %v5429 = vpop.f32.mrb[0].mxu0
      %v5430 = vpop.f32.mrb[0].mxu0
      %v5431 = vadd.f32 %v5371, %v5430
      %v5432 = vpop.f32.mrb[0].mxu0
      %5433 = vmatprep.mubr.bf16.mxu0 0
      %5434 = vmatmul.mubr.bf16.gmra.mrb[0].mxu0 %v5222
      %v5435 = vpop.f32.mrb[0].mxu0
      %v5436 = vadd.f32 %v5371, %v5435
      %v5437 = vpop.f32.mrb[0].mxu0
      %v5438 = vpop.f32.mrb[0].mxu0
      %v5439 = vadd.f32 %v5371, %v5438
      %v5440 = vpop.f32.mrb[0].mxu0
      %5441 = vmatprep.mubr.bf16.mxu0 0
      %5442 = vmatmul.mubr.bf16.gmra.mrb[0].mxu0 %v5225
      %v5443 = vpop.f32.mrb[0].mxu0
      %v5444 = vadd.f32 %v5371, %v5443
      %v5445 = vpop.f32.mrb[0].mxu0
      %v5446 = vpop.f32.mrb[0].mxu0
      %v5447 = vadd.f32 %v5371, %v5446
      %v5448 = vpop.f32.mrb[0].mxu0
      %5449 = vmatprep.mubr.bf16.mxu0 0
      %5450 = vmatmul.mubr.bf16.gmra.mrb[0].mxu0 %v5228
      %v5451 = vpop.f32.mrb[0].mxu0
      %v5452 = vadd.f32 %v5371, %v5451
      %v5453 = vpop.f32.mrb[0].mxu0
      %v5454 = vpop.f32.mrb[0].mxu0
      %v5455 = vadd.f32 %v5371, %v5454
      %v5456 = vpop.f32.mrb[0].mxu0
      %5457 = vmatprep.mubr.bf16.mxu0 0
      %5458 = vmatmul.mubr.bf16.gmra.mrb[0].mxu0 %v5231
      %v5459 = vpop.f32.mrb[0].mxu0
      %v5460 = vadd.f32 %v5371, %v5459
      %v5461 = vpop.f32.mrb[0].mxu0
      %v5462 = vpop.f32.mrb[0].mxu0
      %v5463 = vadd.f32 %v5371, %v5462
      %v5464 = vpop.f32.mrb[0].mxu0
      %5465 = vmatprep.mubr.bf16.mxu0 0
      %5466 = vmatmul.mubr.bf16.gmra.mrb[0].mxu0 %v5234
      %v5467 = vpop.f32.mrb[0].mxu0
      %v5468 = vadd.f32 %v5371, %v5467
      %v5469 = vpop.f32.mrb[0].mxu0
      %v5470 = vpop.f32.mrb[0].mxu0
      %v5471 = vadd.f32 %v5371, %v5470
      %v5472 = vpop.f32.mrb[0].mxu0
      %5473 = vmatprep.mubr.bf16.mxu0 0
      %5474 = vmatmul.mubr.bf16.gmra.mrb[0].mxu0 %v5237
      %v5475 = vpop.f32.mrb[0].mxu0
      %v5476 = vadd.f32 %v5371, %v5475
      %v5477 = vpop.f32.mrb[0].mxu0
      %v5478 = vpop.f32.mrb[0].mxu0
      %v5479 = vadd.f32 %v5371, %v5478
      %v5480 = vpop.f32.mrb[0].mxu0
      %5481 = vdwg.mxu0
      %v5482 = vmax.f32 %v5420, 0.0
      %v5483 = vmax.f32 %v5423, 0.0
      %v5484 = vmax.f32 %v5428, 0.0
      %v5485 = vmax.f32 %v5431, 0.0
      %v5486 = vmax.f32 %v5436, 0.0
      %v5487 = vmax.f32 %v5439, 0.0
      %v5488 = vmax.f32 %v5444, 0.0
      %v5489 = vmax.f32 %v5447, 0.0
      %v5490 = vmax.f32 %v5452, 0.0
      %v5491 = vmax.f32 %v5455, 0.0
      %v5492 = vmax.f32 %v5460, 0.0
      %v5493 = vmax.f32 %v5463, 0.0
      %v5494 = vmax.f32 %v5468, 0.0
      %v5495 = vmax.f32 %v5471, 0.0
      %v5496 = vmax.f32 %v5476, 0.0
      %v5497 = vmax.f32 %v5479, 0.0
      %v5498 = vadd.f32 %v5336, %v5482
      %v5499 = vadd.f32 %v5337, %v5483
      %v5500 = vadd.f32 %v5338, %v5484
      %v5501 = vadd.f32 %v5339, %v5485
      %v5502 = vadd.f32 %v5340, %v5486
      %v5503 = vadd.f32 %v5341, %v5487
      %v5504 = vadd.f32 %v5342, %v5488
      %v5505 = vadd.f32 %v5343, %v5489
      %v5506 = vadd.f32 %v5344, %v5490
      %v5507 = vadd.f32 %v5345, %v5491
      %v5508 = vadd.f32 %v5346, %v5492
      %v5509 = vadd.f32 %v5347, %v5493
      %v5510 = vadd.f32 %v5348, %v5494
      %v5511 = vadd.f32 %v5349, %v5495
      %v5512 = vadd.f32 %v5350, %v5496
      %v5513 = vadd.f32 %v5351, %v5497
      %v5514 = vpack.c.bf16 %v5499, %v5498
      %v5515 = vpack.c.bf16 %v5501, %v5500
      %v5516 = vpack.c.bf16 %v5503, %v5502
      %v5517 = vpack.c.bf16 %v5505, %v5504
      %v5518 = vpack.c.bf16 %v5507, %v5506
      %v5519 = vpack.c.bf16 %v5509, %v5508
      %v5520 = vpack.c.bf16 %v5511, %v5510
      %v5521 = vpack.c.bf16 %v5513, %v5512
      %v5523 = vsel %vm2383, %v5514, 0
      %v5526 = vsel %vm2383, %v5515, 0
      %v5529 = vsel %vm2383, %v5516, 0
      %v5532 = vsel %vm2383, %v5517, 0
      %v5535 = vsel %vm2383, %v5518, 0
      %v5538 = vsel %vm2383, %v5519, 0
      %v5541 = vsel %vm2383, %v5520, 0
      %v5544 = vsel %vm2383, %v5521, 0
      %5546 = vmatprep.subr.bf16.mxu0 0
      %5547 = vmatpush1.bf16.msra.mxu0 %v3046
      %5548 = vmatprep.subr.bf16.mxu0 0
      %5549 = vmatpush1.bf16.msra.mxu0 %v3047
      %5550 = vmatprep.subr.bf16.mxu0 0
      %5551 = vmatpush1.bf16.msra.mxu0 0
      %5552 = vmatprep.subr.bf16.mxu0 0
      %5553 = vmatpush1.bf16.msra.mxu0 0
      %5554 = vmatprep.subr.bf16.mxu0 0
      %5555 = vmatpush1.bf16.msra.mxu0 0
      %5556 = vmatprep.subr.bf16.mxu0 0
      %5557 = vmatpush1.bf16.msra.mxu0 0
      %5558 = vmatprep.subr.bf16.mxu0 0
      %5559 = vmatpush1.bf16.msra.mxu0 0
      %5560 = vmatprep.subr.bf16.mxu0 0
      %5561 = vmatpush1.bf16.msra.mxu0 0
      %5562 = vmatprep.subr.bf16.mxu0 0
      %5563 = vmatpush1.bf16.msra.mxu0 0
      %5564 = vmatprep.subr.bf16.mxu0 0
      %5565 = vmatpush1.bf16.msra.mxu0 0
      %5566 = vmatprep.subr.bf16.mxu0 0
      %5567 = vmatpush1.bf16.msra.mxu0 0
      %5568 = vmatprep.subr.bf16.mxu0 0
      %5569 = vmatpush1.bf16.msra.mxu0 0
      %5570 = vmatprep.subr.bf16.mxu0 0
      %5571 = vmatpush1.bf16.msra.mxu0 0
      %5572 = vmatprep.subr.bf16.mxu0 0
      %5573 = vmatpush1.bf16.msra.mxu0 0
      %5574 = vmatprep.subr.bf16.mxu0 0
      %5575 = vmatpush1.bf16.msra.mxu0 0
      %5576 = vmatprep.subr.bf16.mxu0 0
      %5577 = vmatpush1.bf16.msra.mxu0 0
      %5578 = vmatprep.mubr.bf16.mxu0 0
      %5579 = vmatmul.mubr.bf16.gmra.mrb[0].mxu0 %v5523
      %v5580 = vpop.f32.mrb[0].mxu0
      %v5581 = vadd.f32 %v3036, %v5580
      %v5582 = vpop.f32.mrb[0].mxu0
      %v5583 = vpop.f32.mrb[0].mxu0
      %v5584 = vadd.f32 %v3036, %v5583
      %v5585 = vpop.f32.mrb[0].mxu0
      %5586 = vmatprep.mubr.bf16.mxu0 0
      %5587 = vmatmul.mubr.bf16.gmra.mrb[0].mxu0 %v5526
      %v5588 = vpop.f32.mrb[0].mxu0
      %v5589 = vadd.f32 %v3036, %v5588
      %v5590 = vpop.f32.mrb[0].mxu0
      %v5591 = vpop.f32.mrb[0].mxu0
      %v5592 = vadd.f32 %v3036, %v5591
      %v5593 = vpop.f32.mrb[0].mxu0
      %5594 = vmatprep.mubr.bf16.mxu0 0
      %5595 = vmatmul.mubr.bf16.gmra.mrb[0].mxu0 %v5529
      %v5596 = vpop.f32.mrb[0].mxu0
      %v5597 = vadd.f32 %v3036, %v5596
      %v5598 = vpop.f32.mrb[0].mxu0
      %v5599 = vpop.f32.mrb[0].mxu0
      %v5600 = vadd.f32 %v3036, %v5599
      %v5601 = vpop.f32.mrb[0].mxu0
      %5602 = vmatprep.mubr.bf16.mxu0 0
      %5603 = vmatmul.mubr.bf16.gmra.mrb[0].mxu0 %v5532
      %v5604 = vpop.f32.mrb[0].mxu0
      %v5605 = vadd.f32 %v3036, %v5604
      %v5606 = vpop.f32.mrb[0].mxu0
      %v5607 = vpop.f32.mrb[0].mxu0
      %v5608 = vadd.f32 %v3036, %v5607
      %v5609 = vpop.f32.mrb[0].mxu0
      %5610 = vmatprep.mubr.bf16.mxu0 0
      %5611 = vmatmul.mubr.bf16.gmra.mrb[0].mxu0 %v5535
      %v5612 = vpop.f32.mrb[0].mxu0
      %v5613 = vadd.f32 %v3036, %v5612
      %v5614 = vpop.f32.mrb[0].mxu0
      %v5615 = vpop.f32.mrb[0].mxu0
      %v5616 = vadd.f32 %v3036, %v5615
      %v5617 = vpop.f32.mrb[0].mxu0
      %5618 = vmatprep.mubr.bf16.mxu0 0
      %5619 = vmatmul.mubr.bf16.gmra.mrb[0].mxu0 %v5538
      %v5620 = vpop.f32.mrb[0].mxu0
      %v5621 = vadd.f32 %v3036, %v5620
      %v5622 = vpop.f32.mrb[0].mxu0
      %v5623 = vpop.f32.mrb[0].mxu0
      %v5624 = vadd.f32 %v3036, %v5623
      %v5625 = vpop.f32.mrb[0].mxu0
      %5626 = vmatprep.mubr.bf16.mxu0 0
      %5627 = vmatmul.mubr.bf16.gmra.mrb[0].mxu0 %v5541
      %v5628 = vpop.f32.mrb[0].mxu0
      %v5629 = vadd.f32 %v3036, %v5628
      %v5630 = vpop.f32.mrb[0].mxu0
      %v5631 = vpop.f32.mrb[0].mxu0
      %v5632 = vadd.f32 %v3036, %v5631
      %v5633 = vpop.f32.mrb[0].mxu0
      %5634 = vmatprep.mubr.bf16.mxu0 0
      %5635 = vmatmul.mubr.bf16.gmra.mrb[0].mxu0 %v5544
      %v5636 = vpop.f32.mrb[0].mxu0
      %v5637 = vadd.f32 %v3036, %v5636
      %v5638 = vpop.f32.mrb[0].mxu0
      %v5639 = vpop.f32.mrb[0].mxu0
      %v5640 = vadd.f32 %v3036, %v5639
      %v5641 = vpop.f32.mrb[0].mxu0
      %5642 = vdwg.mxu0
      %s5643 = scalar_lea.vmem %s321, 128
      %5644 = vst [vmem:[%s5643] sm:$0xff] %v5581
      %5645 = vst [vmem:[%s5643 + $0x8] sm:$0xff] %v5584
      %5646 = vst [vmem:[%s5643 + $0x10] sm:$0xff] %v5589
      %5647 = vst [vmem:[%s5643 + $0x18] sm:$0xff] %v5592
      %5648 = vst [vmem:[%s5643 + $0x20] sm:$0xff] %v5597
      %5649 = vst [vmem:[%s5643 + $0x28] sm:$0xff] %v5600
      %5650 = vst [vmem:[%s5643 + $0x30] sm:$0xff] %v5605
      %5651 = vst [vmem:[%s5643 + $0x38] sm:$0xff] %v5608
      %5652 = vst [vmem:[%s5643 + $0x40] sm:$0xff] %v5613
      %5653 = vst [vmem:[%s5643 + $0x48] sm:$0xff] %v5616
      %5654 = vst [vmem:[%s5643 + $0x50] sm:$0xff] %v5621
      %5655 = vst [vmem:[%s5643 + $0x58] sm:$0xff] %v5624
      %5656 = vst [vmem:[%s5643 + $0x60] sm:$0xff] %v5629
      %5657 = vst [vmem:[%s5643 + $0x68] sm:$0xff] %v5632
      %5658 = vst [vmem:[%s5643 + $0x70] sm:$0xff] %v5637
      %5659 = vst [vmem:[%s5643 + $0x78] sm:$0xff] %v5640
      %s5660 = smul.u32 2, %s27
      %p5661 = scmp.lt.s32.totalorder %s5660, 3
      %s5662 = scalar_select %p5661, %s5660, 3
      %s5663 = smul.addr %s5662, 16
      %s5664 = smul.addr %s5663, 8
      %s5665 = scalar_lea.vmem %s10, %s5664
      // Predicated region
      $region57: #{pathnet_forward.1} parent=55 // pred_check
        %p5666 = pneg %p234
      $region58: #{pathnet_forward.1} parent=55 // pred_check_branch
        %5668 = sbr.rel (%p5666) target = $region60
      $region59: #{pathnet_forward.1} parent=55 // pred_region
        %s5669 = smul.u32 2, %s27
      $region60: #{pathnet_forward.1} parent=55 // pred_fallthru
        _
    $region56: #{pathnet_forward.1} parent=5 // pred_fallthru
      _
    %p5670 = scmp.le.s32.totalorder 2, %s22
    // Predicated region
    $region61: #{pathnet_forward.1} parent=5 // pred_check
      %p5671 = pneg %p5670
    $region62: #{pathnet_forward.1} parent=5 // pred_check_branch
      %5673 = sbr.rel (%p5671) target = $region64
    $region63: #{pathnet_forward.1} parent=5 // pred_region
      %s5674 = ssub.s32 %s22, 2
      // Predicated region
      $region65: #{pathnet_forward.1} parent=63 // pred_check
        %p5675 = pneg %p240
      $region66: #{pathnet_forward.1} parent=63 // pred_check_branch
        %5677 = sbr.rel (%p5675) target = $region68
      $region67: #{pathnet_forward.1} parent=63 // pred_region
        %s5678 = smul.u32 2, %s28
        %p5679 = scmp.lt.s32.totalorder %s5678, 3
        %s5680 = scalar_select %p5679, %s5678, 3
        %s5681 = smul.addr %s5680, 16
        %s5682 = smul.addr %s5681, 8
        %s5683 = scalar_lea.vmem %s10, %s5682
      $region68: #{pathnet_forward.1} parent=63 // pred_fallthru
        _
    $region64: #{pathnet_forward.1} parent=5 // pred_fallthru
      _
  $region6: #{pathnet_forward.1} parent=0 // loop_footer
    %s26 = sadd.s32 1, %s22
  $region7: #{pathnet_forward.1} parent=0 // loop_footer_branch
    %21 = sbr.rel target = $region3
  $region8: #{pathnet_forward.1} parent=0 // loop_exit
    _

</llo_original>
